<compile_context>
chip_gen: v7x
topology: tpu7x:2x2x1
jax: 0.10.0
libtpu: 0.0.40
codegen_flags: <defaults>
</compile_context>

<pallas_src>
import functools

import jax
import jax.numpy as jnp
from jax.experimental import pallas as pl
from jax.experimental.pallas import tpu as pltpu  # noqa: F401  (kept for easy compiler-param tweaks)

GP = 128      # per-gate lane padding: one full vreg lane width
B_PAD = 8     # batch padded to one full sublane tile


def _gru_gates(gi, gh, bhh_n, h, gp):
    """PyTorch gate order [r | z | n]; each gate occupies its own 128-lane slot.

    gi already contains (b_ih_r + b_hh_r, b_ih_z + b_hh_z, b_ih_n); bhh_n is the
    n-gate hidden bias which must stay inside r * (gh_n + b_hh_n).
    Padding lanes stay exactly zero: gi/gh/bhh_n pad = 0 -> r=z=0.5, n=0, and
    h_pad' = 0.5 * h_pad = 0 since h_pad starts at 0.
    """
    r = jax.nn.sigmoid(gi[:, 0 * gp:1 * gp] + gh[:, 0 * gp:1 * gp])
    z = jax.nn.sigmoid(gi[:, 1 * gp:2 * gp] + gh[:, 1 * gp:2 * gp])
    n = jnp.tanh(gi[:, 2 * gp:3 * gp] + r * (gh[:, 2 * gp:3 * gp] + bhh_n))
    return (1.0 - z) * n + z * h


def gru_model_kernel(x_ref,
                     wih0_ref, whh_ref, b0f_ref, bhh0n_ref,
                     wih1_ref, b1f_ref, bhh1n_ref,
                     w1_ref, fb1_ref, w2_ref, fb2_ref,
                     out_ref, *, T, bp, gp, fuse_hh):
    # Row-replicated per-step biases: plain (8, N) loads, no in-loop broadcasts.
    bhh0n = bhh0n_ref[...]
    b1f = b1f_ref[...]
    bhh1n = bhh1n_ref[...]

    # Layer-0 input projection hoisted out of the serial chain: one bf16 MXU
    # matmul over the flattened time-major sequence, f32 accumulation, layer-0
    # biases (b_ih + b_hh for r/z, b_ih for n) added once.
    gi0_all = jnp.dot(x_ref[...], wih0_ref[...],
                      preferred_element_type=jnp.float32) + b0f_ref[...]

    h0 = jnp.zeros((bp, gp), jnp.float32)
    h1 = jnp.zeros((bp, gp), jnp.float32)

    # T is static and small -> full unroll; all slices below are static,
    # sublane- (multiples of 8) and lane- (multiples of 128) aligned.
    for t in range(T):
        # Both recurrent projections depend only on the carried state.
        if fuse_hh:
            # v6e/v7x: one (8,256) x (256,768) dot exactly fills the 2x256 MXU
            # (block-diagonal W_hh), one result stream per step.
            h01 = jnp.concatenate([h0, h1], axis=1).astype(jnp.bfloat16)
            gh = jnp.dot(h01, whh_ref[...], preferred_element_type=jnp.float32)
            gh0 = gh[:, :3 * gp]
            gh1 = gh[:, 3 * gp:]
        else:
            # v5e: MXU is 128 deep -> keep two separate 128-deep dots.
            gh0 = jnp.dot(h0.astype(jnp.bfloat16), whh_ref[0],
                          preferred_element_type=jnp.float32)
            gh1 = jnp.dot(h1.astype(jnp.bfloat16), whh_ref[1],
                          preferred_element_type=jnp.float32)

        gi0 = gi0_all[t * bp:(t + 1) * bp, :]      # sublane-aligned (8, 3*GP) slice
        h0 = _gru_gates(gi0, gh0, bhh0n, h0, gp)   # layer-0 cell

        gi1 = jnp.dot(h0.astype(jnp.bfloat16), wih1_ref[...],
                      preferred_element_type=jnp.float32) + b1f
        h1 = _gru_gates(gi1, gh1, bhh1n, h1, gp)   # layer-1 cell (input = layer-0 output)

    # Head: fc1 + ReLU + fc2 (dropout = identity in eval mode).
    hid = jnp.dot(h1.astype(jnp.bfloat16), w1_ref[...],
                  preferred_element_type=jnp.float32) + fb1_ref[...]
    hid = jnp.maximum(hid, 0.0)
    out = jnp.dot(hid.astype(jnp.bfloat16), w2_ref[...],
                  preferred_element_type=jnp.float32) + fb2_ref[...]
    out_ref[...] = out.astype(out_ref.dtype)       # unmasked (8, 128) tile store


# ---------------------------------------------------------------------------
# Host-side weight packing (PyTorch layout -> padded, pre-transposed, bf16)
# ---------------------------------------------------------------------------

def _pack_gate_weight(w_torch, in_pad, H):
    """(3H, in_dim) PyTorch layout -> (in_pad, 3*GP) f32; gate g in cols [g*GP, g*GP+H)."""
    in_dim = w_torch.shape[1]
    wt = jnp.asarray(w_torch, jnp.float32).T                      # (in_dim, 3H)
    out = jnp.zeros((in_pad, 3 * GP), jnp.float32)
    for g in range(3):
        out = out.at[:in_dim, g * GP:g * GP + H].set(wt[:, g * H:(g + 1) * H])
    return out


def _pack_whh(whh0_p, whh1_p, fuse):
    """Either block-diagonal (2*GP, 6*GP) for the fused dot, or stacked (2, GP, 3*GP)."""
    if fuse:
        blk = jnp.zeros((2 * GP, 6 * GP), jnp.float32)
        blk = blk.at[:GP, :3 * GP].set(whh0_p)
        blk = blk.at[GP:, 3 * GP:].set(whh1_p)
        return blk.astype(jnp.bfloat16)
    return jnp.stack([whh0_p, whh1_p], axis=0).astype(jnp.bfloat16)


def _fold_gate_bias(b_ih, b_hh, H, rows):
    """r/z gates get b_ih + b_hh pre-folded; n gate keeps only b_ih here. Row-replicated."""
    out = jnp.zeros((rows, 3 * GP), jnp.float32)
    out = out.at[:, 0 * GP:0 * GP + H].set(b_ih[0 * H:1 * H] + b_hh[0 * H:1 * H])
    out = out.at[:, 1 * GP:1 * GP + H].set(b_ih[1 * H:2 * H] + b_hh[1 * H:2 * H])
    out = out.at[:, 2 * GP:2 * GP + H].set(b_ih[2 * H:3 * H])
    return out


def _n_gate_bias(b_hh, H, rows):
    """The n-gate hidden bias (must be applied inside r * (gh_n + b_hh_n)). Row-replicated."""
    return jnp.zeros((rows, GP), jnp.float32).at[:, :H].set(b_hh[2 * H:3 * H])


def _pack_fc(w_torch, b_torch, in_pad, out_pad, rows):
    """(out, in) PyTorch Linear layout -> pre-transposed bf16 weight + row-replicated f32 bias."""
    o, i = w_torch.shape
    wp = jnp.zeros((in_pad, out_pad), jnp.float32).at[:i, :o].set(
        jnp.asarray(w_torch, jnp.float32).T)
    bp_ = jnp.zeros((rows, out_pad), jnp.float32).at[:, :o].set(b_torch)
    return wp.astype(jnp.bfloat16), bp_


def _use_fused_recurrent_dot():
    """Fuse the two recurrent projections on v6e/v7x (2x256 MXU); keep separate on v5e."""
    try:
        kind = jax.devices()[0].device_kind.lower()
    except Exception:
        return True
    return "v5" not in kind


def gru_model_forward(x, params):
    """x: (B, T, D) batch-first, like the PyTorch module. Returns (B, output_size)."""
    B, T, D = x.shape
    H = params["whh0"].shape[1]
    O = params["w2"].shape[0]
    fuse = _use_fused_recurrent_dot()

    # Time-major, batch padded to 8 sublanes, lanes padded to 128; bf16 MXU operand.
    x_tm = jnp.transpose(x, (1, 0, 2)).astype(jnp.float32)          # (T, B, D)
    x_pad = (jnp.zeros((T, B_PAD, GP), jnp.float32)
             .at[:, :B, :D].set(x_tm)
             .reshape(T * B_PAD, GP)
             .astype(jnp.bfloat16))

    wih0 = _pack_gate_weight(params["wih0"], GP, H).astype(jnp.bfloat16)
    wih1 = _pack_gate_weight(params["wih1"], GP, H).astype(jnp.bfloat16)
    whh = _pack_whh(_pack_gate_weight(params["whh0"], GP, H),
                    _pack_gate_weight(params["whh1"], GP, H), fuse)
    b0f = _fold_gate_bias(params["bih0"], params["bhh0"], H, 1)       # added once, outside the loop
    b1f = _fold_gate_bias(params["bih1"], params["bhh1"], H, B_PAD)   # row-replicated, per-step add
    bhh0n = _n_gate_bias(params["bhh0"], H, B_PAD)
    bhh1n = _n_gate_bias(params["bhh1"], H, B_PAD)
    w1p, fb1 = _pack_fc(params["w1"], params["b1"], GP, GP, B_PAD)
    w2p, fb2 = _pack_fc(params["w2"], params["b2"], GP, GP, B_PAD)

    kernel = functools.partial(gru_model_kernel, T=T, bp=B_PAD, gp=GP, fuse_hh=fuse)

    # ~600 KiB resident VMEM via default full-array BlockSpecs; the serial
    # recurrence runs inside one kernel invocation (no grid).
    # TODO(synk): for larger batches add a leading batch grid axis with
    #   dimension_semantics=("parallel",) (shards across v7x's 2 TensorCores;
    #   keep the per-core working set under its 64 MiB VMEM by computing the
    #   hoisted projection per batch tile), and keep the packed weights resident
    #   across repeated calls instead of re-DMAing them every invocation.
    out_padded = pl.pallas_call(
        kernel,
        out_shape=jax.ShapeDtypeStruct((B_PAD, GP), jnp.float32),
    )(x_pad, wih0, whh, b0f, bhh0n, wih1, b1f, bhh1n, w1p, fb1, w2p, fb2)

    return out_padded[:B, :O]


# ---------------------------------------------------------------------------
# Deterministic init + pure-JAX reference (PyTorch nn.GRU semantics)
# ---------------------------------------------------------------------------

def init_params(key, input_size, hidden_size, output_size):
    """PyTorch-style uniform(-1/sqrt(H), 1/sqrt(H)) init, PyTorch weight layouts."""
    H = hidden_size
    k = 1.0 / jnp.sqrt(jnp.float32(H))
    names_shapes = [
        ("wih0", (3 * H, input_size)), ("whh0", (3 * H, H)),
        ("bih0", (3 * H,)), ("bhh0", (3 * H,)),
        ("wih1", (3 * H, H)), ("whh1", (3 * H, H)),
        ("bih1", (3 * H,)), ("bhh1", (3 * H,)),
        ("w1", (H // 2, H)), ("b1", (H // 2,)),
        ("w2", (output_size, H // 2)), ("b2", (output_size,)),
    ]
    keys = jax.random.split(key, len(names_shapes))
    params = {}
    for (name, shape), kk in zip(names_shapes, keys):
        params[name] = jax.random.uniform(kk, shape, jnp.float32, -k, k)
    return params


def gru_model_reference(x, params):
    """Pure-JAX f32 reference replicating torch.nn.GRU(batch_first=True) + head."""
    B, T, D = x.shape
    H = params["whh0"].shape[1]

    def cell(x_t, h, wih, whh, bih, bhh):
        gi = x_t @ wih.T + bih
        gh = h @ whh.T + bhh
        r = jax.nn.sigmoid(gi[:, :H] + gh[:, :H])
        z = jax.nn.sigmoid(gi[:, H:2 * H] + gh[:, H:2 * H])
        n = jnp.tanh(gi[:, 2 * H:] + r * gh[:, 2 * H:])
        return (1.0 - z) * n + z * h

    h0 = jnp.zeros((B, H), jnp.float32)
    h1 = jnp.zeros((B, H), jnp.float32)
    for t in range(T):
        x_t = x[:, t, :]
        h0 = cell(x_t, h0, params["wih0"], params["whh0"], params["bih0"], params["bhh0"])
        h1 = cell(h0, h1, params["wih1"], params["whh1"], params["bih1"], params["bhh1"])
    hid = jnp.maximum(h1 @ params["w1"].T + params["b1"], 0.0)
    return hid @ params["w2"].T + params["b2"]


if __name__ == "__main__":
    # Small shapes consistent with the module: batch=2, seq=8, input=4, hidden=32.
    B, T, D, H, O = 2, 8, 4, 32, 1

    key = jax.random.PRNGKey(0)
    kx, kp = jax.random.split(key)
    x = jax.random.normal(kx, (B, T, D), jnp.float32)
    params = init_params(kp, D, H, O)

    out = gru_model_forward(x, params)
    out = jax.block_until_ready(out)

    ref = gru_model_reference(x, params)
    assert out.shape == (B, O), out.shape
    # Tolerance loosened vs. the pure-f32 version: MXU operands are bf16
    # (f32 accumulation + f32 gate math), so ~1e-2-level deviations are expected.
    assert jnp.allclose(out, ref, atol=3e-2, rtol=3e-2), (out, ref)

    print("KERNEL_OK")
</pallas_src>

<mosaic_0001>
module attributes {stable_mosaic.version = 11 : i64} {
  func.func @gru_model_kernel(%arg0: memref<64x128xbf16, #tpu.memory_space<vmem>>, %arg1: memref<128x384xbf16, #tpu.memory_space<vmem>>, %arg2: memref<256x768xbf16, #tpu.memory_space<vmem>>, %arg3: memref<1x384xf32, #tpu.memory_space<vmem>>, %arg4: memref<8x128xf32, #tpu.memory_space<vmem>>, %arg5: memref<128x384xbf16, #tpu.memory_space<vmem>>, %arg6: memref<8x384xf32, #tpu.memory_space<vmem>>, %arg7: memref<8x128xf32, #tpu.memory_space<vmem>>, %arg8: memref<128x128xbf16, #tpu.memory_space<vmem>>, %arg9: memref<8x128xf32, #tpu.memory_space<vmem>>, %arg10: memref<128x128xbf16, #tpu.memory_space<vmem>>, %arg11: memref<8x128xf32, #tpu.memory_space<vmem>>, %arg12: memref<8x128xf32, #tpu.memory_space<vmem>>) attributes {dimension_semantics = [], scalar_prefetch = 0 : i64, scratch_operands = 0 : i64, tpu.core_type = #tpu.core_type<tc>} {
    %c0 = arith.constant 0 : index
    %c0_0 = arith.constant 0 : index
    %0 = vector.load %arg4[%c0, %c0_0] : memref<8x128xf32, #tpu.memory_space<vmem>>, vector<8x128xf32>
    %c0_1 = arith.constant 0 : index
    %c0_2 = arith.constant 0 : index
    %1 = vector.load %arg6[%c0_1, %c0_2] : memref<8x384xf32, #tpu.memory_space<vmem>>, vector<8x384xf32>
    %c0_3 = arith.constant 0 : index
    %c0_4 = arith.constant 0 : index
    %2 = vector.load %arg7[%c0_3, %c0_4] : memref<8x128xf32, #tpu.memory_space<vmem>>, vector<8x128xf32>
    %c0_5 = arith.constant 0 : index
    %c0_6 = arith.constant 0 : index
    %3 = vector.load %arg0[%c0_5, %c0_6] : memref<64x128xbf16, #tpu.memory_space<vmem>>, vector<64x128xbf16>
    %c0_7 = arith.constant 0 : index
    %c0_8 = arith.constant 0 : index
    %4 = vector.load %arg1[%c0_7, %c0_8] : memref<128x384xbf16, #tpu.memory_space<vmem>>, vector<128x384xbf16>
    %cst = arith.constant dense<0.000000e+00> : vector<64x384xf32>
    %5 = tpu.matmul %3, %4, %cst {dimension_numbers = #tpu.dot_dimension_numbers<[1], [0], [0], [1], [0, 0, 1, 1], [], []>} : vector<64x128xbf16>, vector<128x384xbf16>, vector<64x384xf32> -> vector<64x384xf32>
    %c0_9 = arith.constant 0 : index
    %c0_10 = arith.constant 0 : index
    %6 = vector.load %arg3[%c0_9, %c0_10] : memref<1x384xf32, #tpu.memory_space<vmem>>, vector<1x384xf32>
    %7 = vector.broadcast %6 : vector<1x384xf32> to vector<64x384xf32>
    %8 = arith.addf %5, %7 : vector<64x384xf32>
    %cst_11 = arith.constant 0.000000e+00 : f32
    %9 = vector.broadcast %cst_11 : f32 to vector<8x128xf32>
    %cst_12 = arith.constant 0.000000e+00 : f32
    %10 = vector.broadcast %cst_12 : f32 to vector<8x128xf32>
    %11 = tpu.concatenate %9, %10 in 1 : vector<8x128xf32>, vector<8x128xf32> -> vector<8x256xf32>
    %12 = arith.truncf %11 : vector<8x256xf32> to vector<8x256xbf16>
    %c0_13 = arith.constant 0 : index
    %c0_14 = arith.constant 0 : index
    %13 = vector.load %arg2[%c0_13, %c0_14] : memref<256x768xbf16, #tpu.memory_space<vmem>>, vector<256x768xbf16>
    %cst_15 = arith.constant dense<0.000000e+00> : vector<8x768xf32>
    %14 = tpu.matmul %12, %13, %cst_15 {dimension_numbers = #tpu.dot_dimension_numbers<[1], [0], [0], [1], [0, 0, 1, 1], [], []>} : vector<8x256xbf16>, vector<256x768xbf16>, vector<8x768xf32> -> vector<8x768xf32>
    %15 = vector.extract_strided_slice %14 {offsets = [0, 0], sizes = [8, 384], strides = [1, 1]} : vector<8x768xf32> to vector<8x384xf32>
    %16 = vector.extract_strided_slice %14 {offsets = [0, 384], sizes = [8, 384], strides = [1, 1]} : vector<8x768xf32> to vector<8x384xf32>
    %17 = vector.extract_strided_slice %8 {offsets = [0, 0], sizes = [8, 384], strides = [1, 1]} : vector<64x384xf32> to vector<8x384xf32>
    %18 = vector.extract_strided_slice %17 {offsets = [0, 0], sizes = [8, 128], strides = [1, 1]} : vector<8x384xf32> to vector<8x128xf32>
    %19 = vector.extract_strided_slice %15 {offsets = [0, 0], sizes = [8, 128], strides = [1, 1]} : vector<8x384xf32> to vector<8x128xf32>
    %20 = arith.addf %18, %19 : vector<8x128xf32>
    %21 = arith.negf %20 : vector<8x128xf32>
    %22 = math.exp %21 : vector<8x128xf32>
    %cst_16 = arith.constant 1.000000e+00 : f32
    %23 = vector.broadcast %cst_16 : f32 to vector<8x128xf32>
    %24 = arith.addf %23, %22 : vector<8x128xf32>
    %25 = arith.divf %23, %24 : vector<8x128xf32>
    %26 = vector.extract_strided_slice %17 {offsets = [0, 128], sizes = [8, 128], strides = [1, 1]} : vector<8x384xf32> to vector<8x128xf32>
    %27 = vector.extract_strided_slice %15 {offsets = [0, 128], sizes = [8, 128], strides = [1, 1]} : vector<8x384xf32> to vector<8x128xf32>
    %28 = arith.addf %26, %27 : vector<8x128xf32>
    %29 = arith.negf %28 : vector<8x128xf32>
    %30 = math.exp %29 : vector<8x128xf32>
    %cst_17 = arith.constant 1.000000e+00 : f32
    %31 = vector.broadcast %cst_17 : f32 to vector<8x128xf32>
    %32 = arith.addf %31, %30 : vector<8x128xf32>
    %33 = arith.divf %31, %32 : vector<8x128xf32>
    %34 = vector.extract_strided_slice %17 {offsets = [0, 256], sizes = [8, 128], strides = [1, 1]} : vector<8x384xf32> to vector<8x128xf32>
    %35 = vector.extract_strided_slice %15 {offsets = [0, 256], sizes = [8, 128], strides = [1, 1]} : vector<8x384xf32> to vector<8x128xf32>
    %36 = arith.addf %35, %0 : vector<8x128xf32>
    %37 = arith.mulf %25, %36 : vector<8x128xf32>
    %38 = arith.addf %34, %37 : vector<8x128xf32>
    %39 = math.tanh %38 : vector<8x128xf32>
    %cst_18 = arith.constant 1.000000e+00 : f32
    %40 = vector.broadcast %cst_18 : f32 to vector<8x128xf32>
    %41 = arith.subf %40, %33 : vector<8x128xf32>
    %42 = arith.mulf %41, %39 : vector<8x128xf32>
    %43 = arith.mulf %33, %9 : vector<8x128xf32>
    %44 = arith.addf %42, %43 : vector<8x128xf32>
    %45 = arith.truncf %44 : vector<8x128xf32> to vector<8x128xbf16>
    %c0_19 = arith.constant 0 : index
    %c0_20 = arith.constant 0 : index
    %46 = vector.load %arg5[%c0_19, %c0_20] : memref<128x384xbf16, #tpu.memory_space<vmem>>, vector<128x384xbf16>
    %cst_21 = arith.constant dense<0.000000e+00> : vector<8x384xf32>
    %47 = tpu.matmul %45, %46, %cst_21 {dimension_numbers = #tpu.dot_dimension_numbers<[1], [0], [0], [1], [0, 0, 1, 1], [], []>} : vector<8x128xbf16>, vector<128x384xbf16>, vector<8x384xf32> -> vector<8x384xf32>
    %48 = arith.addf %47, %1 : vector<8x384xf32>
    %49 = vector.extract_strided_slice %48 {offsets = [0, 0], sizes = [8, 128], strides = [1, 1]} : vector<8x384xf32> to vector<8x128xf32>
    %50 = vector.extract_strided_slice %16 {offsets = [0, 0], sizes = [8, 128], strides = [1, 1]} : vector<8x384xf32> to vector<8x128xf32>
    %51 = arith.addf %49, %50 : vector<8x128xf32>
    %52 = arith.negf %51 : vector<8x128xf32>
    %53 = math.exp %52 : vector<8x128xf32>
    %cst_22 = arith.constant 1.000000e+00 : f32
    %54 = vector.broadcast %cst_22 : f32 to vector<8x128xf32>
    %55 = arith.addf %54, %53 : vector<8x128xf32>
    %56 = arith.divf %54, %55 : vector<8x128xf32>
    %57 = vector.extract_strided_slice %48 {offsets = [0, 128], sizes = [8, 128], strides = [1, 1]} : vector<8x384xf32> to vector<8x128xf32>
    %58 = vector.extract_strided_slice %16 {offsets = [0, 128], sizes = [8, 128], strides = [1, 1]} : vector<8x384xf32> to vector<8x128xf32>
    %59 = arith.addf %57, %58 : vector<8x128xf32>
    %60 = arith.negf %59 : vector<8x128xf32>
    %61 = math.exp %60 : vector<8x128xf32>
    %cst_23 = arith.constant 1.000000e+00 : f32
    %62 = vector.broadcast %cst_23 : f32 to vector<8x128xf32>
    %63 = arith.addf %62, %61 : vector<8x128xf32>
    %64 = arith.divf %62, %63 : vector<8x128xf32>
    %65 = vector.extract_strided_slice %48 {offsets = [0, 256], sizes = [8, 128], strides = [1, 1]} : vector<8x384xf32> to vector<8x128xf32>
    %66 = vector.extract_strided_slice %16 {offsets = [0, 256], sizes = [8, 128], strides = [1, 1]} : vector<8x384xf32> to vector<8x128xf32>
    %67 = arith.addf %66, %2 : vector<8x128xf32>
    %68 = arith.mulf %56, %67 : vector<8x128xf32>
    %69 = arith.addf %65, %68 : vector<8x128xf32>
    %70 = math.tanh %69 : vector<8x128xf32>
    %cst_24 = arith.constant 1.000000e+00 : f32
    %71 = vector.broadcast %cst_24 : f32 to vector<8x128xf32>
    %72 = arith.subf %71, %64 : vector<8x128xf32>
    %73 = arith.mulf %72, %70 : vector<8x128xf32>
    %74 = arith.mulf %64, %10 : vector<8x128xf32>
    %75 = arith.addf %73, %74 : vector<8x128xf32>
    %76 = tpu.concatenate %44, %75 in 1 : vector<8x128xf32>, vector<8x128xf32> -> vector<8x256xf32>
    %77 = arith.truncf %76 : vector<8x256xf32> to vector<8x256xbf16>
    %c0_25 = arith.constant 0 : index
    %c0_26 = arith.constant 0 : index
    %78 = vector.load %arg2[%c0_25, %c0_26] : memref<256x768xbf16, #tpu.memory_space<vmem>>, vector<256x768xbf16>
    %cst_27 = arith.constant dense<0.000000e+00> : vector<8x768xf32>
    %79 = tpu.matmul %77, %78, %cst_27 {dimension_numbers = #tpu.dot_dimension_numbers<[1], [0], [0], [1], [0, 0, 1, 1], [], []>} : vector<8x256xbf16>, vector<256x768xbf16>, vector<8x768xf32> -> vector<8x768xf32>
    %80 = vector.extract_strided_slice %79 {offsets = [0, 0], sizes = [8, 384], strides = [1, 1]} : vector<8x768xf32> to vector<8x384xf32>
    %81 = vector.extract_strided_slice %79 {offsets = [0, 384], sizes = [8, 384], strides = [1, 1]} : vector<8x768xf32> to vector<8x384xf32>
    %82 = vector.extract_strided_slice %8 {offsets = [8, 0], sizes = [8, 384], strides = [1, 1]} : vector<64x384xf32> to vector<8x384xf32>
    %83 = vector.extract_strided_slice %82 {offsets = [0, 0], sizes = [8, 128], strides = [1, 1]} : vector<8x384xf32> to vector<8x128xf32>
    %84 = vector.extract_strided_slice %80 {offsets = [0, 0], sizes = [8, 128], strides = [1, 1]} : vector<8x384xf32> to vector<8x128xf32>
    %85 = arith.addf %83, %84 : vector<8x128xf32>
    %86 = arith.negf %85 : vector<8x128xf32>
    %87 = math.exp %86 : vector<8x128xf32>
    %cst_28 = arith.constant 1.000000e+00 : f32
    %88 = vector.broadcast %cst_28 : f32 to vector<8x128xf32>
    %89 = arith.addf %88, %87 : vector<8x128xf32>
    %90 = arith.divf %88, %89 : vector<8x128xf32>
    %91 = vector.extract_strided_slice %82 {offsets = [0, 128], sizes = [8, 128], strides = [1, 1]} : vector<8x384xf32> to vector<8x128xf32>
    %92 = vector.extract_strided_slice %80 {offsets = [0, 128], sizes = [8, 128], strides = [1, 1]} : vector<8x384xf32> to vector<8x128xf32>
    %93 = arith.addf %91, %92 : vector<8x128xf32>
    %94 = arith.negf %93 : vector<8x128xf32>
    %95 = math.exp %94 : vector<8x128xf32>
    %cst_29 = arith.constant 1.000000e+00 : f32
    %96 = vector.broadcast %cst_29 : f32 to vector<8x128xf32>
    %97 = arith.addf %96, %95 : vector<8x128xf32>
    %98 = arith.divf %96, %97 : vector<8x128xf32>
    %99 = vector.extract_strided_slice %82 {offsets = [0, 256], sizes = [8, 128], strides = [1, 1]} : vector<8x384xf32> to vector<8x128xf32>
    %100 = vector.extract_strided_slice %80 {offsets = [0, 256], sizes = [8, 128], strides = [1, 1]} : vector<8x384xf32> to vector<8x128xf32>
    %101 = arith.addf %100, %0 : vector<8x128xf32>
    %102 = arith.mulf %90, %101 : vector<8x128xf32>
    %103 = arith.addf %99, %102 : vector<8x128xf32>
    %104 = math.tanh %103 : vector<8x128xf32>
    %cst_30 = arith.constant 1.000000e+00 : f32
    %105 = vector.broadcast %cst_30 : f32 to vector<8x128xf32>
    %106 = arith.subf %105, %98 : vector<8x128xf32>
    %107 = arith.mulf %106, %104 : vector<8x128xf32>
    %108 = arith.mulf %98, %44 : vector<8x128xf32>
    %109 = arith.addf %107, %108 : vector<8x128xf32>
    %110 = arith.truncf %109 : vector<8x128xf32> to vector<8x128xbf16>
    %c0_31 = arith.constant 0 : index
    %c0_32 = arith.constant 0 : index
    %111 = vector.load %arg5[%c0_31, %c0_32] : memref<128x384xbf16, #tpu.memory_space<vmem>>, vector<128x384xbf16>
    %cst_33 = arith.constant dense<0.000000e+00> : vector<8x384xf32>
    %112 = tpu.matmul %110, %111, %cst_33 {dimension_numbers = #tpu.dot_dimension_numbers<[1], [0], [0], [1], [0, 0, 1, 1], [], []>} : vector<8x128xbf16>, vector<128x384xbf16>, vector<8x384xf32> -> vector<8x384xf32>
    %113 = arith.addf %112, %1 : vector<8x384xf32>
    %114 = vector.extract_strided_slice %113 {offsets = [0, 0], sizes = [8, 128], strides = [1, 1]} : vector<8x384xf32> to vector<8x128xf32>
    %115 = vector.extract_strided_slice %81 {offsets = [0, 0], sizes = [8, 128], strides = [1, 1]} : vector<8x384xf32> to vector<8x128xf32>
    %116 = arith.addf %114, %115 : vector<8x128xf32>
    %117 = arith.negf %116 : vector<8x128xf32>
    %118 = math.exp %117 : vector<8x128xf32>
    %cst_34 = arith.constant 1.000000e+00 : f32
    %119 = vector.broadcast %cst_34 : f32 to vector<8x128xf32>
    %120 = arith.addf %119, %118 : vector<8x128xf32>
    %121 = arith.divf %119, %120 : vector<8x128xf32>
    %122 = vector.extract_strided_slice %113 {offsets = [0, 128], sizes = [8, 128], strides = [1, 1]} : vector<8x384xf32> to vector<8x128xf32>
    %123 = vector.extract_strided_slice %81 {offsets = [0, 128], sizes = [8, 128], strides = [1, 1]} : vector<8x384xf32> to vector<8x128xf32>
    %124 = arith.addf %122, %123 : vector<8x128xf32>
    %125 = arith.negf %124 : vector<8x128xf32>
    %126 = math.exp %125 : vector<8x128xf32>
    %cst_35 = arith.constant 1.000000e+00 : f32
    %127 = vector.broadcast %cst_35 : f32 to vector<8x128xf32>
    %128 = arith.addf %127, %126 : vector<8x128xf32>
    %129 = arith.divf %127, %128 : vector<8x128xf32>
    %130 = vector.extract_strided_slice %113 {offsets = [0, 256], sizes = [8, 128], strides = [1, 1]} : vector<8x384xf32> to vector<8x128xf32>
    %131 = vector.extract_strided_slice %81 {offsets = [0, 256], sizes = [8, 128], strides = [1, 1]} : vector<8x384xf32> to vector<8x128xf32>
    %132 = arith.addf %131, %2 : vector<8x128xf32>
    %133 = arith.mulf %121, %132 : vector<8x128xf32>
    %134 = arith.addf %130, %133 : vector<8x128xf32>
    %135 = math.tanh %134 : vector<8x128xf32>
    %cst_36 = arith.constant 1.000000e+00 : f32
    %136 = vector.broadcast %cst_36 : f32 to vector<8x128xf32>
    %137 = arith.subf %136, %129 : vector<8x128xf32>
    %138 = arith.mulf %137, %135 : vector<8x128xf32>
    %139 = arith.mulf %129, %75 : vector<8x128xf32>
    %140 = arith.addf %138, %139 : vector<8x128xf32>
    %141 = tpu.concatenate %109, %140 in 1 : vector<8x128xf32>, vector<8x128xf32> -> vector<8x256xf32>
    %142 = arith.truncf %141 : vector<8x256xf32> to vector<8x256xbf16>
    %c0_37 = arith.constant 0 : index
    %c0_38 = arith.constant 0 : index
    %143 = vector.load %arg2[%c0_37, %c0_38] : memref<256x768xbf16, #tpu.memory_space<vmem>>, vector<256x768xbf16>
    %cst_39 = arith.constant dense<0.000000e+00> : vector<8x768xf32>
    %144 = tpu.matmul %142, %143, %cst_39 {dimension_numbers = #tpu.dot_dimension_numbers<[1], [0], [0], [1], [0, 0, 1, 1], [], []>} : vector<8x256xbf16>, vector<256x768xbf16>, vector<8x768xf32> -> vector<8x768xf32>
    %145 = vector.extract_strided_slice %144 {offsets = [0, 0], sizes = [8, 384], strides = [1, 1]} : vector<8x768xf32> to vector<8x384xf32>
    %146 = vector.extract_strided_slice %144 {offsets = [0, 384], sizes = [8, 384], strides = [1, 1]} : vector<8x768xf32> to vector<8x384xf32>
    %147 = vector.extract_strided_slice %8 {offsets = [16, 0], sizes = [8, 384], strides = [1, 1]} : vector<64x384xf32> to vector<8x384xf32>
    %148 = vector.extract_strided_slice %147 {offsets = [0, 0], sizes = [8, 128], strides = [1, 1]} : vector<8x384xf32> to vector<8x128xf32>
    %149 = vector.extract_strided_slice %145 {offsets = [0, 0], sizes = [8, 128], strides = [1, 1]} : vector<8x384xf32> to vector<8x128xf32>
    %150 = arith.addf %148, %149 : vector<8x128xf32>
    %151 = arith.negf %150 : vector<8x128xf32>
    %152 = math.exp %151 : vector<8x128xf32>
    %cst_40 = arith.constant 1.000000e+00 : f32
    %153 = vector.broadcast %cst_40 : f32 to vector<8x128xf32>
    %154 = arith.addf %153, %152 : vector<8x128xf32>
    %155 = arith.divf %153, %154 : vector<8x128xf32>
    %156 = vector.extract_strided_slice %147 {offsets = [0, 128], sizes = [8, 128], strides = [1, 1]} : vector<8x384xf32> to vector<8x128xf32>
    %157 = vector.extract_strided_slice %145 {offsets = [0, 128], sizes = [8, 128], strides = [1, 1]} : vector<8x384xf32> to vector<8x128xf32>
    %158 = arith.addf %156, %157 : vector<8x128xf32>
    %159 = arith.negf %158 : vector<8x128xf32>
    %160 = math.exp %159 : vector<8x128xf32>
    %cst_41 = arith.constant 1.000000e+00 : f32
    %161 = vector.broadcast %cst_41 : f32 to vector<8x128xf32>
    %162 = arith.addf %161, %160 : vector<8x128xf32>
    %163 = arith.divf %161, %162 : vector<8x128xf32>
    %164 = vector.extract_strided_slice %147 {offsets = [0, 256], sizes = [8, 128], strides = [1, 1]} : vector<8x384xf32> to vector<8x128xf32>
    %165 = vector.extract_strided_slice %145 {offsets = [0, 256], sizes = [8, 128], strides = [1, 1]} : vector<8x384xf32> to vector<8x128xf32>
    %166 = arith.addf %165, %0 : vector<8x128xf32>
    %167 = arith.mulf %155, %166 : vector<8x128xf32>
    %168 = arith.addf %164, %167 : vector<8x128xf32>
    %169 = math.tanh %168 : vector<8x128xf32>
    %cst_42 = arith.constant 1.000000e+00 : f32
    %170 = vector.broadcast %cst_42 : f32 to vector<8x128xf32>
    %171 = arith.subf %170, %163 : vector<8x128xf32>
    %172 = arith.mulf %171, %169 : vector<8x128xf32>
    %173 = arith.mulf %163, %109 : vector<8x128xf32>
    %174 = arith.addf %172, %173 : vector<8x128xf32>
    %175 = arith.truncf %174 : vector<8x128xf32> to vector<8x128xbf16>
    %c0_43 = arith.constant 0 : index
    %c0_44 = arith.constant 0 : index
    %176 = vector.load %arg5[%c0_43, %c0_44] : memref<128x384xbf16, #tpu.memory_space<vmem>>, vector<128x384xbf16>
    %cst_45 = arith.constant dense<0.000000e+00> : vector<8x384xf32>
    %177 = tpu.matmul %175, %176, %cst_45 {dimension_numbers = #tpu.dot_dimension_numbers<[1], [0], [0], [1], [0, 0, 1, 1], [], []>} : vector<8x128xbf16>, vector<128x384xbf16>, vector<8x384xf32> -> vector<8x384xf32>
    %178 = arith.addf %177, %1 : vector<8x384xf32>
    %179 = vector.extract_strided_slice %178 {offsets = [0, 0], sizes = [8, 128], strides = [1, 1]} : vector<8x384xf32> to vector<8x128xf32>
    %180 = vector.extract_strided_slice %146 {offsets = [0, 0], sizes = [8, 128], strides = [1, 1]} : vector<8x384xf32> to vector<8x128xf32>
    %181 = arith.addf %179, %180 : vector<8x128xf32>
    %182 = arith.negf %181 : vector<8x128xf32>
    %183 = math.exp %182 : vector<8x128xf32>
    %cst_46 = arith.constant 1.000000e+00 : f32
    %184 = vector.broadcast %cst_46 : f32 to vector<8x128xf32>
    %185 = arith.addf %184, %183 : vector<8x128xf32>
    %186 = arith.divf %184, %185 : vector<8x128xf32>
    %187 = vector.extract_strided_slice %178 {offsets = [0, 128], sizes = [8, 128], strides = [1, 1]} : vector<8x384xf32> to vector<8x128xf32>
    %188 = vector.extract_strided_slice %146 {offsets = [0, 128], sizes = [8, 128], strides = [1, 1]} : vector<8x384xf32> to vector<8x128xf32>
    %189 = arith.addf %187, %188 : vector<8x128xf32>
    %190 = arith.negf %189 : vector<8x128xf32>
    %191 = math.exp %190 : vector<8x128xf32>
    %cst_47 = arith.constant 1.000000e+00 : f32
    %192 = vector.broadcast %cst_47 : f32 to vector<8x128xf32>
    %193 = arith.addf %192, %191 : vector<8x128xf32>
    %194 = arith.divf %192, %193 : vector<8x128xf32>
    %195 = vector.extract_strided_slice %178 {offsets = [0, 256], sizes = [8, 128], strides = [1, 1]} : vector<8x384xf32> to vector<8x128xf32>
    %196 = vector.extract_strided_slice %146 {offsets = [0, 256], sizes = [8, 128], strides = [1, 1]} : vector<8x384xf32> to vector<8x128xf32>
    %197 = arith.addf %196, %2 : vector<8x128xf32>
    %198 = arith.mulf %186, %197 : vector<8x128xf32>
    %199 = arith.addf %195, %198 : vector<8x128xf32>
    %200 = math.tanh %199 : vector<8x128xf32>
    %cst_48 = arith.constant 1.000000e+00 : f32
    %201 = vector.broadcast %cst_48 : f32 to vector<8x128xf32>
    %202 = arith.subf %201, %194 : vector<8x128xf32>
    %203 = arith.mulf %202, %200 : vector<8x128xf32>
    %204 = arith.mulf %194, %140 : vector<8x128xf32>
    %205 = arith.addf %203, %204 : vector<8x128xf32>
    %206 = tpu.concatenate %174, %205 in 1 : vector<8x128xf32>, vector<8x128xf32> -> vector<8x256xf32>
    %207 = arith.truncf %206 : vector<8x256xf32> to vector<8x256xbf16>
    %c0_49 = arith.constant 0 : index
    %c0_50 = arith.constant 0 : index
    %208 = vector.load %arg2[%c0_49, %c0_50] : memref<256x768xbf16, #tpu.memory_space<vmem>>, vector<256x768xbf16>
    %cst_51 = arith.constant dense<0.000000e+00> : vector<8x768xf32>
    %209 = tpu.matmul %207, %208, %cst_51 {dimension_numbers = #tpu.dot_dimension_numbers<[1], [0], [0], [1], [0, 0, 1, 1], [], []>} : vector<8x256xbf16>, vector<256x768xbf16>, vector<8x768xf32> -> vector<8x768xf32>
    %210 = vector.extract_strided_slice %209 {offsets = [0, 0], sizes = [8, 384], strides = [1, 1]} : vector<8x768xf32> to vector<8x384xf32>
    %211 = vector.extract_strided_slice %209 {offsets = [0, 384], sizes = [8, 384], strides = [1, 1]} : vector<8x768xf32> to vector<8x384xf32>
    %212 = vector.extract_strided_slice %8 {offsets = [24, 0], sizes = [8, 384], strides = [1, 1]} : vector<64x384xf32> to vector<8x384xf32>
    %213 = vector.extract_strided_slice %212 {offsets = [0, 0], sizes = [8, 128], strides = [1, 1]} : vector<8x384xf32> to vector<8x128xf32>
    %214 = vector.extract_strided_slice %210 {offsets = [0, 0], sizes = [8, 128], strides = [1, 1]} : vector<8x384xf32> to vector<8x128xf32>
    %215 = arith.addf %213, %214 : vector<8x128xf32>
    %216 = arith.negf %215 : vector<8x128xf32>
    %217 = math.exp %216 : vector<8x128xf32>
    %cst_52 = arith.constant 1.000000e+00 : f32
    %218 = vector.broadcast %cst_52 : f32 to vector<8x128xf32>
    %219 = arith.addf %218, %217 : vector<8x128xf32>
    %220 = arith.divf %218, %219 : vector<8x128xf32>
    %221 = vector.extract_strided_slice %212 {offsets = [0, 128], sizes = [8, 128], strides = [1, 1]} : vector<8x384xf32> to vector<8x128xf32>
    %222 = vector.extract_strided_slice %210 {offsets = [0, 128], sizes = [8, 128], strides = [1, 1]} : vector<8x384xf32> to vector<8x128xf32>
    %223 = arith.addf %221, %222 : vector<8x128xf32>
    %224 = arith.negf %223 : vector<8x128xf32>
    %225 = math.exp %224 : vector<8x128xf32>
    %cst_53 = arith.constant 1.000000e+00 : f32
    %226 = vector.broadcast %cst_53 : f32 to vector<8x128xf32>
    %227 = arith.addf %226, %225 : vector<8x128xf32>
    %228 = arith.divf %226, %227 : vector<8x128xf32>
    %229 = vector.extract_strided_slice %212 {offsets = [0, 256], sizes = [8, 128], strides = [1, 1]} : vector<8x384xf32> to vector<8x128xf32>
    %230 = vector.extract_strided_slice %210 {offsets = [0, 256], sizes = [8, 128], strides = [1, 1]} : vector<8x384xf32> to vector<8x128xf32>
    %231 = arith.addf %230, %0 : vector<8x128xf32>
    %232 = arith.mulf %220, %231 : vector<8x128xf32>
    %233 = arith.addf %229, %232 : vector<8x128xf32>
    %234 = math.tanh %233 : vector<8x128xf32>
    %cst_54 = arith.constant 1.000000e+00 : f32
    %235 = vector.broadcast %cst_54 : f32 to vector<8x128xf32>
    %236 = arith.subf %235, %228 : vector<8x128xf32>
    %237 = arith.mulf %236, %234 : vector<8x128xf32>
    %238 = arith.mulf %228, %174 : vector<8x128xf32>
    %239 = arith.addf %237, %238 : vector<8x128xf32>
    %240 = arith.truncf %239 : vector<8x128xf32> to vector<8x128xbf16>
    %c0_55 = arith.constant 0 : index
    %c0_56 = arith.constant 0 : index
    %241 = vector.load %arg5[%c0_55, %c0_56] : memref<128x384xbf16, #tpu.memory_space<vmem>>, vector<128x384xbf16>
    %cst_57 = arith.constant dense<0.000000e+00> : vector<8x384xf32>
    %242 = tpu.matmul %240, %241, %cst_57 {dimension_numbers = #tpu.dot_dimension_numbers<[1], [0], [0], [1], [0, 0, 1, 1], [], []>} : vector<8x128xbf16>, vector<128x384xbf16>, vector<8x384xf32> -> vector<8x384xf32>
    %243 = arith.addf %242, %1 : vector<8x384xf32>
    %244 = vector.extract_strided_slice %243 {offsets = [0, 0], sizes = [8, 128], strides = [1, 1]} : vector<8x384xf32> to vector<8x128xf32>
    %245 = vector.extract_strided_slice %211 {offsets = [0, 0], sizes = [8, 128], strides = [1, 1]} : vector<8x384xf32> to vector<8x128xf32>
    %246 = arith.addf %244, %245 : vector<8x128xf32>
    %247 = arith.negf %246 : vector<8x128xf32>
    %248 = math.exp %247 : vector<8x128xf32>
    %cst_58 = arith.constant 1.000000e+00 : f32
    %249 = vector.broadcast %cst_58 : f32 to vector<8x128xf32>
    %250 = arith.addf %249, %248 : vector<8x128xf32>
    %251 = arith.divf %249, %250 : vector<8x128xf32>
    %252 = vector.extract_strided_slice %243 {offsets = [0, 128], sizes = [8, 128], strides = [1, 1]} : vector<8x384xf32> to vector<8x128xf32>
    %253 = vector.extract_strided_slice %211 {offsets = [0, 128], sizes = [8, 128], strides = [1, 1]} : vector<8x384xf32> to vector<8x128xf32>
    %254 = arith.addf %252, %253 : vector<8x128xf32>
    %255 = arith.negf %254 : vector<8x128xf32>
    %256 = math.exp %255 : vector<8x128xf32>
    %cst_59 = arith.constant 1.000000e+00 : f32
    %257 = vector.broadcast %cst_59 : f32 to vector<8x128xf32>
    %258 = arith.addf %257, %256 : vector<8x128xf32>
    %259 = arith.divf %257, %258 : vector<8x128xf32>
    %260 = vector.extract_strided_slice %243 {offsets = [0, 256], sizes = [8, 128], strides = [1, 1]} : vector<8x384xf32> to vector<8x128xf32>
    %261 = vector.extract_strided_slice %211 {offsets = [0, 256], sizes = [8, 128], strides = [1, 1]} : vector<8x384xf32> to vector<8x128xf32>
    %262 = arith.addf %261, %2 : vector<8x128xf32>
    %263 = arith.mulf %251, %262 : vector<8x128xf32>
    %264 = arith.addf %260, %263 : vector<8x128xf32>
    %265 = math.tanh %264 : vector<8x128xf32>
    %cst_60 = arith.constant 1.000000e+00 : f32
    %266 = vector.broadcast %cst_60 : f32 to vector<8x128xf32>
    %267 = arith.subf %266, %259 : vector<8x128xf32>
    %268 = arith.mulf %267, %265 : vector<8x128xf32>
    %269 = arith.mulf %259, %205 : vector<8x128xf32>
    %270 = arith.addf %268, %269 : vector<8x128xf32>
    %271 = tpu.concatenate %239, %270 in 1 : vector<8x128xf32>, vector<8x128xf32> -> vector<8x256xf32>
    %272 = arith.truncf %271 : vector<8x256xf32> to vector<8x256xbf16>
    %c0_61 = arith.constant 0 : index
    %c0_62 = arith.constant 0 : index
    %273 = vector.load %arg2[%c0_61, %c0_62] : memref<256x768xbf16, #tpu.memory_space<vmem>>, vector<256x768xbf16>
    %cst_63 = arith.constant dense<0.000000e+00> : vector<8x768xf32>
    %274 = tpu.matmul %272, %273, %cst_63 {dimension_numbers = #tpu.dot_dimension_numbers<[1], [0], [0], [1], [0, 0, 1, 1], [], []>} : vector<8x256xbf16>, vector<256x768xbf16>, vector<8x768xf32> -> vector<8x768xf32>
    %275 = vector.extract_strided_slice %274 {offsets = [0, 0], sizes = [8, 384], strides = [1, 1]} : vector<8x768xf32> to vector<8x384xf32>
    %276 = vector.extract_strided_slice %274 {offsets = [0, 384], sizes = [8, 384], strides = [1, 1]} : vector<8x768xf32> to vector<8x384xf32>
    %277 = vector.extract_strided_slice %8 {offsets = [32, 0], sizes = [8, 384], strides = [1, 1]} : vector<64x384xf32> to vector<8x384xf32>
    %278 = vector.extract_strided_slice %277 {offsets = [0, 0], sizes = [8, 128], strides = [1, 1]} : vector<8x384xf32> to vector<8x128xf32>
    %279 = vector.extract_strided_slice %275 {offsets = [0, 0], sizes = [8, 128], strides = [1, 1]} : vector<8x384xf32> to vector<8x128xf32>
    %280 = arith.addf %278, %279 : vector<8x128xf32>
    %281 = arith.negf %280 : vector<8x128xf32>
    %282 = math.exp %281 : vector<8x128xf32>
    %cst_64 = arith.constant 1.000000e+00 : f32
    %283 = vector.broadcast %cst_64 : f32 to vector<8x128xf32>
    %284 = arith.addf %283, %282 : vector<8x128xf32>
    %285 = arith.divf %283, %284 : vector<8x128xf32>
    %286 = vector.extract_strided_slice %277 {offsets = [0, 128], sizes = [8, 128], strides = [1, 1]} : vector<8x384xf32> to vector<8x128xf32>
    %287 = vector.extract_strided_slice %275 {offsets = [0, 128], sizes = [8, 128], strides = [1, 1]} : vector<8x384xf32> to vector<8x128xf32>
    %288 = arith.addf %286, %287 : vector<8x128xf32>
    %289 = arith.negf %288 : vector<8x128xf32>
    %290 = math.exp %289 : vector<8x128xf32>
    %cst_65 = arith.constant 1.000000e+00 : f32
    %291 = vector.broadcast %cst_65 : f32 to vector<8x128xf32>
    %292 = arith.addf %291, %290 : vector<8x128xf32>
    %293 = arith.divf %291, %292 : vector<8x128xf32>
    %294 = vector.extract_strided_slice %277 {offsets = [0, 256], sizes = [8, 128], strides = [1, 1]} : vector<8x384xf32> to vector<8x128xf32>
    %295 = vector.extract_strided_slice %275 {offsets = [0, 256], sizes = [8, 128], strides = [1, 1]} : vector<8x384xf32> to vector<8x128xf32>
    %296 = arith.addf %295, %0 : vector<8x128xf32>
    %297 = arith.mulf %285, %296 : vector<8x128xf32>
    %298 = arith.addf %294, %297 : vector<8x128xf32>
    %299 = math.tanh %298 : vector<8x128xf32>
    %cst_66 = arith.constant 1.000000e+00 : f32
    %300 = vector.broadcast %cst_66 : f32 to vector<8x128xf32>
    %301 = arith.subf %300, %293 : vector<8x128xf32>
    %302 = arith.mulf %301, %299 : vector<8x128xf32>
    %303 = arith.mulf %293, %239 : vector<8x128xf32>
    %304 = arith.addf %302, %303 : vector<8x128xf32>
    %305 = arith.truncf %304 : vector<8x128xf32> to vector<8x128xbf16>
    %c0_67 = arith.constant 0 : index
    %c0_68 = arith.constant 0 : index
    %306 = vector.load %arg5[%c0_67, %c0_68] : memref<128x384xbf16, #tpu.memory_space<vmem>>, vector<128x384xbf16>
    %cst_69 = arith.constant dense<0.000000e+00> : vector<8x384xf32>
    %307 = tpu.matmul %305, %306, %cst_69 {dimension_numbers = #tpu.dot_dimension_numbers<[1], [0], [0], [1], [0, 0, 1, 1], [], []>} : vector<8x128xbf16>, vector<128x384xbf16>, vector<8x384xf32> -> vector<8x384xf32>
    %308 = arith.addf %307, %1 : vector<8x384xf32>
    %309 = vector.extract_strided_slice %308 {offsets = [0, 0], sizes = [8, 128], strides = [1, 1]} : vector<8x384xf32> to vector<8x128xf32>
    %310 = vector.extract_strided_slice %276 {offsets = [0, 0], sizes = [8, 128], strides = [1, 1]} : vector<8x384xf32> to vector<8x128xf32>
    %311 = arith.addf %309, %310 : vector<8x128xf32>
    %312 = arith.negf %311 : vector<8x128xf32>
    %313 = math.exp %312 : vector<8x128xf32>
    %cst_70 = arith.constant 1.000000e+00 : f32
    %314 = vector.broadcast %cst_70 : f32 to vector<8x128xf32>
    %315 = arith.addf %314, %313 : vector<8x128xf32>
    %316 = arith.divf %314, %315 : vector<8x128xf32>
    %317 = vector.extract_strided_slice %308 {offsets = [0, 128], sizes = [8, 128], strides = [1, 1]} : vector<8x384xf32> to vector<8x128xf32>
    %318 = vector.extract_strided_slice %276 {offsets = [0, 128], sizes = [8, 128], strides = [1, 1]} : vector<8x384xf32> to vector<8x128xf32>
    %319 = arith.addf %317, %318 : vector<8x128xf32>
    %320 = arith.negf %319 : vector<8x128xf32>
    %321 = math.exp %320 : vector<8x128xf32>
    %cst_71 = arith.constant 1.000000e+00 : f32
    %322 = vector.broadcast %cst_71 : f32 to vector<8x128xf32>
    %323 = arith.addf %322, %321 : vector<8x128xf32>
    %324 = arith.divf %322, %323 : vector<8x128xf32>
    %325 = vector.extract_strided_slice %308 {offsets = [0, 256], sizes = [8, 128], strides = [1, 1]} : vector<8x384xf32> to vector<8x128xf32>
    %326 = vector.extract_strided_slice %276 {offsets = [0, 256], sizes = [8, 128], strides = [1, 1]} : vector<8x384xf32> to vector<8x128xf32>
    %327 = arith.addf %326, %2 : vector<8x128xf32>
    %328 = arith.mulf %316, %327 : vector<8x128xf32>
    %329 = arith.addf %325, %328 : vector<8x128xf32>
    %330 = math.tanh %329 : vector<8x128xf32>
    %cst_72 = arith.constant 1.000000e+00 : f32
    %331 = vector.broadcast %cst_72 : f32 to vector<8x128xf32>
    %332 = arith.subf %331, %324 : vector<8x128xf32>
    %333 = arith.mulf %332, %330 : vector<8x128xf32>
    %334 = arith.mulf %324, %270 : vector<8x128xf32>
    %335 = arith.addf %333, %334 : vector<8x128xf32>
    %336 = tpu.concatenate %304, %335 in 1 : vector<8x128xf32>, vector<8x128xf32> -> vector<8x256xf32>
    %337 = arith.truncf %336 : vector<8x256xf32> to vector<8x256xbf16>
    %c0_73 = arith.constant 0 : index
    %c0_74 = arith.constant 0 : index
    %338 = vector.load %arg2[%c0_73, %c0_74] : memref<256x768xbf16, #tpu.memory_space<vmem>>, vector<256x768xbf16>
    %cst_75 = arith.constant dense<0.000000e+00> : vector<8x768xf32>
    %339 = tpu.matmul %337, %338, %cst_75 {dimension_numbers = #tpu.dot_dimension_numbers<[1], [0], [0], [1], [0, 0, 1, 1], [], []>} : vector<8x256xbf16>, vector<256x768xbf16>, vector<8x768xf32> -> vector<8x768xf32>
    %340 = vector.extract_strided_slice %339 {offsets = [0, 0], sizes = [8, 384], strides = [1, 1]} : vector<8x768xf32> to vector<8x384xf32>
    %341 = vector.extract_strided_slice %339 {offsets = [0, 384], sizes = [8, 384], strides = [1, 1]} : vector<8x768xf32> to vector<8x384xf32>
    %342 = vector.extract_strided_slice %8 {offsets = [40, 0], sizes = [8, 384], strides = [1, 1]} : vector<64x384xf32> to vector<8x384xf32>
    %343 = vector.extract_strided_slice %342 {offsets = [0, 0], sizes = [8, 128], strides = [1, 1]} : vector<8x384xf32> to vector<8x128xf32>
    %344 = vector.extract_strided_slice %340 {offsets = [0, 0], sizes = [8, 128], strides = [1, 1]} : vector<8x384xf32> to vector<8x128xf32>
    %345 = arith.addf %343, %344 : vector<8x128xf32>
    %346 = arith.negf %345 : vector<8x128xf32>
    %347 = math.exp %346 : vector<8x128xf32>
    %cst_76 = arith.constant 1.000000e+00 : f32
    %348 = vector.broadcast %cst_76 : f32 to vector<8x128xf32>
    %349 = arith.addf %348, %347 : vector<8x128xf32>
    %350 = arith.divf %348, %349 : vector<8x128xf32>
    %351 = vector.extract_strided_slice %342 {offsets = [0, 128], sizes = [8, 128], strides = [1, 1]} : vector<8x384xf32> to vector<8x128xf32>
    %352 = vector.extract_strided_slice %340 {offsets = [0, 128], sizes = [8, 128], strides = [1, 1]} : vector<8x384xf32> to vector<8x128xf32>
    %353 = arith.addf %351, %352 : vector<8x128xf32>
    %354 = arith.negf %353 : vector<8x128xf32>
    %355 = math.exp %354 : vector<8x128xf32>
    %cst_77 = arith.constant 1.000000e+00 : f32
    %356 = vector.broadcast %cst_77 : f32 to vector<8x128xf32>
    %357 = arith.addf %356, %355 : vector<8x128xf32>
    %358 = arith.divf %356, %357 : vector<8x128xf32>
    %359 = vector.extract_strided_slice %342 {offsets = [0, 256], sizes = [8, 128], strides = [1, 1]} : vector<8x384xf32> to vector<8x128xf32>
    %360 = vector.extract_strided_slice %340 {offsets = [0, 256], sizes = [8, 128], strides = [1, 1]} : vector<8x384xf32> to vector<8x128xf32>
    %361 = arith.addf %360, %0 : vector<8x128xf32>
    %362 = arith.mulf %350, %361 : vector<8x128xf32>
    %363 = arith.addf %359, %362 : vector<8x128xf32>
    %364 = math.tanh %363 : vector<8x128xf32>
    %cst_78 = arith.constant 1.000000e+00 : f32
    %365 = vector.broadcast %cst_78 : f32 to vector<8x128xf32>
    %366 = arith.subf %365, %358 : vector<8x128xf32>
    %367 = arith.mulf %366, %364 : vector<8x128xf32>
    %368 = arith.mulf %358, %304 : vector<8x128xf32>
    %369 = arith.addf %367, %368 : vector<8x128xf32>
    %370 = arith.truncf %369 : vector<8x128xf32> to vector<8x128xbf16>
    %c0_79 = arith.constant 0 : index
    %c0_80 = arith.constant 0 : index
    %371 = vector.load %arg5[%c0_79, %c0_80] : memref<128x384xbf16, #tpu.memory_space<vmem>>, vector<128x384xbf16>
    %cst_81 = arith.constant dense<0.000000e+00> : vector<8x384xf32>
    %372 = tpu.matmul %370, %371, %cst_81 {dimension_numbers = #tpu.dot_dimension_numbers<[1], [0], [0], [1], [0, 0, 1, 1], [], []>} : vector<8x128xbf16>, vector<128x384xbf16>, vector<8x384xf32> -> vector<8x384xf32>
    %373 = arith.addf %372, %1 : vector<8x384xf32>
    %374 = vector.extract_strided_slice %373 {offsets = [0, 0], sizes = [8, 128], strides = [1, 1]} : vector<8x384xf32> to vector<8x128xf32>
    %375 = vector.extract_strided_slice %341 {offsets = [0, 0], sizes = [8, 128], strides = [1, 1]} : vector<8x384xf32> to vector<8x128xf32>
    %376 = arith.addf %374, %375 : vector<8x128xf32>
    %377 = arith.negf %376 : vector<8x128xf32>
    %378 = math.exp %377 : vector<8x128xf32>
    %cst_82 = arith.constant 1.000000e+00 : f32
    %379 = vector.broadcast %cst_82 : f32 to vector<8x128xf32>
    %380 = arith.addf %379, %378 : vector<8x128xf32>
    %381 = arith.divf %379, %380 : vector<8x128xf32>
    %382 = vector.extract_strided_slice %373 {offsets = [0, 128], sizes = [8, 128], strides = [1, 1]} : vector<8x384xf32> to vector<8x128xf32>
    %383 = vector.extract_strided_slice %341 {offsets = [0, 128], sizes = [8, 128], strides = [1, 1]} : vector<8x384xf32> to vector<8x128xf32>
    %384 = arith.addf %382, %383 : vector<8x128xf32>
    %385 = arith.negf %384 : vector<8x128xf32>
    %386 = math.exp %385 : vector<8x128xf32>
    %cst_83 = arith.constant 1.000000e+00 : f32
    %387 = vector.broadcast %cst_83 : f32 to vector<8x128xf32>
    %388 = arith.addf %387, %386 : vector<8x128xf32>
    %389 = arith.divf %387, %388 : vector<8x128xf32>
    %390 = vector.extract_strided_slice %373 {offsets = [0, 256], sizes = [8, 128], strides = [1, 1]} : vector<8x384xf32> to vector<8x128xf32>
    %391 = vector.extract_strided_slice %341 {offsets = [0, 256], sizes = [8, 128], strides = [1, 1]} : vector<8x384xf32> to vector<8x128xf32>
    %392 = arith.addf %391, %2 : vector<8x128xf32>
    %393 = arith.mulf %381, %392 : vector<8x128xf32>
    %394 = arith.addf %390, %393 : vector<8x128xf32>
    %395 = math.tanh %394 : vector<8x128xf32>
    %cst_84 = arith.constant 1.000000e+00 : f32
    %396 = vector.broadcast %cst_84 : f32 to vector<8x128xf32>
    %397 = arith.subf %396, %389 : vector<8x128xf32>
    %398 = arith.mulf %397, %395 : vector<8x128xf32>
    %399 = arith.mulf %389, %335 : vector<8x128xf32>
    %400 = arith.addf %398, %399 : vector<8x128xf32>
    %401 = tpu.concatenate %369, %400 in 1 : vector<8x128xf32>, vector<8x128xf32> -> vector<8x256xf32>
    %402 = arith.truncf %401 : vector<8x256xf32> to vector<8x256xbf16>
    %c0_85 = arith.constant 0 : index
    %c0_86 = arith.constant 0 : index
    %403 = vector.load %arg2[%c0_85, %c0_86] : memref<256x768xbf16, #tpu.memory_space<vmem>>, vector<256x768xbf16>
    %cst_87 = arith.constant dense<0.000000e+00> : vector<8x768xf32>
    %404 = tpu.matmul %402, %403, %cst_87 {dimension_numbers = #tpu.dot_dimension_numbers<[1], [0], [0], [1], [0, 0, 1, 1], [], []>} : vector<8x256xbf16>, vector<256x768xbf16>, vector<8x768xf32> -> vector<8x768xf32>
    %405 = vector.extract_strided_slice %404 {offsets = [0, 0], sizes = [8, 384], strides = [1, 1]} : vector<8x768xf32> to vector<8x384xf32>
    %406 = vector.extract_strided_slice %404 {offsets = [0, 384], sizes = [8, 384], strides = [1, 1]} : vector<8x768xf32> to vector<8x384xf32>
    %407 = vector.extract_strided_slice %8 {offsets = [48, 0], sizes = [8, 384], strides = [1, 1]} : vector<64x384xf32> to vector<8x384xf32>
    %408 = vector.extract_strided_slice %407 {offsets = [0, 0], sizes = [8, 128], strides = [1, 1]} : vector<8x384xf32> to vector<8x128xf32>
    %409 = vector.extract_strided_slice %405 {offsets = [0, 0], sizes = [8, 128], strides = [1, 1]} : vector<8x384xf32> to vector<8x128xf32>
    %410 = arith.addf %408, %409 : vector<8x128xf32>
    %411 = arith.negf %410 : vector<8x128xf32>
    %412 = math.exp %411 : vector<8x128xf32>
    %cst_88 = arith.constant 1.000000e+00 : f32
    %413 = vector.broadcast %cst_88 : f32 to vector<8x128xf32>
    %414 = arith.addf %413, %412 : vector<8x128xf32>
    %415 = arith.divf %413, %414 : vector<8x128xf32>
    %416 = vector.extract_strided_slice %407 {offsets = [0, 128], sizes = [8, 128], strides = [1, 1]} : vector<8x384xf32> to vector<8x128xf32>
    %417 = vector.extract_strided_slice %405 {offsets = [0, 128], sizes = [8, 128], strides = [1, 1]} : vector<8x384xf32> to vector<8x128xf32>
    %418 = arith.addf %416, %417 : vector<8x128xf32>
    %419 = arith.negf %418 : vector<8x128xf32>
    %420 = math.exp %419 : vector<8x128xf32>
    %cst_89 = arith.constant 1.000000e+00 : f32
    %421 = vector.broadcast %cst_89 : f32 to vector<8x128xf32>
    %422 = arith.addf %421, %420 : vector<8x128xf32>
    %423 = arith.divf %421, %422 : vector<8x128xf32>
    %424 = vector.extract_strided_slice %407 {offsets = [0, 256], sizes = [8, 128], strides = [1, 1]} : vector<8x384xf32> to vector<8x128xf32>
    %425 = vector.extract_strided_slice %405 {offsets = [0, 256], sizes = [8, 128], strides = [1, 1]} : vector<8x384xf32> to vector<8x128xf32>
    %426 = arith.addf %425, %0 : vector<8x128xf32>
    %427 = arith.mulf %415, %426 : vector<8x128xf32>
    %428 = arith.addf %424, %427 : vector<8x128xf32>
    %429 = math.tanh %428 : vector<8x128xf32>
    %cst_90 = arith.constant 1.000000e+00 : f32
    %430 = vector.broadcast %cst_90 : f32 to vector<8x128xf32>
    %431 = arith.subf %430, %423 : vector<8x128xf32>
    %432 = arith.mulf %431, %429 : vector<8x128xf32>
    %433 = arith.mulf %423, %369 : vector<8x128xf32>
    %434 = arith.addf %432, %433 : vector<8x128xf32>
    %435 = arith.truncf %434 : vector<8x128xf32> to vector<8x128xbf16>
    %c0_91 = arith.constant 0 : index
    %c0_92 = arith.constant 0 : index
    %436 = vector.load %arg5[%c0_91, %c0_92] : memref<128x384xbf16, #tpu.memory_space<vmem>>, vector<128x384xbf16>
    %cst_93 = arith.constant dense<0.000000e+00> : vector<8x384xf32>
    %437 = tpu.matmul %435, %436, %cst_93 {dimension_numbers = #tpu.dot_dimension_numbers<[1], [0], [0], [1], [0, 0, 1, 1], [], []>} : vector<8x128xbf16>, vector<128x384xbf16>, vector<8x384xf32> -> vector<8x384xf32>
    %438 = arith.addf %437, %1 : vector<8x384xf32>
    %439 = vector.extract_strided_slice %438 {offsets = [0, 0], sizes = [8, 128], strides = [1, 1]} : vector<8x384xf32> to vector<8x128xf32>
    %440 = vector.extract_strided_slice %406 {offsets = [0, 0], sizes = [8, 128], strides = [1, 1]} : vector<8x384xf32> to vector<8x128xf32>
    %441 = arith.addf %439, %440 : vector<8x128xf32>
    %442 = arith.negf %441 : vector<8x128xf32>
    %443 = math.exp %442 : vector<8x128xf32>
    %cst_94 = arith.constant 1.000000e+00 : f32
    %444 = vector.broadcast %cst_94 : f32 to vector<8x128xf32>
    %445 = arith.addf %444, %443 : vector<8x128xf32>
    %446 = arith.divf %444, %445 : vector<8x128xf32>
    %447 = vector.extract_strided_slice %438 {offsets = [0, 128], sizes = [8, 128], strides = [1, 1]} : vector<8x384xf32> to vector<8x128xf32>
    %448 = vector.extract_strided_slice %406 {offsets = [0, 128], sizes = [8, 128], strides = [1, 1]} : vector<8x384xf32> to vector<8x128xf32>
    %449 = arith.addf %447, %448 : vector<8x128xf32>
    %450 = arith.negf %449 : vector<8x128xf32>
    %451 = math.exp %450 : vector<8x128xf32>
    %cst_95 = arith.constant 1.000000e+00 : f32
    %452 = vector.broadcast %cst_95 : f32 to vector<8x128xf32>
    %453 = arith.addf %452, %451 : vector<8x128xf32>
    %454 = arith.divf %452, %453 : vector<8x128xf32>
    %455 = vector.extract_strided_slice %438 {offsets = [0, 256], sizes = [8, 128], strides = [1, 1]} : vector<8x384xf32> to vector<8x128xf32>
    %456 = vector.extract_strided_slice %406 {offsets = [0, 256], sizes = [8, 128], strides = [1, 1]} : vector<8x384xf32> to vector<8x128xf32>
    %457 = arith.addf %456, %2 : vector<8x128xf32>
    %458 = arith.mulf %446, %457 : vector<8x128xf32>
    %459 = arith.addf %455, %458 : vector<8x128xf32>
    %460 = math.tanh %459 : vector<8x128xf32>
    %cst_96 = arith.constant 1.000000e+00 : f32
    %461 = vector.broadcast %cst_96 : f32 to vector<8x128xf32>
    %462 = arith.subf %461, %454 : vector<8x128xf32>
    %463 = arith.mulf %462, %460 : vector<8x128xf32>
    %464 = arith.mulf %454, %400 : vector<8x128xf32>
    %465 = arith.addf %463, %464 : vector<8x128xf32>
    %466 = tpu.concatenate %434, %465 in 1 : vector<8x128xf32>, vector<8x128xf32> -> vector<8x256xf32>
    %467 = arith.truncf %466 : vector<8x256xf32> to vector<8x256xbf16>
    %c0_97 = arith.constant 0 : index
    %c0_98 = arith.constant 0 : index
    %468 = vector.load %arg2[%c0_97, %c0_98] : memref<256x768xbf16, #tpu.memory_space<vmem>>, vector<256x768xbf16>
    %cst_99 = arith.constant dense<0.000000e+00> : vector<8x768xf32>
    %469 = tpu.matmul %467, %468, %cst_99 {dimension_numbers = #tpu.dot_dimension_numbers<[1], [0], [0], [1], [0, 0, 1, 1], [], []>} : vector<8x256xbf16>, vector<256x768xbf16>, vector<8x768xf32> -> vector<8x768xf32>
    %470 = vector.extract_strided_slice %469 {offsets = [0, 0], sizes = [8, 384], strides = [1, 1]} : vector<8x768xf32> to vector<8x384xf32>
    %471 = vector.extract_strided_slice %469 {offsets = [0, 384], sizes = [8, 384], strides = [1, 1]} : vector<8x768xf32> to vector<8x384xf32>
    %472 = vector.extract_strided_slice %8 {offsets = [56, 0], sizes = [8, 384], strides = [1, 1]} : vector<64x384xf32> to vector<8x384xf32>
    %473 = vector.extract_strided_slice %472 {offsets = [0, 0], sizes = [8, 128], strides = [1, 1]} : vector<8x384xf32> to vector<8x128xf32>
    %474 = vector.extract_strided_slice %470 {offsets = [0, 0], sizes = [8, 128], strides = [1, 1]} : vector<8x384xf32> to vector<8x128xf32>
    %475 = arith.addf %473, %474 : vector<8x128xf32>
    %476 = arith.negf %475 : vector<8x128xf32>
    %477 = math.exp %476 : vector<8x128xf32>
    %cst_100 = arith.constant 1.000000e+00 : f32
    %478 = vector.broadcast %cst_100 : f32 to vector<8x128xf32>
    %479 = arith.addf %478, %477 : vector<8x128xf32>
    %480 = arith.divf %478, %479 : vector<8x128xf32>
    %481 = vector.extract_strided_slice %472 {offsets = [0, 128], sizes = [8, 128], strides = [1, 1]} : vector<8x384xf32> to vector<8x128xf32>
    %482 = vector.extract_strided_slice %470 {offsets = [0, 128], sizes = [8, 128], strides = [1, 1]} : vector<8x384xf32> to vector<8x128xf32>
    %483 = arith.addf %481, %482 : vector<8x128xf32>
    %484 = arith.negf %483 : vector<8x128xf32>
    %485 = math.exp %484 : vector<8x128xf32>
    %cst_101 = arith.constant 1.000000e+00 : f32
    %486 = vector.broadcast %cst_101 : f32 to vector<8x128xf32>
    %487 = arith.addf %486, %485 : vector<8x128xf32>
    %488 = arith.divf %486, %487 : vector<8x128xf32>
    %489 = vector.extract_strided_slice %472 {offsets = [0, 256], sizes = [8, 128], strides = [1, 1]} : vector<8x384xf32> to vector<8x128xf32>
    %490 = vector.extract_strided_slice %470 {offsets = [0, 256], sizes = [8, 128], strides = [1, 1]} : vector<8x384xf32> to vector<8x128xf32>
    %491 = arith.addf %490, %0 : vector<8x128xf32>
    %492 = arith.mulf %480, %491 : vector<8x128xf32>
    %493 = arith.addf %489, %492 : vector<8x128xf32>
    %494 = math.tanh %493 : vector<8x128xf32>
    %cst_102 = arith.constant 1.000000e+00 : f32
    %495 = vector.broadcast %cst_102 : f32 to vector<8x128xf32>
    %496 = arith.subf %495, %488 : vector<8x128xf32>
    %497 = arith.mulf %496, %494 : vector<8x128xf32>
    %498 = arith.mulf %488, %434 : vector<8x128xf32>
    %499 = arith.addf %497, %498 : vector<8x128xf32>
    %500 = arith.truncf %499 : vector<8x128xf32> to vector<8x128xbf16>
    %c0_103 = arith.constant 0 : index
    %c0_104 = arith.constant 0 : index
    %501 = vector.load %arg5[%c0_103, %c0_104] : memref<128x384xbf16, #tpu.memory_space<vmem>>, vector<128x384xbf16>
    %cst_105 = arith.constant dense<0.000000e+00> : vector<8x384xf32>
    %502 = tpu.matmul %500, %501, %cst_105 {dimension_numbers = #tpu.dot_dimension_numbers<[1], [0], [0], [1], [0, 0, 1, 1], [], []>} : vector<8x128xbf16>, vector<128x384xbf16>, vector<8x384xf32> -> vector<8x384xf32>
    %503 = arith.addf %502, %1 : vector<8x384xf32>
    %504 = vector.extract_strided_slice %503 {offsets = [0, 0], sizes = [8, 128], strides = [1, 1]} : vector<8x384xf32> to vector<8x128xf32>
    %505 = vector.extract_strided_slice %471 {offsets = [0, 0], sizes = [8, 128], strides = [1, 1]} : vector<8x384xf32> to vector<8x128xf32>
    %506 = arith.addf %504, %505 : vector<8x128xf32>
    %507 = arith.negf %506 : vector<8x128xf32>
    %508 = math.exp %507 : vector<8x128xf32>
    %cst_106 = arith.constant 1.000000e+00 : f32
    %509 = vector.broadcast %cst_106 : f32 to vector<8x128xf32>
    %510 = arith.addf %509, %508 : vector<8x128xf32>
    %511 = arith.divf %509, %510 : vector<8x128xf32>
    %512 = vector.extract_strided_slice %503 {offsets = [0, 128], sizes = [8, 128], strides = [1, 1]} : vector<8x384xf32> to vector<8x128xf32>
    %513 = vector.extract_strided_slice %471 {offsets = [0, 128], sizes = [8, 128], strides = [1, 1]} : vector<8x384xf32> to vector<8x128xf32>
    %514 = arith.addf %512, %513 : vector<8x128xf32>
    %515 = arith.negf %514 : vector<8x128xf32>
    %516 = math.exp %515 : vector<8x128xf32>
    %cst_107 = arith.constant 1.000000e+00 : f32
    %517 = vector.broadcast %cst_107 : f32 to vector<8x128xf32>
    %518 = arith.addf %517, %516 : vector<8x128xf32>
    %519 = arith.divf %517, %518 : vector<8x128xf32>
    %520 = vector.extract_strided_slice %503 {offsets = [0, 256], sizes = [8, 128], strides = [1, 1]} : vector<8x384xf32> to vector<8x128xf32>
    %521 = vector.extract_strided_slice %471 {offsets = [0, 256], sizes = [8, 128], strides = [1, 1]} : vector<8x384xf32> to vector<8x128xf32>
    %522 = arith.addf %521, %2 : vector<8x128xf32>
    %523 = arith.mulf %511, %522 : vector<8x128xf32>
    %524 = arith.addf %520, %523 : vector<8x128xf32>
    %525 = math.tanh %524 : vector<8x128xf32>
    %cst_108 = arith.constant 1.000000e+00 : f32
    %526 = vector.broadcast %cst_108 : f32 to vector<8x128xf32>
    %527 = arith.subf %526, %519 : vector<8x128xf32>
    %528 = arith.mulf %527, %525 : vector<8x128xf32>
    %529 = arith.mulf %519, %465 : vector<8x128xf32>
    %530 = arith.addf %528, %529 : vector<8x128xf32>
    %531 = arith.truncf %530 : vector<8x128xf32> to vector<8x128xbf16>
    %c0_109 = arith.constant 0 : index
    %c0_110 = arith.constant 0 : index
    %532 = vector.load %arg8[%c0_109, %c0_110] : memref<128x128xbf16, #tpu.memory_space<vmem>>, vector<128x128xbf16>
    %cst_111 = arith.constant dense<0.000000e+00> : vector<8x128xf32>
    %533 = tpu.matmul %531, %532, %cst_111 {dimension_numbers = #tpu.dot_dimension_numbers<[1], [0], [0], [1], [0, 0, 1, 1], [], []>} : vector<8x128xbf16>, vector<128x128xbf16>, vector<8x128xf32> -> vector<8x128xf32>
    %c0_112 = arith.constant 0 : index
    %c0_113 = arith.constant 0 : index
    %534 = vector.load %arg9[%c0_112, %c0_113] : memref<8x128xf32, #tpu.memory_space<vmem>>, vector<8x128xf32>
    %535 = arith.addf %533, %534 : vector<8x128xf32>
    %cst_114 = arith.constant 0.000000e+00 : f32
    %536 = vector.broadcast %cst_114 : f32 to vector<8x128xf32>
    %537 = arith.maximumf %535, %536 : vector<8x128xf32>
    %538 = arith.truncf %537 : vector<8x128xf32> to vector<8x128xbf16>
    %c0_115 = arith.constant 0 : index
    %c0_116 = arith.constant 0 : index
    %539 = vector.load %arg10[%c0_115, %c0_116] : memref<128x128xbf16, #tpu.memory_space<vmem>>, vector<128x128xbf16>
    %cst_117 = arith.constant dense<0.000000e+00> : vector<8x128xf32>
    %540 = tpu.matmul %538, %539, %cst_117 {dimension_numbers = #tpu.dot_dimension_numbers<[1], [0], [0], [1], [0, 0, 1, 1], [], []>} : vector<8x128xbf16>, vector<128x128xbf16>, vector<8x128xf32> -> vector<8x128xf32>
    %c0_118 = arith.constant 0 : index
    %c0_119 = arith.constant 0 : index
    %541 = vector.load %arg11[%c0_118, %c0_119] : memref<8x128xf32, #tpu.memory_space<vmem>>, vector<8x128xf32>
    %542 = arith.addf %540, %541 : vector<8x128xf32>
    %c0_120 = arith.constant 0 : index
    %c0_121 = arith.constant 0 : index
    %543 = vector.load %arg12[%c0_120, %c0_121] : memref<8x128xf32, #tpu.memory_space<vmem>>, vector<8x128xf32>
    tpu.vector_store %arg12[%c0_120, %c0_121], %542 {strides = array<i32>} : memref<8x128xf32, #tpu.memory_space<vmem>>, vector<8x128xf32>,
    return
  }
}

</mosaic_0001>

<llo_original>
// kernel: tpu_custom_call.1
$region0: #{tpu_custom_call.1}
  #allocation0 [shape = 'u32[]', space=smem, size = 0x4, offset = 0x4, fixed_abs, tag = 'smem constant byte address 0x4 - core index']
  #allocation1 [shape = 'u32[144,128]{1,0:T(1,128)}', space=vmem, size = 0x12000, scoped, tag = 'internal scratch']
  %s0 = inlined_call_operand.hbm [shape: bf16[64,128], index: 0, kind: input, shape index: {}]
  %s1 = inlined_call_operand.hbm [shape: bf16[128,384], index: 1, kind: input, shape index: {}]
  %s2 = inlined_call_operand.hbm [shape: bf16[256,768], index: 2, kind: input, shape index: {}]
  %s3 = inlined_call_operand.hbm [shape: f32[1,384], index: 3, kind: input, shape index: {}]
  %s4 = inlined_call_operand.vmem [shape: f32[8,128], index: 4, kind: input, shape index: {}]
  %s5 = inlined_call_operand.hbm [shape: bf16[128,384], index: 5, kind: input, shape index: {}]
  %s6 = inlined_call_operand.hbm [shape: f32[8,384], index: 6, kind: input, shape index: {}]
  %s7 = inlined_call_operand.vmem [shape: f32[8,128], index: 7, kind: input, shape index: {}]
  %s8 = inlined_call_operand.hbm [shape: bf16[128,128], index: 8, kind: input, shape index: {}]
  %s9 = inlined_call_operand.vmem [shape: f32[8,128], index: 9, kind: input, shape index: {}]
  %s10 = inlined_call_operand.hbm [shape: bf16[128,128], index: 10, kind: input, shape index: {}]
  %s11 = inlined_call_operand.vmem [shape: f32[8,128], index: 11, kind: input, shape index: {}]
  %s12 = inlined_call_operand.hbm [shape: f32[8,128], index: 12, kind: output, shape index: {}]
  %s13 = sld [smem:[#allocation0]]
  $region90: #{tpu_custom_call.1} parent=0
    _
  %s15 = ssub.s32 1, %s13
  %s16 = scalar_select 0, %s15, %s13
  $region1: #{tpu_custom_call.1} parent=0
    #allocation2 [shape = 'u8[16384]{0}', space=vmem, size = 0x4000, scoped, tag = 'input window, operand 0, single buffered']
    #allocation3 [shape = 's32[1]{0}', space=sflag, size = 0x4, scoped, tag = 'scoped memory for tpu_custom_call.1']
    #allocation4 [shape = 's32[1]{0}', space=sflag, size = 0x4, scoped, tag = 'scoped memory for tpu_custom_call.1']
    #allocation5 [shape = 'u8[98304]{0}', space=vmem, size = 0x18000, scoped, tag = 'input window, operand 1, single buffered']
    #allocation6 [shape = 's32[1]{0}', space=sflag, size = 0x4, scoped, tag = 'scoped memory for tpu_custom_call.1']
    #allocation7 [shape = 'u8[393216]{0}', space=vmem, size = 0x60000, scoped, tag = 'input window, operand 2, single buffered']
    #allocation8 [shape = 'u8[1536]{0}', space=vmem, size = 0x800, scoped, tag = 'input window, operand 3, single buffered']
    #allocation9 [shape = 's32[1]{0}', space=sflag, size = 0x4, scoped, tag = 'scoped memory for tpu_custom_call.1']
    #allocation10 [shape = 'u8[98304]{0}', space=vmem, size = 0x18000, scoped, tag = 'input window, operand 5, single buffered']
    #allocation11 [shape = 'u8[12288]{0}', space=vmem, size = 0x3000, scoped, tag = 'input window, operand 6, single buffered']
    #allocation12 [shape = 's32[1]{0}', space=sflag, size = 0x4, scoped, tag = 'scoped memory for tpu_custom_call.1']
    #allocation13 [shape = 'u8[32768]{0}', space=vmem, size = 0x8000, scoped, tag = 'input window, operand 8, single buffered']
    #allocation14 [shape = 'u8[32768]{0}', space=vmem, size = 0x8000, scoped, tag = 'input window, operand 10, single buffered']
    #allocation15 [shape = 's32[1]{0}', space=sflag, size = 0x4, scoped, tag = 'scoped memory for tpu_custom_call.1']
    #allocation16 [shape = 'u8[4096]{0}', space=vmem, size = 0x1000, scoped, tag = 'output window, operand 0, single buffered']
    %17 = vsyncpa [#allocation3], 0
    %18 = vsyncpa [#allocation6], 0
    %19 = vsyncpa [#allocation9], 0
    %20 = vsyncpa [#allocation12], 0
    %21 = vsyncpa [#allocation15], 0
    %22 = vsyncpa [#allocation4], 0
    // Predicated region
    $region2: #{tpu_custom_call.1} parent=1 // pred_check
      _
    $region3: #{tpu_custom_call.1} parent=1 // pred_check_branch
      %24 = sbr.rel (0) target = $region5
    $region4: #{tpu_custom_call.1} parent=1 // pred_region
      %s26 = ssub.s32 512, 512
      %27 = vsyncadd [#allocation3], %s26
      %s28 = sshll.u32 [#allocation2], 4
      %s29 = int_to_ptr.vmem [resolvable:$true] %s28
      %34 = dma.hbm_to_vmem [thread:$0]  %s0, 512, %s29, [#allocation3], 64, 64, 4
    $region5: #{tpu_custom_call.1} parent=1 // pred_fallthru
      _
    // Predicated region
    $region6: #{tpu_custom_call.1} parent=1 // pred_check
      _
    $region7: #{tpu_custom_call.1} parent=1 // pred_check_branch
      %36 = sbr.rel (0) target = $region9
    $region8: #{tpu_custom_call.1} parent=1 // pred_region
      %s38 = ssub.s32 3072, 3072
      %39 = vsyncadd [#allocation6], %s38
      %s40 = sshll.u32 [#allocation5], 4
      %s41 = int_to_ptr.vmem [resolvable:$true] %s40
      %46 = dma.hbm_to_vmem [thread:$0]  %s1, 3072, %s41, [#allocation6], 192, 192, 12
    $region9: #{tpu_custom_call.1} parent=1 // pred_fallthru
      _
    // Predicated region
    $region10: #{tpu_custom_call.1} parent=1 // pred_check
      _
    $region11: #{tpu_custom_call.1} parent=1 // pred_check_branch
      %48 = sbr.rel (0) target = $region13
    $region12: #{tpu_custom_call.1} parent=1 // pred_region
      %s50 = ssub.s32 12288, 12288
      %51 = vsyncadd [#allocation6], %s50
      %s52 = sshll.u32 [#allocation7], 4
      %s53 = int_to_ptr.vmem [resolvable:$true] %s52
      %58 = dma.hbm_to_vmem [thread:$0]  %s2, 12288, %s53, [#allocation6], 384, 384, 24
    $region13: #{tpu_custom_call.1} parent=1 // pred_fallthru
      _
    // Predicated region
    $region14: #{tpu_custom_call.1} parent=1 // pred_check
      _
    $region15: #{tpu_custom_call.1} parent=1 // pred_check_branch
      %60 = sbr.rel (0) target = $region17
    $region16: #{tpu_custom_call.1} parent=1 // pred_region
      %s62 = ssub.s32 48, 48
      %63 = vsyncadd [#allocation9], %s62
      %s65 = sshll.u32 [#allocation8], 4
      %s66 = int_to_ptr.vmem [resolvable:$true] %s65
      %68 = dma.hbm_to_vmem [thread:$0]  %s3, 48, %s66, [#allocation9]
    $region17: #{tpu_custom_call.1} parent=1 // pred_fallthru
      _
    // Predicated region
    $region18: #{tpu_custom_call.1} parent=1 // pred_check
      _
    $region19: #{tpu_custom_call.1} parent=1 // pred_check_branch
      %70 = sbr.rel (0) target = $region21
    $region20: #{tpu_custom_call.1} parent=1 // pred_region
      _
    $region21: #{tpu_custom_call.1} parent=1 // pred_fallthru
      _
    // Predicated region
    $region22: #{tpu_custom_call.1} parent=1 // pred_check
      _
    $region23: #{tpu_custom_call.1} parent=1 // pred_check_branch
      %72 = sbr.rel (0) target = $region25
    $region24: #{tpu_custom_call.1} parent=1 // pred_region
      %s74 = ssub.s32 3072, 3072
      %75 = vsyncadd [#allocation9], %s74
      %s76 = sshll.u32 [#allocation10], 4
      %s77 = int_to_ptr.vmem [resolvable:$true] %s76
      %82 = dma.hbm_to_vmem [thread:$0]  %s5, 3072, %s77, [#allocation9], 192, 192, 12
    $region25: #{tpu_custom_call.1} parent=1 // pred_fallthru
      _
    // Predicated region
    $region26: #{tpu_custom_call.1} parent=1 // pred_check
      _
    $region27: #{tpu_custom_call.1} parent=1 // pred_check_branch
      %84 = sbr.rel (0) target = $region29
    $region28: #{tpu_custom_call.1} parent=1 // pred_region
      %s86 = ssub.s32 384, 384
      %87 = vsyncadd [#allocation12], %s86
      %s89 = sshll.u32 [#allocation11], 4
      %s90 = int_to_ptr.vmem [resolvable:$true] %s89
      %92 = dma.hbm_to_vmem [thread:$0]  %s6, 384, %s90, [#allocation12]
    $region29: #{tpu_custom_call.1} parent=1 // pred_fallthru
      _
    // Predicated region
    $region30: #{tpu_custom_call.1} parent=1 // pred_check
      _
    $region31: #{tpu_custom_call.1} parent=1 // pred_check_branch
      %94 = sbr.rel (0) target = $region33
    $region32: #{tpu_custom_call.1} parent=1 // pred_region
      _
    $region33: #{tpu_custom_call.1} parent=1 // pred_fallthru
      _
    // Predicated region
    $region34: #{tpu_custom_call.1} parent=1 // pred_check
      _
    $region35: #{tpu_custom_call.1} parent=1 // pred_check_branch
      %96 = sbr.rel (0) target = $region37
    $region36: #{tpu_custom_call.1} parent=1 // pred_region
      %s98 = ssub.s32 1024, 1024
      %99 = vsyncadd [#allocation12], %s98
      %s100 = sshll.u32 [#allocation13], 4
      %s101 = int_to_ptr.vmem [resolvable:$true] %s100
      %106 = dma.hbm_to_vmem [thread:$0]  %s8, 1024, %s101, [#allocation12], 64, 64, 4
    $region37: #{tpu_custom_call.1} parent=1 // pred_fallthru
      _
    // Predicated region
    $region38: #{tpu_custom_call.1} parent=1 // pred_check
      _
    $region39: #{tpu_custom_call.1} parent=1 // pred_check_branch
      %108 = sbr.rel (0) target = $region41
    $region40: #{tpu_custom_call.1} parent=1 // pred_region
      _
    $region41: #{tpu_custom_call.1} parent=1 // pred_fallthru
      _
    // Predicated region
    $region42: #{tpu_custom_call.1} parent=1 // pred_check
      _
    $region43: #{tpu_custom_call.1} parent=1 // pred_check_branch
      %110 = sbr.rel (0) target = $region45
    $region44: #{tpu_custom_call.1} parent=1 // pred_region
      %s112 = ssub.s32 1024, 1024
      %113 = vsyncadd [#allocation15], %s112
      %s114 = sshll.u32 [#allocation14], 4
      %s115 = int_to_ptr.vmem [resolvable:$true] %s114
      %120 = dma.hbm_to_vmem [thread:$0]  %s10, 1024, %s115, [#allocation15], 64, 64, 4
    $region45: #{tpu_custom_call.1} parent=1 // pred_fallthru
      _
    // Predicated region
    $region46: #{tpu_custom_call.1} parent=1 // pred_check
      _
    $region47: #{tpu_custom_call.1} parent=1 // pred_check_branch
      %122 = sbr.rel (0) target = $region49
    $region48: #{tpu_custom_call.1} parent=1 // pred_region
      _
    $region49: #{tpu_custom_call.1} parent=1 // pred_fallthru
      _
    // Predicated region
    $region50: #{tpu_custom_call.1} parent=1 // pred_check
      _
    $region51: #{tpu_custom_call.1} parent=1 // pred_check_branch
      %124 = sbr.rel (0) target = $region53
    $region52: #{tpu_custom_call.1} parent=1 // pred_region
      %125 = dma.done [#allocation3], 512
    $region53: #{tpu_custom_call.1} parent=1 // pred_fallthru
      _
    // Predicated region
    $region54: #{tpu_custom_call.1} parent=1 // pred_check
      _
    $region55: #{tpu_custom_call.1} parent=1 // pred_check_branch
      %127 = sbr.rel (0) target = $region57
    $region56: #{tpu_custom_call.1} parent=1 // pred_region
      %128 = dma.done [#allocation6], 3072
    $region57: #{tpu_custom_call.1} parent=1 // pred_fallthru
      _
    // Predicated region
    $region58: #{tpu_custom_call.1} parent=1 // pred_check
      _
    $region59: #{tpu_custom_call.1} parent=1 // pred_check_branch
      %130 = sbr.rel (0) target = $region61
    $region60: #{tpu_custom_call.1} parent=1 // pred_region
      %131 = dma.done [#allocation6], 12288
    $region61: #{tpu_custom_call.1} parent=1 // pred_fallthru
      _
    // Predicated region
    $region62: #{tpu_custom_call.1} parent=1 // pred_check
      _
    $region63: #{tpu_custom_call.1} parent=1 // pred_check_branch
      %133 = sbr.rel (0) target = $region65
    $region64: #{tpu_custom_call.1} parent=1 // pred_region
      %134 = dma.done [#allocation9], 48
    $region65: #{tpu_custom_call.1} parent=1 // pred_fallthru
      _
    // Predicated region
    $region66: #{tpu_custom_call.1} parent=1 // pred_check
      _
    $region67: #{tpu_custom_call.1} parent=1 // pred_check_branch
      %136 = sbr.rel (0) target = $region69
    $region68: #{tpu_custom_call.1} parent=1 // pred_region
      %137 = dma.done [#allocation9], 3072
    $region69: #{tpu_custom_call.1} parent=1 // pred_fallthru
      _
    // Predicated region
    $region70: #{tpu_custom_call.1} parent=1 // pred_check
      _
    $region71: #{tpu_custom_call.1} parent=1 // pred_check_branch
      %139 = sbr.rel (0) target = $region73
    $region72: #{tpu_custom_call.1} parent=1 // pred_region
      %140 = dma.done [#allocation12], 384
    $region73: #{tpu_custom_call.1} parent=1 // pred_fallthru
      _
    // Predicated region
    $region74: #{tpu_custom_call.1} parent=1 // pred_check
      _
    $region75: #{tpu_custom_call.1} parent=1 // pred_check_branch
      %142 = sbr.rel (0) target = $region77
    $region76: #{tpu_custom_call.1} parent=1 // pred_region
      %143 = dma.done [#allocation12], 1024
    $region77: #{tpu_custom_call.1} parent=1 // pred_fallthru
      _
    // Predicated region
    $region78: #{tpu_custom_call.1} parent=1 // pred_check
      _
    $region79: #{tpu_custom_call.1} parent=1 // pred_check_branch
      %145 = sbr.rel (0) target = $region81
    $region80: #{tpu_custom_call.1} parent=1 // pred_region
      %146 = dma.done [#allocation15], 1024
    $region81: #{tpu_custom_call.1} parent=1 // pred_fallthru
      _
    %v148 = vld [vmem:[%s4] sm:$0xff]
    %v149 = vld [vmem:[#allocation11] sm:$0xff]
    %v150 = vld [vmem:[#allocation11 + $0x8] sm:$0xff]
    %v151 = vld [vmem:[#allocation11 + $0x10] sm:$0xff]
    %v152 = vld [vmem:[%s7] sm:$0xff]
    %v153 = vld [vmem:[#allocation2] sm:$0xf]
    %v154 = vld [vmem:[#allocation2 + $0x4] sm:$0xf]
    %v155 = vld [vmem:[#allocation2 + $0x8] sm:$0xf]
    %v156 = vld [vmem:[#allocation2 + $0xc] sm:$0xf]
    %v157 = vld [vmem:[#allocation2 + $0x10] sm:$0xf]
    %v158 = vld [vmem:[#allocation2 + $0x14] sm:$0xf]
    %v159 = vld [vmem:[#allocation2 + $0x18] sm:$0xf]
    %v160 = vld [vmem:[#allocation2 + $0x1c] sm:$0xf]
    %v161 = vld [vmem:[#allocation5] sm:$0xff]
    %v162 = vld [vmem:[#allocation5 + $0x8] sm:$0xf]
    %v163 = vld [vmem:[#allocation5 + $0xc] sm:$0xff]
    %v164 = vld [vmem:[#allocation5 + $0x14] sm:$0xf]
    %v165 = vld [vmem:[#allocation5 + $0x18] sm:$0xff]
    %v166 = vld [vmem:[#allocation5 + $0x20] sm:$0xf]
    %v167 = vld [vmem:[#allocation5 + $0x24] sm:$0xff]
    %v168 = vld [vmem:[#allocation5 + $0x2c] sm:$0xf]
    %v169 = vld [vmem:[#allocation5 + $0x30] sm:$0xff]
    %v170 = vld [vmem:[#allocation5 + $0x38] sm:$0xf]
    %v171 = vld [vmem:[#allocation5 + $0x3c] sm:$0xff]
    %v172 = vld [vmem:[#allocation5 + $0x44] sm:$0xf]
    %v173 = vld [vmem:[#allocation5 + $0x48] sm:$0xff]
    %v174 = vld [vmem:[#allocation5 + $0x50] sm:$0xf]
    %v175 = vld [vmem:[#allocation5 + $0x54] sm:$0xff]
    %v176 = vld [vmem:[#allocation5 + $0x5c] sm:$0xf]
    %v177 = vld [vmem:[#allocation5 + $0x60] sm:$0xff]
    %v178 = vld [vmem:[#allocation5 + $0x68] sm:$0xf]
    %v179 = vld [vmem:[#allocation5 + $0x6c] sm:$0xff]
    %v180 = vld [vmem:[#allocation5 + $0x74] sm:$0xf]
    %v181 = vld [vmem:[#allocation5 + $0x78] sm:$0xff]
    %v182 = vld [vmem:[#allocation5 + $0x80] sm:$0xf]
    %v183 = vld [vmem:[#allocation5 + $0x84] sm:$0xff]
    %v184 = vld [vmem:[#allocation5 + $0x8c] sm:$0xf]
    %v185 = vld [vmem:[#allocation5 + $0x90] sm:$0xff]
    %v186 = vld [vmem:[#allocation5 + $0x98] sm:$0xf]
    %v187 = vld [vmem:[#allocation5 + $0x9c] sm:$0xff]
    %v188 = vld [vmem:[#allocation5 + $0xa4] sm:$0xf]
    %v189 = vld [vmem:[#allocation5 + $0xa8] sm:$0xff]
    %v190 = vld [vmem:[#allocation5 + $0xb0] sm:$0xf]
    %v191 = vld [vmem:[#allocation5 + $0xb4] sm:$0xff]
    %v192 = vld [vmem:[#allocation5 + $0xbc] sm:$0xf]
    %v193 = vld [vmem:[#allocation8] sm:$0x7]
    %v195 = vlaneseq
    %v196 = vshrl.u32 %v195, 7
    %v197 = vsub.s32 0, %v196
    %v198 = vrot.slane %v193, %v197
    %v199 = vlaneseq
    %v200 = vshrl.u32 %v199, 7
    %v201 = vsub.s32 1, %v200
    %v202 = vrot.slane %v193, %v201
    %v203 = vlaneseq
    %v204 = vshrl.u32 %v203, 7
    %v205 = vsub.s32 2, %v204
    %v206 = vrot.slane %v193, %v205
    %v218 = vunpack.c.l.b16 %v153
    %v219 = vunpack.c.l.b16 %v154
    %v220 = vunpack.c.l.b16 %v155
    %v221 = vunpack.c.l.b16 %v156
    %v222 = vunpack.c.l.b16 %v157
    %v223 = vunpack.c.l.b16 %v158
    %v224 = vunpack.c.l.b16 %v159
    %v225 = vunpack.c.l.b16 %v160
    %v226 = vpack.c.b16 %v219, %v218
    %v227 = vpack.c.b16 %v221, %v220
    %v228 = vpack.c.b16 %v223, %v222
    %v229 = vpack.c.b16 %v225, %v224
    %v266 = vunpack.c.l.b16 %v161
    %v267 = vunpack.c.h.b16 %v161
    %v268 = vunpack.c.l.b16 %v162
    %v269 = vunpack.c.l.b16 %v163
    %v270 = vunpack.c.h.b16 %v163
    %v271 = vunpack.c.l.b16 %v164
    %v272 = vunpack.c.l.b16 %v165
    %v273 = vunpack.c.h.b16 %v165
    %v274 = vunpack.c.l.b16 %v166
    %v275 = vunpack.c.l.b16 %v167
    %v276 = vunpack.c.h.b16 %v167
    %v277 = vunpack.c.l.b16 %v168
    %v278 = vunpack.c.l.b16 %v169
    %v279 = vunpack.c.h.b16 %v169
    %v280 = vunpack.c.l.b16 %v170
    %v281 = vunpack.c.l.b16 %v171
    %v282 = vunpack.c.h.b16 %v171
    %v283 = vunpack.c.l.b16 %v172
    %v284 = vunpack.c.l.b16 %v173
    %v285 = vunpack.c.h.b16 %v173
    %v286 = vunpack.c.l.b16 %v174
    %v287 = vunpack.c.l.b16 %v175
    %v288 = vunpack.c.h.b16 %v175
    %v289 = vunpack.c.l.b16 %v176
    %v290 = vunpack.c.l.b16 %v177
    %v291 = vunpack.c.h.b16 %v177
    %v292 = vunpack.c.l.b16 %v178
    %v293 = vunpack.c.l.b16 %v179
    %v294 = vunpack.c.h.b16 %v179
    %v295 = vunpack.c.l.b16 %v180
    %v296 = vunpack.c.l.b16 %v181
    %v297 = vunpack.c.h.b16 %v181
    %v298 = vunpack.c.l.b16 %v182
    %v299 = vunpack.c.l.b16 %v183
    %v300 = vunpack.c.h.b16 %v183
    %v301 = vunpack.c.l.b16 %v184
    %v302 = vunpack.c.l.b16 %v185
    %v303 = vunpack.c.h.b16 %v185
    %v304 = vunpack.c.l.b16 %v186
    %v305 = vunpack.c.l.b16 %v187
    %v306 = vunpack.c.h.b16 %v187
    %v307 = vunpack.c.l.b16 %v188
    %v308 = vunpack.c.l.b16 %v189
    %v309 = vunpack.c.h.b16 %v189
    %v310 = vunpack.c.l.b16 %v190
    %v311 = vunpack.c.l.b16 %v191
    %v312 = vunpack.c.h.b16 %v191
    %v313 = vunpack.c.l.b16 %v192
    %v314 = vpack.c.b16 %v269, %v266
    %v315 = vpack.c.b16 %v270, %v267
    %v316 = vpack.c.b16 %v271, %v268
    %v317 = vpack.c.b16 %v275, %v272
    %v318 = vpack.c.b16 %v276, %v273
    %v319 = vpack.c.b16 %v277, %v274
    %v320 = vpack.c.b16 %v281, %v278
    %v321 = vpack.c.b16 %v282, %v279
    %v322 = vpack.c.b16 %v283, %v280
    %v323 = vpack.c.b16 %v287, %v284
    %v324 = vpack.c.b16 %v288, %v285
    %v325 = vpack.c.b16 %v289, %v286
    %v326 = vpack.c.b16 %v293, %v290
    %v327 = vpack.c.b16 %v294, %v291
    %v328 = vpack.c.b16 %v295, %v292
    %v329 = vpack.c.b16 %v299, %v296
    %v330 = vpack.c.b16 %v300, %v297
    %v331 = vpack.c.b16 %v301, %v298
    %v332 = vpack.c.b16 %v305, %v302
    %v333 = vpack.c.b16 %v306, %v303
    %v334 = vpack.c.b16 %v307, %v304
    %v335 = vpack.c.b16 %v311, %v308
    %v336 = vpack.c.b16 %v312, %v309
    %v337 = vpack.c.b16 %v313, %v310
    %362 = vmatprep.subr.bf16.mxu0 %v315
    %363 = vmatpush1.bf16.msra.mxu0 %v314
    %364 = vmatprep.subr.bf16.mxu0 %v318
    %365 = vmatpush1.bf16.msra.mxu0 %v317
    %366 = vmatprep.subr.bf16.mxu0 %v321
    %367 = vmatpush1.bf16.msra.mxu0 %v320
    %368 = vmatprep.subr.bf16.mxu0 %v324
    %369 = vmatpush1.bf16.msra.mxu0 %v323
    %370 = vmatprep.subr.bf16.mxu0 %v327
    %371 = vmatpush1.bf16.msra.mxu0 %v326
    %372 = vmatprep.subr.bf16.mxu0 %v330
    %373 = vmatpush1.bf16.msra.mxu0 %v329
    %374 = vmatprep.subr.bf16.mxu0 %v333
    %375 = vmatpush1.bf16.msra.mxu0 %v332
    %376 = vmatprep.subr.bf16.mxu0 %v336
    %377 = vmatpush1.bf16.msra.mxu0 %v335
    %378 = vmatprep.subr.bf16.mxu0 0
    %379 = vmatpush1.bf16.msra.mxu0 0
    %380 = vmatprep.subr.bf16.mxu0 0
    %381 = vmatpush1.bf16.msra.mxu0 0
    %382 = vmatprep.subr.bf16.mxu0 0
    %383 = vmatpush1.bf16.msra.mxu0 0
    %384 = vmatprep.subr.bf16.mxu0 0
    %385 = vmatpush1.bf16.msra.mxu0 0
    %386 = vmatprep.subr.bf16.mxu0 0
    %387 = vmatpush1.bf16.msra.mxu0 0
    %388 = vmatprep.subr.bf16.mxu0 0
    %389 = vmatpush1.bf16.msra.mxu0 0
    %390 = vmatprep.subr.bf16.mxu0 0
    %391 = vmatpush1.bf16.msra.mxu0 0
    %392 = vmatprep.subr.bf16.mxu0 0
    %393 = vmatpush1.bf16.msra.mxu0 0
    %394 = vmatprep.mubr.bf16.mxu0 0
    %395 = vmatmul.mubr.bf16.gmra.mrb[0].mxu0 %v226
    %v396 = vpop.f32.mrb[0].mxu0
    %v397 = vadd.f32 %v198, %v396
    %v398 = vpop.f32.mrb[0].mxu0
    %v399 = vadd.f32 %v202, %v398
    %v400 = vpop.f32.mrb[0].mxu0
    %v401 = vadd.f32 %v198, %v400
    %v402 = vpop.f32.mrb[0].mxu0
    %v403 = vadd.f32 %v202, %v402
    %404 = vmatprep.mubr.bf16.mxu0 0
    %405 = vmatmul.mubr.bf16.gmra.mrb[0].mxu0 %v227
    %v406 = vpop.f32.mrb[0].mxu0
    %v407 = vadd.f32 %v198, %v406
    %v408 = vpop.f32.mrb[0].mxu0
    %v409 = vadd.f32 %v202, %v408
    %v410 = vpop.f32.mrb[0].mxu0
    %v411 = vadd.f32 %v198, %v410
    %v412 = vpop.f32.mrb[0].mxu0
    %v413 = vadd.f32 %v202, %v412
    %414 = vmatprep.mubr.bf16.mxu0 0
    %415 = vmatmul.mubr.bf16.gmra.mrb[0].mxu0 %v228
    %v416 = vpop.f32.mrb[0].mxu0
    %v417 = vadd.f32 %v198, %v416
    %v418 = vpop.f32.mrb[0].mxu0
    %v419 = vadd.f32 %v202, %v418
    %v420 = vpop.f32.mrb[0].mxu0
    %v421 = vadd.f32 %v198, %v420
    %v422 = vpop.f32.mrb[0].mxu0
    %v423 = vadd.f32 %v202, %v422
    %424 = vmatprep.mubr.bf16.mxu0 0
    %425 = vmatmul.mubr.bf16.gmra.mrb[0].mxu0 %v229
    %v426 = vpop.f32.mrb[0].mxu0
    %v427 = vadd.f32 %v198, %v426
    %v428 = vpop.f32.mrb[0].mxu0
    %v429 = vadd.f32 %v202, %v428
    %v430 = vpop.f32.mrb[0].mxu0
    %v431 = vadd.f32 %v198, %v430
    %v432 = vpop.f32.mrb[0].mxu0
    %v433 = vadd.f32 %v202, %v432
    %434 = vdwg.mxu0
    %435 = vmatprep.subr.bf16.mxu0 0
    %436 = vmatpush1.bf16.msra.mxu0 %v316
    %437 = vmatprep.subr.bf16.mxu0 0
    %438 = vmatpush1.bf16.msra.mxu0 %v319
    %439 = vmatprep.subr.bf16.mxu0 0
    %440 = vmatpush1.bf16.msra.mxu0 %v322
    %441 = vmatprep.subr.bf16.mxu0 0
    %442 = vmatpush1.bf16.msra.mxu0 %v325
    %443 = vmatprep.subr.bf16.mxu0 0
    %444 = vmatpush1.bf16.msra.mxu0 %v328
    %445 = vmatprep.subr.bf16.mxu0 0
    %446 = vmatpush1.bf16.msra.mxu0 %v331
    %447 = vmatprep.subr.bf16.mxu0 0
    %448 = vmatpush1.bf16.msra.mxu0 %v334
    %449 = vmatprep.subr.bf16.mxu0 0
    %450 = vmatpush1.bf16.msra.mxu0 %v337
    %451 = vmatprep.subr.bf16.mxu0 0
    %452 = vmatpush1.bf16.msra.mxu0 0
    %453 = vmatprep.subr.bf16.mxu0 0
    %454 = vmatpush1.bf16.msra.mxu0 0
    %455 = vmatprep.subr.bf16.mxu0 0
    %456 = vmatpush1.bf16.msra.mxu0 0
    %457 = vmatprep.subr.bf16.mxu0 0
    %458 = vmatpush1.bf16.msra.mxu0 0
    %459 = vmatprep.subr.bf16.mxu0 0
    %460 = vmatpush1.bf16.msra.mxu0 0
    %461 = vmatprep.subr.bf16.mxu0 0
    %462 = vmatpush1.bf16.msra.mxu0 0
    %463 = vmatprep.subr.bf16.mxu0 0
    %464 = vmatpush1.bf16.msra.mxu0 0
    %465 = vmatprep.subr.bf16.mxu0 0
    %466 = vmatpush1.bf16.msra.mxu0 0
    %467 = vmatprep.mubr.bf16.mxu0 0
    %468 = vmatmul.mubr.bf16.gmra.mrb[0].mxu0 %v226
    %v469 = vpop.f32.mrb[0].mxu0
    %v470 = vadd.f32 %v206, %v469
    %v471 = vpop.f32.mrb[0].mxu0
    %v472 = vpop.f32.mrb[0].mxu0
    %v473 = vadd.f32 %v206, %v472
    %v474 = vpop.f32.mrb[0].mxu0
    %475 = vmatprep.mubr.bf16.mxu0 0
    %476 = vmatmul.mubr.bf16.gmra.mrb[0].mxu0 %v227
    %v477 = vpop.f32.mrb[0].mxu0
    %v478 = vadd.f32 %v206, %v477
    %v479 = vpop.f32.mrb[0].mxu0
    %v480 = vpop.f32.mrb[0].mxu0
    %v481 = vadd.f32 %v206, %v480
    %v482 = vpop.f32.mrb[0].mxu0
    %483 = vmatprep.mubr.bf16.mxu0 0
    %484 = vmatmul.mubr.bf16.gmra.mrb[0].mxu0 %v228
    %v485 = vpop.f32.mrb[0].mxu0
    %v486 = vadd.f32 %v206, %v485
    %v487 = vpop.f32.mrb[0].mxu0
    %v488 = vpop.f32.mrb[0].mxu0
    %v489 = vadd.f32 %v206, %v488
    %v490 = vpop.f32.mrb[0].mxu0
    %491 = vmatprep.mubr.bf16.mxu0 0
    %492 = vmatmul.mubr.bf16.gmra.mrb[0].mxu0 %v229
    %v493 = vpop.f32.mrb[0].mxu0
    %v494 = vadd.f32 %v206, %v493
    %v495 = vpop.f32.mrb[0].mxu0
    %v496 = vpop.f32.mrb[0].mxu0
    %v497 = vadd.f32 %v206, %v496
    %v498 = vpop.f32.mrb[0].mxu0
    %499 = vdwg.mxu0
    %v500 = vpack.c.bf16 0.0, 0.0
    %v501 = vld [vmem:[#allocation7] sm:$0xff]
    %v502 = vld [vmem:[#allocation7 + $0x8] sm:$0xff]
    %v503 = vld [vmem:[#allocation7 + $0x10] sm:$0xff]
    %v504 = vld [vmem:[#allocation7 + $0x18] sm:$0xff]
    %v505 = vld [vmem:[#allocation7 + $0x20] sm:$0xff]
    %v506 = vld [vmem:[#allocation7 + $0x28] sm:$0xff]
    %v507 = vld [vmem:[#allocation7 + $0x30] sm:$0xff]
    %v508 = vld [vmem:[#allocation7 + $0x38] sm:$0xff]
    %v509 = vld [vmem:[#allocation7 + $0x40] sm:$0xff]
    %v510 = vld [vmem:[#allocation7 + $0x48] sm:$0xff]
    %v511 = vld [vmem:[#allocation7 + $0x50] sm:$0xff]
    %v512 = vld [vmem:[#allocation7 + $0x58] sm:$0xff]
    %v513 = vld [vmem:[#allocation7 + $0x60] sm:$0xff]
    %v514 = vld [vmem:[#allocation7 + $0x68] sm:$0xff]
    %v515 = vld [vmem:[#allocation7 + $0x70] sm:$0xff]
    %v516 = vld [vmem:[#allocation7 + $0x78] sm:$0xff]
    %v517 = vld [vmem:[#allocation7 + $0x80] sm:$0xff]
    %v518 = vld [vmem:[#allocation7 + $0x88] sm:$0xff]
    %v519 = vld [vmem:[#allocation7 + $0x90] sm:$0xff]
    %v520 = vld [vmem:[#allocation7 + $0x98] sm:$0xff]
    %v521 = vld [vmem:[#allocation7 + $0xa0] sm:$0xff]
    %v522 = vld [vmem:[#allocation7 + $0xa8] sm:$0xff]
    %v523 = vld [vmem:[#allocation7 + $0xb0] sm:$0xff]
    %v524 = vld [vmem:[#allocation7 + $0xb8] sm:$0xff]
    %v525 = vld [vmem:[#allocation7 + $0xc0] sm:$0xff]
    %v526 = vld [vmem:[#allocation7 + $0xc8] sm:$0xff]
    %v527 = vld [vmem:[#allocation7 + $0xd0] sm:$0xff]
    %v528 = vld [vmem:[#allocation7 + $0xd8] sm:$0xff]
    %v529 = vld [vmem:[#allocation7 + $0xe0] sm:$0xff]
    %v530 = vld [vmem:[#allocation7 + $0xe8] sm:$0xff]
    %v531 = vld [vmem:[#allocation7 + $0xf0] sm:$0xff]
    %v532 = vld [vmem:[#allocation7 + $0xf8] sm:$0xff]
    %v533 = vld [vmem:[#allocation7 + $0x100] sm:$0xff]
    %v534 = vld [vmem:[#allocation7 + $0x108] sm:$0xff]
    %v535 = vld [vmem:[#allocation7 + $0x110] sm:$0xff]
    %v536 = vld [vmem:[#allocation7 + $0x118] sm:$0xff]
    %v537 = vld [vmem:[#allocation7 + $0x120] sm:$0xff]
    %v538 = vld [vmem:[#allocation7 + $0x128] sm:$0xff]
    %v539 = vld [vmem:[#allocation7 + $0x130] sm:$0xff]
    %v540 = vld [vmem:[#allocation7 + $0x138] sm:$0xff]
    %v541 = vld [vmem:[#allocation7 + $0x140] sm:$0xff]
    %v542 = vld [vmem:[#allocation7 + $0x148] sm:$0xff]
    %v543 = vld [vmem:[#allocation7 + $0x150] sm:$0xff]
    %v544 = vld [vmem:[#allocation7 + $0x158] sm:$0xff]
    %v545 = vld [vmem:[#allocation7 + $0x160] sm:$0xff]
    %v546 = vld [vmem:[#allocation7 + $0x168] sm:$0xff]
    %v547 = vld [vmem:[#allocation7 + $0x170] sm:$0xff]
    %v548 = vld [vmem:[#allocation7 + $0x178] sm:$0xff]
    %v549 = vld [vmem:[#allocation7 + $0x180] sm:$0xff]
    %v550 = vld [vmem:[#allocation7 + $0x188] sm:$0xff]
    %v551 = vld [vmem:[#allocation7 + $0x190] sm:$0xff]
    %v552 = vld [vmem:[#allocation7 + $0x198] sm:$0xff]
    %v553 = vld [vmem:[#allocation7 + $0x1a0] sm:$0xff]
    %v554 = vld [vmem:[#allocation7 + $0x1a8] sm:$0xff]
    %v555 = vld [vmem:[#allocation7 + $0x1b0] sm:$0xff]
    %v556 = vld [vmem:[#allocation7 + $0x1b8] sm:$0xff]
    %v557 = vld [vmem:[#allocation7 + $0x1c0] sm:$0xff]
    %v558 = vld [vmem:[#allocation7 + $0x1c8] sm:$0xff]
    %v559 = vld [vmem:[#allocation7 + $0x1d0] sm:$0xff]
    %v560 = vld [vmem:[#allocation7 + $0x1d8] sm:$0xff]
    %v561 = vld [vmem:[#allocation7 + $0x1e0] sm:$0xff]
    %v562 = vld [vmem:[#allocation7 + $0x1e8] sm:$0xff]
    %v563 = vld [vmem:[#allocation7 + $0x1f0] sm:$0xff]
    %v564 = vld [vmem:[#allocation7 + $0x1f8] sm:$0xff]
    %v565 = vld [vmem:[#allocation7 + $0x200] sm:$0xff]
    %v566 = vld [vmem:[#allocation7 + $0x208] sm:$0xff]
    %v567 = vld [vmem:[#allocation7 + $0x210] sm:$0xff]
    %v568 = vld [vmem:[#allocation7 + $0x218] sm:$0xff]
    %v569 = vld [vmem:[#allocation7 + $0x220] sm:$0xff]
    %v570 = vld [vmem:[#allocation7 + $0x228] sm:$0xff]
    %v571 = vld [vmem:[#allocation7 + $0x230] sm:$0xff]
    %v572 = vld [vmem:[#allocation7 + $0x238] sm:$0xff]
    %v573 = vld [vmem:[#allocation7 + $0x240] sm:$0xff]
    %v574 = vld [vmem:[#allocation7 + $0x248] sm:$0xff]
    %v575 = vld [vmem:[#allocation7 + $0x250] sm:$0xff]
    %v576 = vld [vmem:[#allocation7 + $0x258] sm:$0xff]
    %v577 = vld [vmem:[#allocation7 + $0x260] sm:$0xff]
    %v578 = vld [vmem:[#allocation7 + $0x268] sm:$0xff]
    %v579 = vld [vmem:[#allocation7 + $0x270] sm:$0xff]
    %v580 = vld [vmem:[#allocation7 + $0x278] sm:$0xff]
    %v581 = vld [vmem:[#allocation7 + $0x280] sm:$0xff]
    %v582 = vld [vmem:[#allocation7 + $0x288] sm:$0xff]
    %v583 = vld [vmem:[#allocation7 + $0x290] sm:$0xff]
    %v584 = vld [vmem:[#allocation7 + $0x298] sm:$0xff]
    %v585 = vld [vmem:[#allocation7 + $0x2a0] sm:$0xff]
    %v586 = vld [vmem:[#allocation7 + $0x2a8] sm:$0xff]
    %v587 = vld [vmem:[#allocation7 + $0x2b0] sm:$0xff]
    %v588 = vld [vmem:[#allocation7 + $0x2b8] sm:$0xff]
    %v589 = vld [vmem:[#allocation7 + $0x2c0] sm:$0xff]
    %v590 = vld [vmem:[#allocation7 + $0x2c8] sm:$0xff]
    %v591 = vld [vmem:[#allocation7 + $0x2d0] sm:$0xff]
    %v592 = vld [vmem:[#allocation7 + $0x2d8] sm:$0xff]
    %v593 = vld [vmem:[#allocation7 + $0x2e0] sm:$0xff]
    %v594 = vld [vmem:[#allocation7 + $0x2e8] sm:$0xff]
    %v595 = vld [vmem:[#allocation7 + $0x2f0] sm:$0xff]
    %v596 = vld [vmem:[#allocation7 + $0x2f8] sm:$0xff]
    %v693 = vunpack.c.l.b16 %v501
    %v694 = vunpack.c.h.b16 %v501
    %v695 = vunpack.c.l.b16 %v502
    %v696 = vunpack.c.h.b16 %v502
    %v697 = vunpack.c.l.b16 %v503
    %v698 = vunpack.c.h.b16 %v503
    %v699 = vunpack.c.l.b16 %v504
    %v700 = vunpack.c.h.b16 %v504
    %v701 = vunpack.c.l.b16 %v505
    %v702 = vunpack.c.h.b16 %v505
    %v703 = vunpack.c.l.b16 %v506
    %v704 = vunpack.c.h.b16 %v506
    %v705 = vunpack.c.l.b16 %v507
    %v706 = vunpack.c.h.b16 %v507
    %v707 = vunpack.c.l.b16 %v508
    %v708 = vunpack.c.h.b16 %v508
    %v709 = vunpack.c.l.b16 %v509
    %v710 = vunpack.c.h.b16 %v509
    %v711 = vunpack.c.l.b16 %v510
    %v712 = vunpack.c.h.b16 %v510
    %v713 = vunpack.c.l.b16 %v511
    %v714 = vunpack.c.h.b16 %v511
    %v715 = vunpack.c.l.b16 %v512
    %v716 = vunpack.c.h.b16 %v512
    %v717 = vunpack.c.l.b16 %v513
    %v718 = vunpack.c.h.b16 %v513
    %v719 = vunpack.c.l.b16 %v514
    %v720 = vunpack.c.h.b16 %v514
    %v721 = vunpack.c.l.b16 %v515
    %v722 = vunpack.c.h.b16 %v515
    %v723 = vunpack.c.l.b16 %v516
    %v724 = vunpack.c.h.b16 %v516
    %v725 = vunpack.c.l.b16 %v517
    %v726 = vunpack.c.h.b16 %v517
    %v727 = vunpack.c.l.b16 %v518
    %v728 = vunpack.c.h.b16 %v518
    %v729 = vunpack.c.l.b16 %v519
    %v730 = vunpack.c.h.b16 %v519
    %v731 = vunpack.c.l.b16 %v520
    %v732 = vunpack.c.h.b16 %v520
    %v733 = vunpack.c.l.b16 %v521
    %v734 = vunpack.c.h.b16 %v521
    %v735 = vunpack.c.l.b16 %v522
    %v736 = vunpack.c.h.b16 %v522
    %v737 = vunpack.c.l.b16 %v523
    %v738 = vunpack.c.h.b16 %v523
    %v739 = vunpack.c.l.b16 %v524
    %v740 = vunpack.c.h.b16 %v524
    %v741 = vunpack.c.l.b16 %v525
    %v742 = vunpack.c.h.b16 %v525
    %v743 = vunpack.c.l.b16 %v526
    %v744 = vunpack.c.h.b16 %v526
    %v745 = vunpack.c.l.b16 %v527
    %v746 = vunpack.c.h.b16 %v527
    %v747 = vunpack.c.l.b16 %v528
    %v748 = vunpack.c.h.b16 %v528
    %v749 = vunpack.c.l.b16 %v529
    %v750 = vunpack.c.h.b16 %v529
    %v751 = vunpack.c.l.b16 %v530
    %v752 = vunpack.c.h.b16 %v530
    %v753 = vunpack.c.l.b16 %v531
    %v754 = vunpack.c.h.b16 %v531
    %v755 = vunpack.c.l.b16 %v532
    %v756 = vunpack.c.h.b16 %v532
    %v757 = vunpack.c.l.b16 %v533
    %v758 = vunpack.c.h.b16 %v533
    %v759 = vunpack.c.l.b16 %v534
    %v760 = vunpack.c.h.b16 %v534
    %v761 = vunpack.c.l.b16 %v535
    %v762 = vunpack.c.h.b16 %v535
    %v763 = vunpack.c.l.b16 %v536
    %v764 = vunpack.c.h.b16 %v536
    %v765 = vunpack.c.l.b16 %v537
    %v766 = vunpack.c.h.b16 %v537
    %v767 = vunpack.c.l.b16 %v538
    %v768 = vunpack.c.h.b16 %v538
    %v769 = vunpack.c.l.b16 %v539
    %v770 = vunpack.c.h.b16 %v539
    %v771 = vunpack.c.l.b16 %v540
    %v772 = vunpack.c.h.b16 %v540
    %v773 = vunpack.c.l.b16 %v541
    %v774 = vunpack.c.h.b16 %v541
    %v775 = vunpack.c.l.b16 %v542
    %v776 = vunpack.c.h.b16 %v542
    %v777 = vunpack.c.l.b16 %v543
    %v778 = vunpack.c.h.b16 %v543
    %v779 = vunpack.c.l.b16 %v544
    %v780 = vunpack.c.h.b16 %v544
    %v781 = vunpack.c.l.b16 %v545
    %v782 = vunpack.c.h.b16 %v545
    %v783 = vunpack.c.l.b16 %v546
    %v784 = vunpack.c.h.b16 %v546
    %v785 = vunpack.c.l.b16 %v547
    %v786 = vunpack.c.h.b16 %v547
    %v787 = vunpack.c.l.b16 %v548
    %v788 = vunpack.c.h.b16 %v548
    %v789 = vunpack.c.l.b16 %v549
    %v790 = vunpack.c.h.b16 %v549
    %v791 = vunpack.c.l.b16 %v550
    %v792 = vunpack.c.h.b16 %v550
    %v793 = vunpack.c.l.b16 %v551
    %v794 = vunpack.c.h.b16 %v551
    %v795 = vunpack.c.l.b16 %v552
    %v796 = vunpack.c.h.b16 %v552
    %v797 = vunpack.c.l.b16 %v553
    %v798 = vunpack.c.h.b16 %v553
    %v799 = vunpack.c.l.b16 %v554
    %v800 = vunpack.c.h.b16 %v554
    %v801 = vunpack.c.l.b16 %v555
    %v802 = vunpack.c.h.b16 %v555
    %v803 = vunpack.c.l.b16 %v556
    %v804 = vunpack.c.h.b16 %v556
    %v805 = vunpack.c.l.b16 %v557
    %v806 = vunpack.c.h.b16 %v557
    %v807 = vunpack.c.l.b16 %v558
    %v808 = vunpack.c.h.b16 %v558
    %v809 = vunpack.c.l.b16 %v559
    %v810 = vunpack.c.h.b16 %v559
    %v811 = vunpack.c.l.b16 %v560
    %v812 = vunpack.c.h.b16 %v560
    %v813 = vunpack.c.l.b16 %v561
    %v814 = vunpack.c.h.b16 %v561
    %v815 = vunpack.c.l.b16 %v562
    %v816 = vunpack.c.h.b16 %v562
    %v817 = vunpack.c.l.b16 %v563
    %v818 = vunpack.c.h.b16 %v563
    %v819 = vunpack.c.l.b16 %v564
    %v820 = vunpack.c.h.b16 %v564
    %v821 = vunpack.c.l.b16 %v565
    %v822 = vunpack.c.h.b16 %v565
    %v823 = vunpack.c.l.b16 %v566
    %v824 = vunpack.c.h.b16 %v566
    %v825 = vunpack.c.l.b16 %v567
    %v826 = vunpack.c.h.b16 %v567
    %v827 = vunpack.c.l.b16 %v568
    %v828 = vunpack.c.h.b16 %v568
    %v829 = vunpack.c.l.b16 %v569
    %v830 = vunpack.c.h.b16 %v569
    %v831 = vunpack.c.l.b16 %v570
    %v832 = vunpack.c.h.b16 %v570
    %v833 = vunpack.c.l.b16 %v571
    %v834 = vunpack.c.h.b16 %v571
    %v835 = vunpack.c.l.b16 %v572
    %v836 = vunpack.c.h.b16 %v572
    %v837 = vunpack.c.l.b16 %v573
    %v838 = vunpack.c.h.b16 %v573
    %v839 = vunpack.c.l.b16 %v574
    %v840 = vunpack.c.h.b16 %v574
    %v841 = vunpack.c.l.b16 %v575
    %v842 = vunpack.c.h.b16 %v575
    %v843 = vunpack.c.l.b16 %v576
    %v844 = vunpack.c.h.b16 %v576
    %v845 = vunpack.c.l.b16 %v577
    %v846 = vunpack.c.h.b16 %v577
    %v847 = vunpack.c.l.b16 %v578
    %v848 = vunpack.c.h.b16 %v578
    %v849 = vunpack.c.l.b16 %v579
    %v850 = vunpack.c.h.b16 %v579
    %v851 = vunpack.c.l.b16 %v580
    %v852 = vunpack.c.h.b16 %v580
    %v853 = vunpack.c.l.b16 %v581
    %v854 = vunpack.c.h.b16 %v581
    %v855 = vunpack.c.l.b16 %v582
    %v856 = vunpack.c.h.b16 %v582
    %v857 = vunpack.c.l.b16 %v583
    %v858 = vunpack.c.h.b16 %v583
    %v859 = vunpack.c.l.b16 %v584
    %v860 = vunpack.c.h.b16 %v584
    %v861 = vunpack.c.l.b16 %v585
    %v862 = vunpack.c.h.b16 %v585
    %v863 = vunpack.c.l.b16 %v586
    %v864 = vunpack.c.h.b16 %v586
    %v865 = vunpack.c.l.b16 %v587
    %v866 = vunpack.c.h.b16 %v587
    %v867 = vunpack.c.l.b16 %v588
    %v868 = vunpack.c.h.b16 %v588
    %v869 = vunpack.c.l.b16 %v589
    %v870 = vunpack.c.h.b16 %v589
    %v871 = vunpack.c.l.b16 %v590
    %v872 = vunpack.c.h.b16 %v590
    %v873 = vunpack.c.l.b16 %v591
    %v874 = vunpack.c.h.b16 %v591
    %v875 = vunpack.c.l.b16 %v592
    %v876 = vunpack.c.h.b16 %v592
    %v877 = vunpack.c.l.b16 %v593
    %v878 = vunpack.c.h.b16 %v593
    %v879 = vunpack.c.l.b16 %v594
    %v880 = vunpack.c.h.b16 %v594
    %v881 = vunpack.c.l.b16 %v595
    %v882 = vunpack.c.h.b16 %v595
    %v883 = vunpack.c.l.b16 %v596
    %v884 = vunpack.c.h.b16 %v596
    %v885 = vpack.c.b16 %v699, %v693
    %v886 = vpack.c.b16 %v700, %v694
    %v887 = vpack.c.b16 %v701, %v695
    %v888 = vpack.c.b16 %v702, %v696
    %v889 = vpack.c.b16 %v703, %v697
    %v890 = vpack.c.b16 %v704, %v698
    %v891 = vpack.c.b16 %v711, %v705
    %v892 = vpack.c.b16 %v712, %v706
    %v893 = vpack.c.b16 %v713, %v707
    %v894 = vpack.c.b16 %v714, %v708
    %v895 = vpack.c.b16 %v715, %v709
    %v896 = vpack.c.b16 %v716, %v710
    %v897 = vpack.c.b16 %v723, %v717
    %v898 = vpack.c.b16 %v724, %v718
    %v899 = vpack.c.b16 %v725, %v719
    %v900 = vpack.c.b16 %v726, %v720
    %v901 = vpack.c.b16 %v727, %v721
    %v902 = vpack.c.b16 %v728, %v722
    %v903 = vpack.c.b16 %v735, %v729
    %v904 = vpack.c.b16 %v736, %v730
    %v905 = vpack.c.b16 %v737, %v731
    %v906 = vpack.c.b16 %v738, %v732
    %v907 = vpack.c.b16 %v739, %v733
    %v908 = vpack.c.b16 %v740, %v734
    %v909 = vpack.c.b16 %v747, %v741
    %v910 = vpack.c.b16 %v748, %v742
    %v911 = vpack.c.b16 %v749, %v743
    %v912 = vpack.c.b16 %v750, %v744
    %v913 = vpack.c.b16 %v751, %v745
    %v914 = vpack.c.b16 %v752, %v746
    %v915 = vpack.c.b16 %v759, %v753
    %v916 = vpack.c.b16 %v760, %v754
    %v917 = vpack.c.b16 %v761, %v755
    %v918 = vpack.c.b16 %v762, %v756
    %v919 = vpack.c.b16 %v763, %v757
    %v920 = vpack.c.b16 %v764, %v758
    %v921 = vpack.c.b16 %v771, %v765
    %v922 = vpack.c.b16 %v772, %v766
    %v923 = vpack.c.b16 %v773, %v767
    %v924 = vpack.c.b16 %v774, %v768
    %v925 = vpack.c.b16 %v775, %v769
    %v926 = vpack.c.b16 %v776, %v770
    %v927 = vpack.c.b16 %v783, %v777
    %v928 = vpack.c.b16 %v784, %v778
    %v929 = vpack.c.b16 %v785, %v779
    %v930 = vpack.c.b16 %v786, %v780
    %v931 = vpack.c.b16 %v787, %v781
    %v932 = vpack.c.b16 %v788, %v782
    %v933 = vpack.c.b16 %v795, %v789
    %v934 = vpack.c.b16 %v796, %v790
    %v935 = vpack.c.b16 %v797, %v791
    %v936 = vpack.c.b16 %v798, %v792
    %v937 = vpack.c.b16 %v799, %v793
    %v938 = vpack.c.b16 %v800, %v794
    %v939 = vpack.c.b16 %v807, %v801
    %v940 = vpack.c.b16 %v808, %v802
    %v941 = vpack.c.b16 %v809, %v803
    %v942 = vpack.c.b16 %v810, %v804
    %v943 = vpack.c.b16 %v811, %v805
    %v944 = vpack.c.b16 %v812, %v806
    %v945 = vpack.c.b16 %v819, %v813
    %v946 = vpack.c.b16 %v820, %v814
    %v947 = vpack.c.b16 %v821, %v815
    %v948 = vpack.c.b16 %v822, %v816
    %v949 = vpack.c.b16 %v823, %v817
    %v950 = vpack.c.b16 %v824, %v818
    %v951 = vpack.c.b16 %v831, %v825
    %v952 = vpack.c.b16 %v832, %v826
    %v953 = vpack.c.b16 %v833, %v827
    %v954 = vpack.c.b16 %v834, %v828
    %v955 = vpack.c.b16 %v835, %v829
    %v956 = vpack.c.b16 %v836, %v830
    %v957 = vpack.c.b16 %v843, %v837
    %v958 = vpack.c.b16 %v844, %v838
    %v959 = vpack.c.b16 %v845, %v839
    %v960 = vpack.c.b16 %v846, %v840
    %v961 = vpack.c.b16 %v847, %v841
    %v962 = vpack.c.b16 %v848, %v842
    %v963 = vpack.c.b16 %v855, %v849
    %v964 = vpack.c.b16 %v856, %v850
    %v965 = vpack.c.b16 %v857, %v851
    %v966 = vpack.c.b16 %v858, %v852
    %v967 = vpack.c.b16 %v859, %v853
    %v968 = vpack.c.b16 %v860, %v854
    %v969 = vpack.c.b16 %v867, %v861
    %v970 = vpack.c.b16 %v868, %v862
    %v971 = vpack.c.b16 %v869, %v863
    %v972 = vpack.c.b16 %v870, %v864
    %v973 = vpack.c.b16 %v871, %v865
    %v974 = vpack.c.b16 %v872, %v866
    %v975 = vpack.c.b16 %v879, %v873
    %v976 = vpack.c.b16 %v880, %v874
    %v977 = vpack.c.b16 %v881, %v875
    %v978 = vpack.c.b16 %v882, %v876
    %v979 = vpack.c.b16 %v883, %v877
    %v980 = vpack.c.b16 %v884, %v878
    %1077 = vmatprep.subr.bf16.mxu0 %v886
    %1078 = vmatpush1.bf16.msra.mxu0 %v885
    %1079 = vmatprep.subr.bf16.mxu0 %v892
    %1080 = vmatpush1.bf16.msra.mxu0 %v891
    %1081 = vmatprep.subr.bf16.mxu0 %v898
    %1082 = vmatpush1.bf16.msra.mxu0 %v897
    %1083 = vmatprep.subr.bf16.mxu0 %v904
    %1084 = vmatpush1.bf16.msra.mxu0 %v903
    %1085 = vmatprep.subr.bf16.mxu0 %v910
    %1086 = vmatpush1.bf16.msra.mxu0 %v909
    %1087 = vmatprep.subr.bf16.mxu0 %v916
    %1088 = vmatpush1.bf16.msra.mxu0 %v915
    %1089 = vmatprep.subr.bf16.mxu0 %v922
    %1090 = vmatpush1.bf16.msra.mxu0 %v921
    %1091 = vmatprep.subr.bf16.mxu0 %v928
    %1092 = vmatpush1.bf16.msra.mxu0 %v927
    %1093 = vmatprep.subr.bf16.mxu0 %v934
    %1094 = vmatpush1.bf16.msra.mxu0 %v933
    %1095 = vmatprep.subr.bf16.mxu0 %v940
    %1096 = vmatpush1.bf16.msra.mxu0 %v939
    %1097 = vmatprep.subr.bf16.mxu0 %v946
    %1098 = vmatpush1.bf16.msra.mxu0 %v945
    %1099 = vmatprep.subr.bf16.mxu0 %v952
    %1100 = vmatpush1.bf16.msra.mxu0 %v951
    %1101 = vmatprep.subr.bf16.mxu0 %v958
    %1102 = vmatpush1.bf16.msra.mxu0 %v957
    %1103 = vmatprep.subr.bf16.mxu0 %v964
    %1104 = vmatpush1.bf16.msra.mxu0 %v963
    %1105 = vmatprep.subr.bf16.mxu0 %v970
    %1106 = vmatpush1.bf16.msra.mxu0 %v969
    %1107 = vmatprep.subr.bf16.mxu0 %v976
    %1108 = vmatpush1.bf16.msra.mxu0 %v975
    %1109 = vmatprep.mubr.bf16.mxu0 %v500
    %1110 = vmatmul.mubr.bf16.gmra.mrb[0].mxu0 %v500
    %v1111 = vpop.f32.mrb[0].mxu0
    %v1112 = vadd.f32 0.0, %v1111
    %v1113 = vpop.f32.mrb[0].mxu0
    %v1114 = vadd.f32 0.0, %v1113
    %v1115 = vpop.f32.mrb[0].mxu0
    %v1116 = vpop.f32.mrb[0].mxu0
    %1117 = vdwg.mxu0
    %1118 = vmatprep.subr.bf16.mxu0 %v888
    %1119 = vmatpush1.bf16.msra.mxu0 %v887
    %1120 = vmatprep.subr.bf16.mxu0 %v894
    %1121 = vmatpush1.bf16.msra.mxu0 %v893
    %1122 = vmatprep.subr.bf16.mxu0 %v900
    %1123 = vmatpush1.bf16.msra.mxu0 %v899
    %1124 = vmatprep.subr.bf16.mxu0 %v906
    %1125 = vmatpush1.bf16.msra.mxu0 %v905
    %1126 = vmatprep.subr.bf16.mxu0 %v912
    %1127 = vmatpush1.bf16.msra.mxu0 %v911
    %1128 = vmatprep.subr.bf16.mxu0 %v918
    %1129 = vmatpush1.bf16.msra.mxu0 %v917
    %1130 = vmatprep.subr.bf16.mxu0 %v924
    %1131 = vmatpush1.bf16.msra.mxu0 %v923
    %1132 = vmatprep.subr.bf16.mxu0 %v930
    %1133 = vmatpush1.bf16.msra.mxu0 %v929
    %1134 = vmatprep.subr.bf16.mxu0 %v936
    %1135 = vmatpush1.bf16.msra.mxu0 %v935
    %1136 = vmatprep.subr.bf16.mxu0 %v942
    %1137 = vmatpush1.bf16.msra.mxu0 %v941
    %1138 = vmatprep.subr.bf16.mxu0 %v948
    %1139 = vmatpush1.bf16.msra.mxu0 %v947
    %1140 = vmatprep.subr.bf16.mxu0 %v954
    %1141 = vmatpush1.bf16.msra.mxu0 %v953
    %1142 = vmatprep.subr.bf16.mxu0 %v960
    %1143 = vmatpush1.bf16.msra.mxu0 %v959
    %1144 = vmatprep.subr.bf16.mxu0 %v966
    %1145 = vmatpush1.bf16.msra.mxu0 %v965
    %1146 = vmatprep.subr.bf16.mxu0 %v972
    %1147 = vmatpush1.bf16.msra.mxu0 %v971
    %1148 = vmatprep.subr.bf16.mxu0 %v978
    %1149 = vmatpush1.bf16.msra.mxu0 %v977
    %1150 = vmatprep.mubr.bf16.mxu0 %v500
    %1151 = vmatmul.mubr.bf16.gmra.mrb[0].mxu0 %v500
    %v1152 = vpop.f32.mrb[0].mxu0
    %v1153 = vadd.f32 0.0, %v1152
    %v1154 = vpop.f32.mrb[0].mxu0
    %v1155 = vadd.f32 0.0, %v1154
    %v1156 = vpop.f32.mrb[0].mxu0
    %v1157 = vpop.f32.mrb[0].mxu0
    %1158 = vdwg.mxu0
    %1159 = vmatprep.subr.bf16.mxu0 %v890
    %1160 = vmatpush1.bf16.msra.mxu0 %v889
    %1161 = vmatprep.subr.bf16.mxu0 %v896
    %1162 = vmatpush1.bf16.msra.mxu0 %v895
    %1163 = vmatprep.subr.bf16.mxu0 %v902
    %1164 = vmatpush1.bf16.msra.mxu0 %v901
    %1165 = vmatprep.subr.bf16.mxu0 %v908
    %1166 = vmatpush1.bf16.msra.mxu0 %v907
    %1167 = vmatprep.subr.bf16.mxu0 %v914
    %1168 = vmatpush1.bf16.msra.mxu0 %v913
    %1169 = vmatprep.subr.bf16.mxu0 %v920
    %1170 = vmatpush1.bf16.msra.mxu0 %v919
    %1171 = vmatprep.subr.bf16.mxu0 %v926
    %1172 = vmatpush1.bf16.msra.mxu0 %v925
    %1173 = vmatprep.subr.bf16.mxu0 %v932
    %1174 = vmatpush1.bf16.msra.mxu0 %v931
    %1175 = vmatprep.subr.bf16.mxu0 %v938
    %1176 = vmatpush1.bf16.msra.mxu0 %v937
    %1177 = vmatprep.subr.bf16.mxu0 %v944
    %1178 = vmatpush1.bf16.msra.mxu0 %v943
    %1179 = vmatprep.subr.bf16.mxu0 %v950
    %1180 = vmatpush1.bf16.msra.mxu0 %v949
    %1181 = vmatprep.subr.bf16.mxu0 %v956
    %1182 = vmatpush1.bf16.msra.mxu0 %v955
    %1183 = vmatprep.subr.bf16.mxu0 %v962
    %1184 = vmatpush1.bf16.msra.mxu0 %v961
    %1185 = vmatprep.subr.bf16.mxu0 %v968
    %1186 = vmatpush1.bf16.msra.mxu0 %v967
    %1187 = vmatprep.subr.bf16.mxu0 %v974
    %1188 = vmatpush1.bf16.msra.mxu0 %v973
    %1189 = vmatprep.subr.bf16.mxu0 %v980
    %1190 = vmatpush1.bf16.msra.mxu0 %v979
    %1191 = vmatprep.mubr.bf16.mxu0 %v500
    %1192 = vmatmul.mubr.bf16.gmra.mrb[0].mxu0 %v500
    %v1193 = vpop.f32.mrb[0].mxu0
    %v1194 = vadd.f32 0.0, %v1193
    %v1195 = vpop.f32.mrb[0].mxu0
    %v1196 = vadd.f32 0.0, %v1195
    %v1197 = vpop.f32.mrb[0].mxu0
    %v1198 = vpop.f32.mrb[0].mxu0
    %1199 = vdwg.mxu0
    %v1200 = vadd.f32 %v397, %v1112
    %v1201 = vxor.u32 %v1200, 2147483648
    %v1202 = vmul.f32 %v1201, 1.442695
    %v1203 = vpow.pop %v1202
    %v1204 = vadd.f32 %v1203, 1.0
    %v1205 = vrcp.pop %v1204
    %v1206 = vmul.f32 1.0, %v1205
    %v1207 = vadd.f32 %v399, %v1114
    %v1208 = vxor.u32 %v1207, 2147483648
    %v1209 = vmul.f32 %v1208, 1.442695
    %v1210 = vpow.pop %v1209
    %v1211 = vadd.f32 %v1210, 1.0
    %v1212 = vrcp.pop %v1211
    %v1213 = vmul.f32 1.0, %v1212
    %v1214 = vadd.f32 %v1153, %v148
    %v1215 = vmul.f32 %v1206, %v1214
    %v1216 = vadd.f32 %v470, %v1215
    %v1217 = vtanh.pop %v1216
    %v1218 = vsub.f32 1.0, %v1213
    %v1219 = vmul.f32 %v1218, %v1217
    %v1220 = vmul.f32 %v1213, 0.0
    %v1221 = vadd.f32 %v1219, %v1220
    %v1222 = vpack.c.bf16 %v1221, %v1221
    %v1223 = vld [vmem:[#allocation10] sm:$0xff]
    %v1224 = vld [vmem:[#allocation10 + $0x8] sm:$0xf]
    %v1225 = vld [vmem:[#allocation10 + $0xc] sm:$0xff]
    %v1226 = vld [vmem:[#allocation10 + $0x14] sm:$0xf]
    %v1227 = vld [vmem:[#allocation10 + $0x18] sm:$0xff]
    %v1228 = vld [vmem:[#allocation10 + $0x20] sm:$0xf]
    %v1229 = vld [vmem:[#allocation10 + $0x24] sm:$0xff]
    %v1230 = vld [vmem:[#allocation10 + $0x2c] sm:$0xf]
    %v1231 = vld [vmem:[#allocation10 + $0x30] sm:$0xff]
    %v1232 = vld [vmem:[#allocation10 + $0x38] sm:$0xf]
    %v1233 = vld [vmem:[#allocation10 + $0x3c] sm:$0xff]
    %v1234 = vld [vmem:[#allocation10 + $0x44] sm:$0xf]
    %v1235 = vld [vmem:[#allocation10 + $0x48] sm:$0xff]
    %v1236 = vld [vmem:[#allocation10 + $0x50] sm:$0xf]
    %v1237 = vld [vmem:[#allocation10 + $0x54] sm:$0xff]
    %v1238 = vld [vmem:[#allocation10 + $0x5c] sm:$0xf]
    %v1239 = vld [vmem:[#allocation10 + $0x60] sm:$0xff]
    %v1240 = vld [vmem:[#allocation10 + $0x68] sm:$0xf]
    %v1241 = vld [vmem:[#allocation10 + $0x6c] sm:$0xff]
    %v1242 = vld [vmem:[#allocation10 + $0x74] sm:$0xf]
    %v1243 = vld [vmem:[#allocation10 + $0x78] sm:$0xff]
    %v1244 = vld [vmem:[#allocation10 + $0x80] sm:$0xf]
    %v1245 = vld [vmem:[#allocation10 + $0x84] sm:$0xff]
    %v1246 = vld [vmem:[#allocation10 + $0x8c] sm:$0xf]
    %v1247 = vld [vmem:[#allocation10 + $0x90] sm:$0xff]
    %v1248 = vld [vmem:[#allocation10 + $0x98] sm:$0xf]
    %v1249 = vld [vmem:[#allocation10 + $0x9c] sm:$0xff]
    %v1250 = vld [vmem:[#allocation10 + $0xa4] sm:$0xf]
    %v1251 = vld [vmem:[#allocation10 + $0xa8] sm:$0xff]
    %v1252 = vld [vmem:[#allocation10 + $0xb0] sm:$0xf]
    %v1253 = vld [vmem:[#allocation10 + $0xb4] sm:$0xff]
    %v1254 = vld [vmem:[#allocation10 + $0xbc] sm:$0xf]
    %v1287 = vunpack.c.l.b16 %v1223
    %v1288 = vunpack.c.h.b16 %v1223
    %v1289 = vunpack.c.l.b16 %v1224
    %v1290 = vunpack.c.l.b16 %v1225
    %v1291 = vunpack.c.h.b16 %v1225
    %v1292 = vunpack.c.l.b16 %v1226
    %v1293 = vunpack.c.l.b16 %v1227
    %v1294 = vunpack.c.h.b16 %v1227
    %v1295 = vunpack.c.l.b16 %v1228
    %v1296 = vunpack.c.l.b16 %v1229
    %v1297 = vunpack.c.h.b16 %v1229
    %v1298 = vunpack.c.l.b16 %v1230
    %v1299 = vunpack.c.l.b16 %v1231
    %v1300 = vunpack.c.h.b16 %v1231
    %v1301 = vunpack.c.l.b16 %v1232
    %v1302 = vunpack.c.l.b16 %v1233
    %v1303 = vunpack.c.h.b16 %v1233
    %v1304 = vunpack.c.l.b16 %v1234
    %v1305 = vunpack.c.l.b16 %v1235
    %v1306 = vunpack.c.h.b16 %v1235
    %v1307 = vunpack.c.l.b16 %v1236
    %v1308 = vunpack.c.l.b16 %v1237
    %v1309 = vunpack.c.h.b16 %v1237
    %v1310 = vunpack.c.l.b16 %v1238
    %v1311 = vunpack.c.l.b16 %v1239
    %v1312 = vunpack.c.h.b16 %v1239
    %v1313 = vunpack.c.l.b16 %v1240
    %v1314 = vunpack.c.l.b16 %v1241
    %v1315 = vunpack.c.h.b16 %v1241
    %v1316 = vunpack.c.l.b16 %v1242
    %v1317 = vunpack.c.l.b16 %v1243
    %v1318 = vunpack.c.h.b16 %v1243
    %v1319 = vunpack.c.l.b16 %v1244
    %v1320 = vunpack.c.l.b16 %v1245
    %v1321 = vunpack.c.h.b16 %v1245
    %v1322 = vunpack.c.l.b16 %v1246
    %v1323 = vunpack.c.l.b16 %v1247
    %v1324 = vunpack.c.h.b16 %v1247
    %v1325 = vunpack.c.l.b16 %v1248
    %v1326 = vunpack.c.l.b16 %v1249
    %v1327 = vunpack.c.h.b16 %v1249
    %v1328 = vunpack.c.l.b16 %v1250
    %v1329 = vunpack.c.l.b16 %v1251
    %v1330 = vunpack.c.h.b16 %v1251
    %v1331 = vunpack.c.l.b16 %v1252
    %v1332 = vunpack.c.l.b16 %v1253
    %v1333 = vunpack.c.h.b16 %v1253
    %v1334 = vunpack.c.l.b16 %v1254
    %v1335 = vpack.c.b16 %v1290, %v1287
    %v1336 = vpack.c.b16 %v1291, %v1288
    %v1337 = vpack.c.b16 %v1292, %v1289
    %v1338 = vpack.c.b16 %v1296, %v1293
    %v1339 = vpack.c.b16 %v1297, %v1294
    %v1340 = vpack.c.b16 %v1298, %v1295
    %v1341 = vpack.c.b16 %v1302, %v1299
    %v1342 = vpack.c.b16 %v1303, %v1300
    %v1343 = vpack.c.b16 %v1304, %v1301
    %v1344 = vpack.c.b16 %v1308, %v1305
    %v1345 = vpack.c.b16 %v1309, %v1306
    %v1346 = vpack.c.b16 %v1310, %v1307
    %v1347 = vpack.c.b16 %v1314, %v1311
    %v1348 = vpack.c.b16 %v1315, %v1312
    %v1349 = vpack.c.b16 %v1316, %v1313
    %v1350 = vpack.c.b16 %v1320, %v1317
    %v1351 = vpack.c.b16 %v1321, %v1318
    %v1352 = vpack.c.b16 %v1322, %v1319
    %v1353 = vpack.c.b16 %v1326, %v1323
    %v1354 = vpack.c.b16 %v1327, %v1324
    %v1355 = vpack.c.b16 %v1328, %v1325
    %v1356 = vpack.c.b16 %v1332, %v1329
    %v1357 = vpack.c.b16 %v1333, %v1330
    %v1358 = vpack.c.b16 %v1334, %v1331
    %1383 = vmatprep.subr.bf16.mxu0 %v1336
    %1384 = vmatpush1.bf16.msra.mxu0 %v1335
    %1385 = vmatprep.subr.bf16.mxu0 %v1339
    %1386 = vmatpush1.bf16.msra.mxu0 %v1338
    %1387 = vmatprep.subr.bf16.mxu0 %v1342
    %1388 = vmatpush1.bf16.msra.mxu0 %v1341
    %1389 = vmatprep.subr.bf16.mxu0 %v1345
    %1390 = vmatpush1.bf16.msra.mxu0 %v1344
    %1391 = vmatprep.subr.bf16.mxu0 %v1348
    %1392 = vmatpush1.bf16.msra.mxu0 %v1347
    %1393 = vmatprep.subr.bf16.mxu0 %v1351
    %1394 = vmatpush1.bf16.msra.mxu0 %v1350
    %1395 = vmatprep.subr.bf16.mxu0 %v1354
    %1396 = vmatpush1.bf16.msra.mxu0 %v1353
    %1397 = vmatprep.subr.bf16.mxu0 %v1357
    %1398 = vmatpush1.bf16.msra.mxu0 %v1356
    %1399 = vmatprep.subr.bf16.mxu0 0
    %1400 = vmatpush1.bf16.msra.mxu0 0
    %1401 = vmatprep.subr.bf16.mxu0 0
    %1402 = vmatpush1.bf16.msra.mxu0 0
    %1403 = vmatprep.subr.bf16.mxu0 0
    %1404 = vmatpush1.bf16.msra.mxu0 0
    %1405 = vmatprep.subr.bf16.mxu0 0
    %1406 = vmatpush1.bf16.msra.mxu0 0
    %1407 = vmatprep.subr.bf16.mxu0 0
    %1408 = vmatpush1.bf16.msra.mxu0 0
    %1409 = vmatprep.subr.bf16.mxu0 0
    %1410 = vmatpush1.bf16.msra.mxu0 0
    %1411 = vmatprep.subr.bf16.mxu0 0
    %1412 = vmatpush1.bf16.msra.mxu0 0
    %1413 = vmatprep.subr.bf16.mxu0 0
    %1414 = vmatpush1.bf16.msra.mxu0 0
    %1415 = vmatprep.mubr.bf16.mxu0 0
    %1416 = vmatmul.mubr.bf16.gmra.mrb[0].mxu0 %v1222
    %v1417 = vpop.f32.mrb[0].mxu0
    %v1418 = vadd.f32 %v149, %v1417
    %v1419 = vpop.f32.mrb[0].mxu0
    %v1420 = vadd.f32 %v150, %v1419
    %v1421 = vpop.f32.mrb[0].mxu0
    %v1422 = vpop.f32.mrb[0].mxu0
    %1423 = vdwg.mxu0
    %1424 = vmatprep.subr.bf16.mxu0 0
    %1425 = vmatpush1.bf16.msra.mxu0 %v1337
    %1426 = vmatprep.subr.bf16.mxu0 0
    %1427 = vmatpush1.bf16.msra.mxu0 %v1340
    %1428 = vmatprep.subr.bf16.mxu0 0
    %1429 = vmatpush1.bf16.msra.mxu0 %v1343
    %1430 = vmatprep.subr.bf16.mxu0 0
    %1431 = vmatpush1.bf16.msra.mxu0 %v1346
    %1432 = vmatprep.subr.bf16.mxu0 0
    %1433 = vmatpush1.bf16.msra.mxu0 %v1349
    %1434 = vmatprep.subr.bf16.mxu0 0
    %1435 = vmatpush1.bf16.msra.mxu0 %v1352
    %1436 = vmatprep.subr.bf16.mxu0 0
    %1437 = vmatpush1.bf16.msra.mxu0 %v1355
    %1438 = vmatprep.subr.bf16.mxu0 0
    %1439 = vmatpush1.bf16.msra.mxu0 %v1358
    %1440 = vmatprep.subr.bf16.mxu0 0
    %1441 = vmatpush1.bf16.msra.mxu0 0
    %1442 = vmatprep.subr.bf16.mxu0 0
    %1443 = vmatpush1.bf16.msra.mxu0 0
    %1444 = vmatprep.subr.bf16.mxu0 0
    %1445 = vmatpush1.bf16.msra.mxu0 0
    %1446 = vmatprep.subr.bf16.mxu0 0
    %1447 = vmatpush1.bf16.msra.mxu0 0
    %1448 = vmatprep.subr.bf16.mxu0 0
    %1449 = vmatpush1.bf16.msra.mxu0 0
    %1450 = vmatprep.subr.bf16.mxu0 0
    %1451 = vmatpush1.bf16.msra.mxu0 0
    %1452 = vmatprep.subr.bf16.mxu0 0
    %1453 = vmatpush1.bf16.msra.mxu0 0
    %1454 = vmatprep.subr.bf16.mxu0 0
    %1455 = vmatpush1.bf16.msra.mxu0 0
    %1456 = vmatprep.mubr.bf16.mxu0 0
    %1457 = vmatmul.mubr.bf16.gmra.mrb[0].mxu0 %v1222
    %v1458 = vpop.f32.mrb[0].mxu0
    %v1459 = vadd.f32 %v151, %v1458
    %v1460 = vpop.f32.mrb[0].mxu0
    %v1461 = vpop.f32.mrb[0].mxu0
    %v1462 = vpop.f32.mrb[0].mxu0
    %1463 = vdwg.mxu0
    %v1464 = vadd.f32 %v1418, %v1155
    %v1465 = vxor.u32 %v1464, 2147483648
    %v1466 = vmul.f32 %v1465, 1.442695
    %v1467 = vpow.pop %v1466
    %v1468 = vadd.f32 %v1467, 1.0
    %v1469 = vrcp.pop %v1468
    %v1470 = vmul.f32 1.0, %v1469
    %v1471 = vadd.f32 %v1420, %v1194
    %v1472 = vxor.u32 %v1471, 2147483648
    %v1473 = vmul.f32 %v1472, 1.442695
    %v1474 = vpow.pop %v1473
    %v1475 = vadd.f32 %v1474, 1.0
    %v1476 = vrcp.pop %v1475
    %v1477 = vmul.f32 1.0, %v1476
    %v1478 = vadd.f32 %v1196, %v152
    %v1479 = vmul.f32 %v1470, %v1478
    %v1480 = vadd.f32 %v1459, %v1479
    %v1481 = vtanh.pop %v1480
    %v1482 = vsub.f32 1.0, %v1477
    %v1483 = vmul.f32 %v1482, %v1481
    %v1484 = vmul.f32 %v1477, 0.0
    %v1485 = vadd.f32 %v1483, %v1484
    %v1486 = vpack.c.bf16 %v1485, %v1485
    %1487 = vmatprep.subr.bf16.mxu0 %v886
    %1488 = vmatpush1.bf16.msra.mxu0 %v885
    %1489 = vmatprep.subr.bf16.mxu0 %v892
    %1490 = vmatpush1.bf16.msra.mxu0 %v891
    %1491 = vmatprep.subr.bf16.mxu0 %v898
    %1492 = vmatpush1.bf16.msra.mxu0 %v897
    %1493 = vmatprep.subr.bf16.mxu0 %v904
    %1494 = vmatpush1.bf16.msra.mxu0 %v903
    %1495 = vmatprep.subr.bf16.mxu0 %v910
    %1496 = vmatpush1.bf16.msra.mxu0 %v909
    %1497 = vmatprep.subr.bf16.mxu0 %v916
    %1498 = vmatpush1.bf16.msra.mxu0 %v915
    %1499 = vmatprep.subr.bf16.mxu0 %v922
    %1500 = vmatpush1.bf16.msra.mxu0 %v921
    %1501 = vmatprep.subr.bf16.mxu0 %v928
    %1502 = vmatpush1.bf16.msra.mxu0 %v927
    %1503 = vmatprep.subr.bf16.mxu0 %v934
    %1504 = vmatpush1.bf16.msra.mxu0 %v933
    %1505 = vmatprep.subr.bf16.mxu0 %v940
    %1506 = vmatpush1.bf16.msra.mxu0 %v939
    %1507 = vmatprep.subr.bf16.mxu0 %v946
    %1508 = vmatpush1.bf16.msra.mxu0 %v945
    %1509 = vmatprep.subr.bf16.mxu0 %v952
    %1510 = vmatpush1.bf16.msra.mxu0 %v951
    %1511 = vmatprep.subr.bf16.mxu0 %v958
    %1512 = vmatpush1.bf16.msra.mxu0 %v957
    %1513 = vmatprep.subr.bf16.mxu0 %v964
    %1514 = vmatpush1.bf16.msra.mxu0 %v963
    %1515 = vmatprep.subr.bf16.mxu0 %v970
    %1516 = vmatpush1.bf16.msra.mxu0 %v969
    %1517 = vmatprep.subr.bf16.mxu0 %v976
    %1518 = vmatpush1.bf16.msra.mxu0 %v975
    %1519 = vmatprep.mubr.bf16.mxu0 %v1486
    %1520 = vmatmul.mubr.bf16.gmra.mrb[0].mxu0 %v1222
    %v1521 = vpop.f32.mrb[0].mxu0
    %v1522 = vadd.f32 0.0, %v1521
    %v1523 = vpop.f32.mrb[0].mxu0
    %v1524 = vadd.f32 0.0, %v1523
    %v1525 = vpop.f32.mrb[0].mxu0
    %v1526 = vpop.f32.mrb[0].mxu0
    %1527 = vdwg.mxu0
    %1528 = vmatprep.subr.bf16.mxu0 %v888
    %1529 = vmatpush1.bf16.msra.mxu0 %v887
    %1530 = vmatprep.subr.bf16.mxu0 %v894
    %1531 = vmatpush1.bf16.msra.mxu0 %v893
    %1532 = vmatprep.subr.bf16.mxu0 %v900
    %1533 = vmatpush1.bf16.msra.mxu0 %v899
    %1534 = vmatprep.subr.bf16.mxu0 %v906
    %1535 = vmatpush1.bf16.msra.mxu0 %v905
    %1536 = vmatprep.subr.bf16.mxu0 %v912
    %1537 = vmatpush1.bf16.msra.mxu0 %v911
    %1538 = vmatprep.subr.bf16.mxu0 %v918
    %1539 = vmatpush1.bf16.msra.mxu0 %v917
    %1540 = vmatprep.subr.bf16.mxu0 %v924
    %1541 = vmatpush1.bf16.msra.mxu0 %v923
    %1542 = vmatprep.subr.bf16.mxu0 %v930
    %1543 = vmatpush1.bf16.msra.mxu0 %v929
    %1544 = vmatprep.subr.bf16.mxu0 %v936
    %1545 = vmatpush1.bf16.msra.mxu0 %v935
    %1546 = vmatprep.subr.bf16.mxu0 %v942
    %1547 = vmatpush1.bf16.msra.mxu0 %v941
    %1548 = vmatprep.subr.bf16.mxu0 %v948
    %1549 = vmatpush1.bf16.msra.mxu0 %v947
    %1550 = vmatprep.subr.bf16.mxu0 %v954
    %1551 = vmatpush1.bf16.msra.mxu0 %v953
    %1552 = vmatprep.subr.bf16.mxu0 %v960
    %1553 = vmatpush1.bf16.msra.mxu0 %v959
    %1554 = vmatprep.subr.bf16.mxu0 %v966
    %1555 = vmatpush1.bf16.msra.mxu0 %v965
    %1556 = vmatprep.subr.bf16.mxu0 %v972
    %1557 = vmatpush1.bf16.msra.mxu0 %v971
    %1558 = vmatprep.subr.bf16.mxu0 %v978
    %1559 = vmatpush1.bf16.msra.mxu0 %v977
    %1560 = vmatprep.mubr.bf16.mxu0 %v1486
    %1561 = vmatmul.mubr.bf16.gmra.mrb[0].mxu0 %v1222
    %v1562 = vpop.f32.mrb[0].mxu0
    %v1563 = vadd.f32 0.0, %v1562
    %v1564 = vpop.f32.mrb[0].mxu0
    %v1565 = vadd.f32 0.0, %v1564
    %v1566 = vpop.f32.mrb[0].mxu0
    %v1567 = vpop.f32.mrb[0].mxu0
    %1568 = vdwg.mxu0
    %1569 = vmatprep.subr.bf16.mxu0 %v890
    %1570 = vmatpush1.bf16.msra.mxu0 %v889
    %1571 = vmatprep.subr.bf16.mxu0 %v896
    %1572 = vmatpush1.bf16.msra.mxu0 %v895
    %1573 = vmatprep.subr.bf16.mxu0 %v902
    %1574 = vmatpush1.bf16.msra.mxu0 %v901
    %1575 = vmatprep.subr.bf16.mxu0 %v908
    %1576 = vmatpush1.bf16.msra.mxu0 %v907
    %1577 = vmatprep.subr.bf16.mxu0 %v914
    %1578 = vmatpush1.bf16.msra.mxu0 %v913
    %1579 = vmatprep.subr.bf16.mxu0 %v920
    %1580 = vmatpush1.bf16.msra.mxu0 %v919
    %1581 = vmatprep.subr.bf16.mxu0 %v926
    %1582 = vmatpush1.bf16.msra.mxu0 %v925
    %1583 = vmatprep.subr.bf16.mxu0 %v932
    %1584 = vmatpush1.bf16.msra.mxu0 %v931
    %1585 = vmatprep.subr.bf16.mxu0 %v938
    %1586 = vmatpush1.bf16.msra.mxu0 %v937
    %1587 = vmatprep.subr.bf16.mxu0 %v944
    %1588 = vmatpush1.bf16.msra.mxu0 %v943
    %1589 = vmatprep.subr.bf16.mxu0 %v950
    %1590 = vmatpush1.bf16.msra.mxu0 %v949
    %1591 = vmatprep.subr.bf16.mxu0 %v956
    %1592 = vmatpush1.bf16.msra.mxu0 %v955
    %1593 = vmatprep.subr.bf16.mxu0 %v962
    %1594 = vmatpush1.bf16.msra.mxu0 %v961
    %1595 = vmatprep.subr.bf16.mxu0 %v968
    %1596 = vmatpush1.bf16.msra.mxu0 %v967
    %1597 = vmatprep.subr.bf16.mxu0 %v974
    %1598 = vmatpush1.bf16.msra.mxu0 %v973
    %1599 = vmatprep.subr.bf16.mxu0 %v980
    %1600 = vmatpush1.bf16.msra.mxu0 %v979
    %1601 = vmatprep.mubr.bf16.mxu0 %v1486
    %1602 = vmatmul.mubr.bf16.gmra.mrb[0].mxu0 %v1222
    %v1603 = vpop.f32.mrb[0].mxu0
    %v1604 = vadd.f32 0.0, %v1603
    %v1605 = vpop.f32.mrb[0].mxu0
    %v1606 = vadd.f32 0.0, %v1605
    %v1607 = vpop.f32.mrb[0].mxu0
    %v1608 = vpop.f32.mrb[0].mxu0
    %1609 = vdwg.mxu0
    %v1610 = vadd.f32 %v401, %v1522
    %v1611 = vxor.u32 %v1610, 2147483648
    %v1612 = vmul.f32 %v1611, 1.442695
    %v1613 = vpow.pop %v1612
    %v1614 = vadd.f32 %v1613, 1.0
    %v1615 = vrcp.pop %v1614
    %v1616 = vmul.f32 1.0, %v1615
    %v1617 = vadd.f32 %v403, %v1524
    %v1618 = vxor.u32 %v1617, 2147483648
    %v1619 = vmul.f32 %v1618, 1.442695
    %v1620 = vpow.pop %v1619
    %v1621 = vadd.f32 %v1620, 1.0
    %v1622 = vrcp.pop %v1621
    %v1623 = vmul.f32 1.0, %v1622
    %v1624 = vadd.f32 %v1563, %v148
    %v1625 = vmul.f32 %v1616, %v1624
    %v1626 = vadd.f32 %v473, %v1625
    %v1627 = vtanh.pop %v1626
    %v1628 = vsub.f32 1.0, %v1623
    %v1629 = vmul.f32 %v1628, %v1627
    %v1630 = vmul.f32 %v1623, %v1221
    %v1631 = vadd.f32 %v1629, %v1630
    %v1632 = vpack.c.bf16 %v1631, %v1631
    %1633 = vmatprep.subr.bf16.mxu0 %v1336
    %1634 = vmatpush1.bf16.msra.mxu0 %v1335
    %1635 = vmatprep.subr.bf16.mxu0 %v1339
    %1636 = vmatpush1.bf16.msra.mxu0 %v1338
    %1637 = vmatprep.subr.bf16.mxu0 %v1342
    %1638 = vmatpush1.bf16.msra.mxu0 %v1341
    %1639 = vmatprep.subr.bf16.mxu0 %v1345
    %1640 = vmatpush1.bf16.msra.mxu0 %v1344
    %1641 = vmatprep.subr.bf16.mxu0 %v1348
    %1642 = vmatpush1.bf16.msra.mxu0 %v1347
    %1643 = vmatprep.subr.bf16.mxu0 %v1351
    %1644 = vmatpush1.bf16.msra.mxu0 %v1350
    %1645 = vmatprep.subr.bf16.mxu0 %v1354
    %1646 = vmatpush1.bf16.msra.mxu0 %v1353
    %1647 = vmatprep.subr.bf16.mxu0 %v1357
    %1648 = vmatpush1.bf16.msra.mxu0 %v1356
    %1649 = vmatprep.subr.bf16.mxu0 0
    %1650 = vmatpush1.bf16.msra.mxu0 0
    %1651 = vmatprep.subr.bf16.mxu0 0
    %1652 = vmatpush1.bf16.msra.mxu0 0
    %1653 = vmatprep.subr.bf16.mxu0 0
    %1654 = vmatpush1.bf16.msra.mxu0 0
    %1655 = vmatprep.subr.bf16.mxu0 0
    %1656 = vmatpush1.bf16.msra.mxu0 0
    %1657 = vmatprep.subr.bf16.mxu0 0
    %1658 = vmatpush1.bf16.msra.mxu0 0
    %1659 = vmatprep.subr.bf16.mxu0 0
    %1660 = vmatpush1.bf16.msra.mxu0 0
    %1661 = vmatprep.subr.bf16.mxu0 0
    %1662 = vmatpush1.bf16.msra.mxu0 0
    %1663 = vmatprep.subr.bf16.mxu0 0
    %1664 = vmatpush1.bf16.msra.mxu0 0
    %1665 = vmatprep.mubr.bf16.mxu0 0
    %1666 = vmatmul.mubr.bf16.gmra.mrb[0].mxu0 %v1632
    %v1667 = vpop.f32.mrb[0].mxu0
    %v1668 = vadd.f32 %v149, %v1667
    %v1669 = vpop.f32.mrb[0].mxu0
    %v1670 = vadd.f32 %v150, %v1669
    %v1671 = vpop.f32.mrb[0].mxu0
    %v1672 = vpop.f32.mrb[0].mxu0
    %1673 = vdwg.mxu0
    %1674 = vmatprep.subr.bf16.mxu0 0
    %1675 = vmatpush1.bf16.msra.mxu0 %v1337
    %1676 = vmatprep.subr.bf16.mxu0 0
    %1677 = vmatpush1.bf16.msra.mxu0 %v1340
    %1678 = vmatprep.subr.bf16.mxu0 0
    %1679 = vmatpush1.bf16.msra.mxu0 %v1343
    %1680 = vmatprep.subr.bf16.mxu0 0
    %1681 = vmatpush1.bf16.msra.mxu0 %v1346
    %1682 = vmatprep.subr.bf16.mxu0 0
    %1683 = vmatpush1.bf16.msra.mxu0 %v1349
    %1684 = vmatprep.subr.bf16.mxu0 0
    %1685 = vmatpush1.bf16.msra.mxu0 %v1352
    %1686 = vmatprep.subr.bf16.mxu0 0
    %1687 = vmatpush1.bf16.msra.mxu0 %v1355
    %1688 = vmatprep.subr.bf16.mxu0 0
    %1689 = vmatpush1.bf16.msra.mxu0 %v1358
    %1690 = vmatprep.subr.bf16.mxu0 0
    %1691 = vmatpush1.bf16.msra.mxu0 0
    %1692 = vmatprep.subr.bf16.mxu0 0
    %1693 = vmatpush1.bf16.msra.mxu0 0
    %1694 = vmatprep.subr.bf16.mxu0 0
    %1695 = vmatpush1.bf16.msra.mxu0 0
    %1696 = vmatprep.subr.bf16.mxu0 0
    %1697 = vmatpush1.bf16.msra.mxu0 0
    %1698 = vmatprep.subr.bf16.mxu0 0
    %1699 = vmatpush1.bf16.msra.mxu0 0
    %1700 = vmatprep.subr.bf16.mxu0 0
    %1701 = vmatpush1.bf16.msra.mxu0 0
    %1702 = vmatprep.subr.bf16.mxu0 0
    %1703 = vmatpush1.bf16.msra.mxu0 0
    %1704 = vmatprep.subr.bf16.mxu0 0
    %1705 = vmatpush1.bf16.msra.mxu0 0
    %1706 = vmatprep.mubr.bf16.mxu0 0
    %1707 = vmatmul.mubr.bf16.gmra.mrb[0].mxu0 %v1632
    %v1708 = vpop.f32.mrb[0].mxu0
    %v1709 = vadd.f32 %v151, %v1708
    %v1710 = vpop.f32.mrb[0].mxu0
    %v1711 = vpop.f32.mrb[0].mxu0
    %v1712 = vpop.f32.mrb[0].mxu0
    %1713 = vdwg.mxu0
    %v1714 = vadd.f32 %v1668, %v1565
    %v1715 = vxor.u32 %v1714, 2147483648
    %v1716 = vmul.f32 %v1715, 1.442695
    %v1717 = vpow.pop %v1716
    %v1718 = vadd.f32 %v1717, 1.0
    %v1719 = vrcp.pop %v1718
    %v1720 = vmul.f32 1.0, %v1719
    %v1721 = vadd.f32 %v1670, %v1604
    %v1722 = vxor.u32 %v1721, 2147483648
    %v1723 = vmul.f32 %v1722, 1.442695
    %v1724 = vpow.pop %v1723
    %v1725 = vadd.f32 %v1724, 1.0
    %v1726 = vrcp.pop %v1725
    %v1727 = vmul.f32 1.0, %v1726
    %v1728 = vadd.f32 %v1606, %v152
    %v1729 = vmul.f32 %v1720, %v1728
    %v1730 = vadd.f32 %v1709, %v1729
    %v1731 = vtanh.pop %v1730
    %v1732 = vsub.f32 1.0, %v1727
    %v1733 = vmul.f32 %v1732, %v1731
    %v1734 = vmul.f32 %v1727, %v1485
    %v1735 = vadd.f32 %v1733, %v1734
    %v1736 = vpack.c.bf16 %v1735, %v1735
    %1737 = vmatprep.subr.bf16.mxu0 %v886
    %1738 = vmatpush1.bf16.msra.mxu0 %v885
    %1739 = vmatprep.subr.bf16.mxu0 %v892
    %1740 = vmatpush1.bf16.msra.mxu0 %v891
    %1741 = vmatprep.subr.bf16.mxu0 %v898
    %1742 = vmatpush1.bf16.msra.mxu0 %v897
    %1743 = vmatprep.subr.bf16.mxu0 %v904
    %1744 = vmatpush1.bf16.msra.mxu0 %v903
    %1745 = vmatprep.subr.bf16.mxu0 %v910
    %1746 = vmatpush1.bf16.msra.mxu0 %v909
    %1747 = vmatprep.subr.bf16.mxu0 %v916
    %1748 = vmatpush1.bf16.msra.mxu0 %v915
    %1749 = vmatprep.subr.bf16.mxu0 %v922
    %1750 = vmatpush1.bf16.msra.mxu0 %v921
    %1751 = vmatprep.subr.bf16.mxu0 %v928
    %1752 = vmatpush1.bf16.msra.mxu0 %v927
    %1753 = vmatprep.subr.bf16.mxu0 %v934
    %1754 = vmatpush1.bf16.msra.mxu0 %v933
    %1755 = vmatprep.subr.bf16.mxu0 %v940
    %1756 = vmatpush1.bf16.msra.mxu0 %v939
    %1757 = vmatprep.subr.bf16.mxu0 %v946
    %1758 = vmatpush1.bf16.msra.mxu0 %v945
    %1759 = vmatprep.subr.bf16.mxu0 %v952
    %1760 = vmatpush1.bf16.msra.mxu0 %v951
    %1761 = vmatprep.subr.bf16.mxu0 %v958
    %1762 = vmatpush1.bf16.msra.mxu0 %v957
    %1763 = vmatprep.subr.bf16.mxu0 %v964
    %1764 = vmatpush1.bf16.msra.mxu0 %v963
    %1765 = vmatprep.subr.bf16.mxu0 %v970
    %1766 = vmatpush1.bf16.msra.mxu0 %v969
    %1767 = vmatprep.subr.bf16.mxu0 %v976
    %1768 = vmatpush1.bf16.msra.mxu0 %v975
    %1769 = vmatprep.mubr.bf16.mxu0 %v1736
    %1770 = vmatmul.mubr.bf16.gmra.mrb[0].mxu0 %v1632
    %v1771 = vpop.f32.mrb[0].mxu0
    %v1772 = vadd.f32 0.0, %v1771
    %v1773 = vpop.f32.mrb[0].mxu0
    %v1774 = vadd.f32 0.0, %v1773
    %v1775 = vpop.f32.mrb[0].mxu0
    %v1776 = vpop.f32.mrb[0].mxu0
    %1777 = vdwg.mxu0
    %1778 = vmatprep.subr.bf16.mxu0 %v888
    %1779 = vmatpush1.bf16.msra.mxu0 %v887
    %1780 = vmatprep.subr.bf16.mxu0 %v894
    %1781 = vmatpush1.bf16.msra.mxu0 %v893
    %1782 = vmatprep.subr.bf16.mxu0 %v900
    %1783 = vmatpush1.bf16.msra.mxu0 %v899
    %1784 = vmatprep.subr.bf16.mxu0 %v906
    %1785 = vmatpush1.bf16.msra.mxu0 %v905
    %1786 = vmatprep.subr.bf16.mxu0 %v912
    %1787 = vmatpush1.bf16.msra.mxu0 %v911
    %1788 = vmatprep.subr.bf16.mxu0 %v918
    %1789 = vmatpush1.bf16.msra.mxu0 %v917
    %1790 = vmatprep.subr.bf16.mxu0 %v924
    %1791 = vmatpush1.bf16.msra.mxu0 %v923
    %1792 = vmatprep.subr.bf16.mxu0 %v930
    %1793 = vmatpush1.bf16.msra.mxu0 %v929
    %1794 = vmatprep.subr.bf16.mxu0 %v936
    %1795 = vmatpush1.bf16.msra.mxu0 %v935
    %1796 = vmatprep.subr.bf16.mxu0 %v942
    %1797 = vmatpush1.bf16.msra.mxu0 %v941
    %1798 = vmatprep.subr.bf16.mxu0 %v948
    %1799 = vmatpush1.bf16.msra.mxu0 %v947
    %1800 = vmatprep.subr.bf16.mxu0 %v954
    %1801 = vmatpush1.bf16.msra.mxu0 %v953
    %1802 = vmatprep.subr.bf16.mxu0 %v960
    %1803 = vmatpush1.bf16.msra.mxu0 %v959
    %1804 = vmatprep.subr.bf16.mxu0 %v966
    %1805 = vmatpush1.bf16.msra.mxu0 %v965
    %1806 = vmatprep.subr.bf16.mxu0 %v972
    %1807 = vmatpush1.bf16.msra.mxu0 %v971
    %1808 = vmatprep.subr.bf16.mxu0 %v978
    %1809 = vmatpush1.bf16.msra.mxu0 %v977
    %1810 = vmatprep.mubr.bf16.mxu0 %v1736
    %1811 = vmatmul.mubr.bf16.gmra.mrb[0].mxu0 %v1632
    %v1812 = vpop.f32.mrb[0].mxu0
    %v1813 = vadd.f32 0.0, %v1812
    %v1814 = vpop.f32.mrb[0].mxu0
    %v1815 = vadd.f32 0.0, %v1814
    %v1816 = vpop.f32.mrb[0].mxu0
    %v1817 = vpop.f32.mrb[0].mxu0
    %1818 = vdwg.mxu0
    %1819 = vmatprep.subr.bf16.mxu0 %v890
    %1820 = vmatpush1.bf16.msra.mxu0 %v889
    %1821 = vmatprep.subr.bf16.mxu0 %v896
    %1822 = vmatpush1.bf16.msra.mxu0 %v895
    %1823 = vmatprep.subr.bf16.mxu0 %v902
    %1824 = vmatpush1.bf16.msra.mxu0 %v901
    %1825 = vmatprep.subr.bf16.mxu0 %v908
    %1826 = vmatpush1.bf16.msra.mxu0 %v907
    %1827 = vmatprep.subr.bf16.mxu0 %v914
    %1828 = vmatpush1.bf16.msra.mxu0 %v913
    %1829 = vmatprep.subr.bf16.mxu0 %v920
    %1830 = vmatpush1.bf16.msra.mxu0 %v919
    %1831 = vmatprep.subr.bf16.mxu0 %v926
    %1832 = vmatpush1.bf16.msra.mxu0 %v925
    %1833 = vmatprep.subr.bf16.mxu0 %v932
    %1834 = vmatpush1.bf16.msra.mxu0 %v931
    %1835 = vmatprep.subr.bf16.mxu0 %v938
    %1836 = vmatpush1.bf16.msra.mxu0 %v937
    %1837 = vmatprep.subr.bf16.mxu0 %v944
    %1838 = vmatpush1.bf16.msra.mxu0 %v943
    %1839 = vmatprep.subr.bf16.mxu0 %v950
    %1840 = vmatpush1.bf16.msra.mxu0 %v949
    %1841 = vmatprep.subr.bf16.mxu0 %v956
    %1842 = vmatpush1.bf16.msra.mxu0 %v955
    %1843 = vmatprep.subr.bf16.mxu0 %v962
    %1844 = vmatpush1.bf16.msra.mxu0 %v961
    %1845 = vmatprep.subr.bf16.mxu0 %v968
    %1846 = vmatpush1.bf16.msra.mxu0 %v967
    %1847 = vmatprep.subr.bf16.mxu0 %v974
    %1848 = vmatpush1.bf16.msra.mxu0 %v973
    %1849 = vmatprep.subr.bf16.mxu0 %v980
    %1850 = vmatpush1.bf16.msra.mxu0 %v979
    %1851 = vmatprep.mubr.bf16.mxu0 %v1736
    %1852 = vmatmul.mubr.bf16.gmra.mrb[0].mxu0 %v1632
    %v1853 = vpop.f32.mrb[0].mxu0
    %v1854 = vadd.f32 0.0, %v1853
    %v1855 = vpop.f32.mrb[0].mxu0
    %v1856 = vadd.f32 0.0, %v1855
    %v1857 = vpop.f32.mrb[0].mxu0
    %v1858 = vpop.f32.mrb[0].mxu0
    %1859 = vdwg.mxu0
    %v1860 = vadd.f32 %v407, %v1772
    %v1861 = vxor.u32 %v1860, 2147483648
    %v1862 = vmul.f32 %v1861, 1.442695
    %v1863 = vpow.pop %v1862
    %v1864 = vadd.f32 %v1863, 1.0
    %v1865 = vrcp.pop %v1864
    %v1866 = vmul.f32 1.0, %v1865
    %v1867 = vadd.f32 %v409, %v1774
    %v1868 = vxor.u32 %v1867, 2147483648
    %v1869 = vmul.f32 %v1868, 1.442695
    %v1870 = vpow.pop %v1869
    %v1871 = vadd.f32 %v1870, 1.0
    %v1872 = vrcp.pop %v1871
    %v1873 = vmul.f32 1.0, %v1872
    %v1874 = vadd.f32 %v1813, %v148
    %v1875 = vmul.f32 %v1866, %v1874
    %v1876 = vadd.f32 %v478, %v1875
    %v1877 = vtanh.pop %v1876
    %v1878 = vsub.f32 1.0, %v1873
    %v1879 = vmul.f32 %v1878, %v1877
    %v1880 = vmul.f32 %v1873, %v1631
    %v1881 = vadd.f32 %v1879, %v1880
    %v1882 = vpack.c.bf16 %v1881, %v1881
    %1883 = vmatprep.subr.bf16.mxu0 %v1336
    %1884 = vmatpush1.bf16.msra.mxu0 %v1335
    %1885 = vmatprep.subr.bf16.mxu0 %v1339
    %1886 = vmatpush1.bf16.msra.mxu0 %v1338
    %1887 = vmatprep.subr.bf16.mxu0 %v1342
    %1888 = vmatpush1.bf16.msra.mxu0 %v1341
    %1889 = vmatprep.subr.bf16.mxu0 %v1345
    %1890 = vmatpush1.bf16.msra.mxu0 %v1344
    %1891 = vmatprep.subr.bf16.mxu0 %v1348
    %1892 = vmatpush1.bf16.msra.mxu0 %v1347
    %1893 = vmatprep.subr.bf16.mxu0 %v1351
    %1894 = vmatpush1.bf16.msra.mxu0 %v1350
    %1895 = vmatprep.subr.bf16.mxu0 %v1354
    %1896 = vmatpush1.bf16.msra.mxu0 %v1353
    %1897 = vmatprep.subr.bf16.mxu0 %v1357
    %1898 = vmatpush1.bf16.msra.mxu0 %v1356
    %1899 = vmatprep.subr.bf16.mxu0 0
    %1900 = vmatpush1.bf16.msra.mxu0 0
    %1901 = vmatprep.subr.bf16.mxu0 0
    %1902 = vmatpush1.bf16.msra.mxu0 0
    %1903 = vmatprep.subr.bf16.mxu0 0
    %1904 = vmatpush1.bf16.msra.mxu0 0
    %1905 = vmatprep.subr.bf16.mxu0 0
    %1906 = vmatpush1.bf16.msra.mxu0 0
    %1907 = vmatprep.subr.bf16.mxu0 0
    %1908 = vmatpush1.bf16.msra.mxu0 0
    %1909 = vmatprep.subr.bf16.mxu0 0
    %1910 = vmatpush1.bf16.msra.mxu0 0
    %1911 = vmatprep.subr.bf16.mxu0 0
    %1912 = vmatpush1.bf16.msra.mxu0 0
    %1913 = vmatprep.subr.bf16.mxu0 0
    %1914 = vmatpush1.bf16.msra.mxu0 0
    %1915 = vmatprep.mubr.bf16.mxu0 0
    %1916 = vmatmul.mubr.bf16.gmra.mrb[0].mxu0 %v1882
    %v1917 = vpop.f32.mrb[0].mxu0
    %v1918 = vadd.f32 %v149, %v1917
    %v1919 = vpop.f32.mrb[0].mxu0
    %v1920 = vadd.f32 %v150, %v1919
    %v1921 = vpop.f32.mrb[0].mxu0
    %v1922 = vpop.f32.mrb[0].mxu0
    %1923 = vdwg.mxu0
    %1924 = vmatprep.subr.bf16.mxu0 0
    %1925 = vmatpush1.bf16.msra.mxu0 %v1337
    %1926 = vmatprep.subr.bf16.mxu0 0
    %1927 = vmatpush1.bf16.msra.mxu0 %v1340
    %1928 = vmatprep.subr.bf16.mxu0 0
    %1929 = vmatpush1.bf16.msra.mxu0 %v1343
    %1930 = vmatprep.subr.bf16.mxu0 0
    %1931 = vmatpush1.bf16.msra.mxu0 %v1346
    %1932 = vmatprep.subr.bf16.mxu0 0
    %1933 = vmatpush1.bf16.msra.mxu0 %v1349
    %1934 = vmatprep.subr.bf16.mxu0 0
    %1935 = vmatpush1.bf16.msra.mxu0 %v1352
    %1936 = vmatprep.subr.bf16.mxu0 0
    %1937 = vmatpush1.bf16.msra.mxu0 %v1355
    %1938 = vmatprep.subr.bf16.mxu0 0
    %1939 = vmatpush1.bf16.msra.mxu0 %v1358
    %1940 = vmatprep.subr.bf16.mxu0 0
    %1941 = vmatpush1.bf16.msra.mxu0 0
    %1942 = vmatprep.subr.bf16.mxu0 0
    %1943 = vmatpush1.bf16.msra.mxu0 0
    %1944 = vmatprep.subr.bf16.mxu0 0
    %1945 = vmatpush1.bf16.msra.mxu0 0
    %1946 = vmatprep.subr.bf16.mxu0 0
    %1947 = vmatpush1.bf16.msra.mxu0 0
    %1948 = vmatprep.subr.bf16.mxu0 0
    %1949 = vmatpush1.bf16.msra.mxu0 0
    %1950 = vmatprep.subr.bf16.mxu0 0
    %1951 = vmatpush1.bf16.msra.mxu0 0
    %1952 = vmatprep.subr.bf16.mxu0 0
    %1953 = vmatpush1.bf16.msra.mxu0 0
    %1954 = vmatprep.subr.bf16.mxu0 0
    %1955 = vmatpush1.bf16.msra.mxu0 0
    %1956 = vmatprep.mubr.bf16.mxu0 0
    %1957 = vmatmul.mubr.bf16.gmra.mrb[0].mxu0 %v1882
    %v1958 = vpop.f32.mrb[0].mxu0
    %v1959 = vadd.f32 %v151, %v1958
    %v1960 = vpop.f32.mrb[0].mxu0
    %v1961 = vpop.f32.mrb[0].mxu0
    %v1962 = vpop.f32.mrb[0].mxu0
    %1963 = vdwg.mxu0
    %v1964 = vadd.f32 %v1918, %v1815
    %v1965 = vxor.u32 %v1964, 2147483648
    %v1966 = vmul.f32 %v1965, 1.442695
    %v1967 = vpow.pop %v1966
    %v1968 = vadd.f32 %v1967, 1.0
    %v1969 = vrcp.pop %v1968
    %v1970 = vmul.f32 1.0, %v1969
    %v1971 = vadd.f32 %v1920, %v1854
    %v1972 = vxor.u32 %v1971, 2147483648
    %v1973 = vmul.f32 %v1972, 1.442695
    %v1974 = vpow.pop %v1973
    %v1975 = vadd.f32 %v1974, 1.0
    %v1976 = vrcp.pop %v1975
    %v1977 = vmul.f32 1.0, %v1976
    %v1978 = vadd.f32 %v1856, %v152
    %v1979 = vmul.f32 %v1970, %v1978
    %v1980 = vadd.f32 %v1959, %v1979
    %v1981 = vtanh.pop %v1980
    %v1982 = vsub.f32 1.0, %v1977
    %v1983 = vmul.f32 %v1982, %v1981
    %v1984 = vmul.f32 %v1977, %v1735
    %v1985 = vadd.f32 %v1983, %v1984
    %v1986 = vpack.c.bf16 %v1985, %v1985
    %1987 = vmatprep.subr.bf16.mxu0 %v886
    %1988 = vmatpush1.bf16.msra.mxu0 %v885
    %1989 = vmatprep.subr.bf16.mxu0 %v892
    %1990 = vmatpush1.bf16.msra.mxu0 %v891
    %1991 = vmatprep.subr.bf16.mxu0 %v898
    %1992 = vmatpush1.bf16.msra.mxu0 %v897
    %1993 = vmatprep.subr.bf16.mxu0 %v904
    %1994 = vmatpush1.bf16.msra.mxu0 %v903
    %1995 = vmatprep.subr.bf16.mxu0 %v910
    %1996 = vmatpush1.bf16.msra.mxu0 %v909
    %1997 = vmatprep.subr.bf16.mxu0 %v916
    %1998 = vmatpush1.bf16.msra.mxu0 %v915
    %1999 = vmatprep.subr.bf16.mxu0 %v922
    %2000 = vmatpush1.bf16.msra.mxu0 %v921
    %2001 = vmatprep.subr.bf16.mxu0 %v928
    %2002 = vmatpush1.bf16.msra.mxu0 %v927
    %2003 = vmatprep.subr.bf16.mxu0 %v934
    %2004 = vmatpush1.bf16.msra.mxu0 %v933
    %2005 = vmatprep.subr.bf16.mxu0 %v940
    %2006 = vmatpush1.bf16.msra.mxu0 %v939
    %2007 = vmatprep.subr.bf16.mxu0 %v946
    %2008 = vmatpush1.bf16.msra.mxu0 %v945
    %2009 = vmatprep.subr.bf16.mxu0 %v952
    %2010 = vmatpush1.bf16.msra.mxu0 %v951
    %2011 = vmatprep.subr.bf16.mxu0 %v958
    %2012 = vmatpush1.bf16.msra.mxu0 %v957
    %2013 = vmatprep.subr.bf16.mxu0 %v964
    %2014 = vmatpush1.bf16.msra.mxu0 %v963
    %2015 = vmatprep.subr.bf16.mxu0 %v970
    %2016 = vmatpush1.bf16.msra.mxu0 %v969
    %2017 = vmatprep.subr.bf16.mxu0 %v976
    %2018 = vmatpush1.bf16.msra.mxu0 %v975
    %2019 = vmatprep.mubr.bf16.mxu0 %v1986
    %2020 = vmatmul.mubr.bf16.gmra.mrb[0].mxu0 %v1882
    %v2021 = vpop.f32.mrb[0].mxu0
    %v2022 = vadd.f32 0.0, %v2021
    %v2023 = vpop.f32.mrb[0].mxu0
    %v2024 = vadd.f32 0.0, %v2023
    %v2025 = vpop.f32.mrb[0].mxu0
    %v2026 = vpop.f32.mrb[0].mxu0
    %2027 = vdwg.mxu0
    %2028 = vmatprep.subr.bf16.mxu0 %v888
    %2029 = vmatpush1.bf16.msra.mxu0 %v887
    %2030 = vmatprep.subr.bf16.mxu0 %v894
    %2031 = vmatpush1.bf16.msra.mxu0 %v893
    %2032 = vmatprep.subr.bf16.mxu0 %v900
    %2033 = vmatpush1.bf16.msra.mxu0 %v899
    %2034 = vmatprep.subr.bf16.mxu0 %v906
    %2035 = vmatpush1.bf16.msra.mxu0 %v905
    %2036 = vmatprep.subr.bf16.mxu0 %v912
    %2037 = vmatpush1.bf16.msra.mxu0 %v911
    %2038 = vmatprep.subr.bf16.mxu0 %v918
    %2039 = vmatpush1.bf16.msra.mxu0 %v917
    %2040 = vmatprep.subr.bf16.mxu0 %v924
    %2041 = vmatpush1.bf16.msra.mxu0 %v923
    %2042 = vmatprep.subr.bf16.mxu0 %v930
    %2043 = vmatpush1.bf16.msra.mxu0 %v929
    %2044 = vmatprep.subr.bf16.mxu0 %v936
    %2045 = vmatpush1.bf16.msra.mxu0 %v935
    %2046 = vmatprep.subr.bf16.mxu0 %v942
    %2047 = vmatpush1.bf16.msra.mxu0 %v941
    %2048 = vmatprep.subr.bf16.mxu0 %v948
    %2049 = vmatpush1.bf16.msra.mxu0 %v947
    %2050 = vmatprep.subr.bf16.mxu0 %v954
    %2051 = vmatpush1.bf16.msra.mxu0 %v953
    %2052 = vmatprep.subr.bf16.mxu0 %v960
    %2053 = vmatpush1.bf16.msra.mxu0 %v959
    %2054 = vmatprep.subr.bf16.mxu0 %v966
    %2055 = vmatpush1.bf16.msra.mxu0 %v965
    %2056 = vmatprep.subr.bf16.mxu0 %v972
    %2057 = vmatpush1.bf16.msra.mxu0 %v971
    %2058 = vmatprep.subr.bf16.mxu0 %v978
    %2059 = vmatpush1.bf16.msra.mxu0 %v977
    %2060 = vmatprep.mubr.bf16.mxu0 %v1986
    %2061 = vmatmul.mubr.bf16.gmra.mrb[0].mxu0 %v1882
    %v2062 = vpop.f32.mrb[0].mxu0
    %v2063 = vadd.f32 0.0, %v2062
    %v2064 = vpop.f32.mrb[0].mxu0
    %v2065 = vadd.f32 0.0, %v2064
    %v2066 = vpop.f32.mrb[0].mxu0
    %v2067 = vpop.f32.mrb[0].mxu0
    %2068 = vdwg.mxu0
    %2069 = vmatprep.subr.bf16.mxu0 %v890
    %2070 = vmatpush1.bf16.msra.mxu0 %v889
    %2071 = vmatprep.subr.bf16.mxu0 %v896
    %2072 = vmatpush1.bf16.msra.mxu0 %v895
    %2073 = vmatprep.subr.bf16.mxu0 %v902
    %2074 = vmatpush1.bf16.msra.mxu0 %v901
    %2075 = vmatprep.subr.bf16.mxu0 %v908
    %2076 = vmatpush1.bf16.msra.mxu0 %v907
    %2077 = vmatprep.subr.bf16.mxu0 %v914
    %2078 = vmatpush1.bf16.msra.mxu0 %v913
    %2079 = vmatprep.subr.bf16.mxu0 %v920
    %2080 = vmatpush1.bf16.msra.mxu0 %v919
    %2081 = vmatprep.subr.bf16.mxu0 %v926
    %2082 = vmatpush1.bf16.msra.mxu0 %v925
    %2083 = vmatprep.subr.bf16.mxu0 %v932
    %2084 = vmatpush1.bf16.msra.mxu0 %v931
    %2085 = vmatprep.subr.bf16.mxu0 %v938
    %2086 = vmatpush1.bf16.msra.mxu0 %v937
    %2087 = vmatprep.subr.bf16.mxu0 %v944
    %2088 = vmatpush1.bf16.msra.mxu0 %v943
    %2089 = vmatprep.subr.bf16.mxu0 %v950
    %2090 = vmatpush1.bf16.msra.mxu0 %v949
    %2091 = vmatprep.subr.bf16.mxu0 %v956
    %2092 = vmatpush1.bf16.msra.mxu0 %v955
    %2093 = vmatprep.subr.bf16.mxu0 %v962
    %2094 = vmatpush1.bf16.msra.mxu0 %v961
    %2095 = vmatprep.subr.bf16.mxu0 %v968
    %2096 = vmatpush1.bf16.msra.mxu0 %v967
    %2097 = vmatprep.subr.bf16.mxu0 %v974
    %2098 = vmatpush1.bf16.msra.mxu0 %v973
    %2099 = vmatprep.subr.bf16.mxu0 %v980
    %2100 = vmatpush1.bf16.msra.mxu0 %v979
    %2101 = vmatprep.mubr.bf16.mxu0 %v1986
    %2102 = vmatmul.mubr.bf16.gmra.mrb[0].mxu0 %v1882
    %v2103 = vpop.f32.mrb[0].mxu0
    %v2104 = vadd.f32 0.0, %v2103
    %v2105 = vpop.f32.mrb[0].mxu0
    %v2106 = vadd.f32 0.0, %v2105
    %v2107 = vpop.f32.mrb[0].mxu0
    %v2108 = vpop.f32.mrb[0].mxu0
    %2109 = vdwg.mxu0
    %v2110 = vadd.f32 %v411, %v2022
    %v2111 = vxor.u32 %v2110, 2147483648
    %v2112 = vmul.f32 %v2111, 1.442695
    %v2113 = vpow.pop %v2112
    %v2114 = vadd.f32 %v2113, 1.0
    %v2115 = vrcp.pop %v2114
    %v2116 = vmul.f32 1.0, %v2115
    %v2117 = vadd.f32 %v413, %v2024
    %v2118 = vxor.u32 %v2117, 2147483648
    %v2119 = vmul.f32 %v2118, 1.442695
    %v2120 = vpow.pop %v2119
    %v2121 = vadd.f32 %v2120, 1.0
    %v2122 = vrcp.pop %v2121
    %v2123 = vmul.f32 1.0, %v2122
    %v2124 = vadd.f32 %v2063, %v148
    %v2125 = vmul.f32 %v2116, %v2124
    %v2126 = vadd.f32 %v481, %v2125
    %v2127 = vtanh.pop %v2126
    %v2128 = vsub.f32 1.0, %v2123
    %v2129 = vmul.f32 %v2128, %v2127
    %v2130 = vmul.f32 %v2123, %v1881
    %v2131 = vadd.f32 %v2129, %v2130
    %v2132 = vpack.c.bf16 %v2131, %v2131
    %2133 = vmatprep.subr.bf16.mxu0 %v1336
    %2134 = vmatpush1.bf16.msra.mxu0 %v1335
    %2135 = vmatprep.subr.bf16.mxu0 %v1339
    %2136 = vmatpush1.bf16.msra.mxu0 %v1338
    %2137 = vmatprep.subr.bf16.mxu0 %v1342
    %2138 = vmatpush1.bf16.msra.mxu0 %v1341
    %2139 = vmatprep.subr.bf16.mxu0 %v1345
    %2140 = vmatpush1.bf16.msra.mxu0 %v1344
    %2141 = vmatprep.subr.bf16.mxu0 %v1348
    %2142 = vmatpush1.bf16.msra.mxu0 %v1347
    %2143 = vmatprep.subr.bf16.mxu0 %v1351
    %2144 = vmatpush1.bf16.msra.mxu0 %v1350
    %2145 = vmatprep.subr.bf16.mxu0 %v1354
    %2146 = vmatpush1.bf16.msra.mxu0 %v1353
    %2147 = vmatprep.subr.bf16.mxu0 %v1357
    %2148 = vmatpush1.bf16.msra.mxu0 %v1356
    %2149 = vmatprep.subr.bf16.mxu0 0
    %2150 = vmatpush1.bf16.msra.mxu0 0
    %2151 = vmatprep.subr.bf16.mxu0 0
    %2152 = vmatpush1.bf16.msra.mxu0 0
    %2153 = vmatprep.subr.bf16.mxu0 0
    %2154 = vmatpush1.bf16.msra.mxu0 0
    %2155 = vmatprep.subr.bf16.mxu0 0
    %2156 = vmatpush1.bf16.msra.mxu0 0
    %2157 = vmatprep.subr.bf16.mxu0 0
    %2158 = vmatpush1.bf16.msra.mxu0 0
    %2159 = vmatprep.subr.bf16.mxu0 0
    %2160 = vmatpush1.bf16.msra.mxu0 0
    %2161 = vmatprep.subr.bf16.mxu0 0
    %2162 = vmatpush1.bf16.msra.mxu0 0
    %2163 = vmatprep.subr.bf16.mxu0 0
    %2164 = vmatpush1.bf16.msra.mxu0 0
    %2165 = vmatprep.mubr.bf16.mxu0 0
    %2166 = vmatmul.mubr.bf16.gmra.mrb[0].mxu0 %v2132
    %v2167 = vpop.f32.mrb[0].mxu0
    %v2168 = vadd.f32 %v149, %v2167
    %v2169 = vpop.f32.mrb[0].mxu0
    %v2170 = vadd.f32 %v150, %v2169
    %v2171 = vpop.f32.mrb[0].mxu0
    %v2172 = vpop.f32.mrb[0].mxu0
    %2173 = vdwg.mxu0
    %2174 = vmatprep.subr.bf16.mxu0 0
    %2175 = vmatpush1.bf16.msra.mxu0 %v1337
    %2176 = vmatprep.subr.bf16.mxu0 0
    %2177 = vmatpush1.bf16.msra.mxu0 %v1340
    %2178 = vmatprep.subr.bf16.mxu0 0
    %2179 = vmatpush1.bf16.msra.mxu0 %v1343
    %2180 = vmatprep.subr.bf16.mxu0 0
    %2181 = vmatpush1.bf16.msra.mxu0 %v1346
    %2182 = vmatprep.subr.bf16.mxu0 0
    %2183 = vmatpush1.bf16.msra.mxu0 %v1349
    %2184 = vmatprep.subr.bf16.mxu0 0
    %2185 = vmatpush1.bf16.msra.mxu0 %v1352
    %2186 = vmatprep.subr.bf16.mxu0 0
    %2187 = vmatpush1.bf16.msra.mxu0 %v1355
    %2188 = vmatprep.subr.bf16.mxu0 0
    %2189 = vmatpush1.bf16.msra.mxu0 %v1358
    %2190 = vmatprep.subr.bf16.mxu0 0
    %2191 = vmatpush1.bf16.msra.mxu0 0
    %2192 = vmatprep.subr.bf16.mxu0 0
    %2193 = vmatpush1.bf16.msra.mxu0 0
    %2194 = vmatprep.subr.bf16.mxu0 0
    %2195 = vmatpush1.bf16.msra.mxu0 0
    %2196 = vmatprep.subr.bf16.mxu0 0
    %2197 = vmatpush1.bf16.msra.mxu0 0
    %2198 = vmatprep.subr.bf16.mxu0 0
    %2199 = vmatpush1.bf16.msra.mxu0 0
    %2200 = vmatprep.subr.bf16.mxu0 0
    %2201 = vmatpush1.bf16.msra.mxu0 0
    %2202 = vmatprep.subr.bf16.mxu0 0
    %2203 = vmatpush1.bf16.msra.mxu0 0
    %2204 = vmatprep.subr.bf16.mxu0 0
    %2205 = vmatpush1.bf16.msra.mxu0 0
    %2206 = vmatprep.mubr.bf16.mxu0 0
    %2207 = vmatmul.mubr.bf16.gmra.mrb[0].mxu0 %v2132
    %v2208 = vpop.f32.mrb[0].mxu0
    %v2209 = vadd.f32 %v151, %v2208
    %v2210 = vpop.f32.mrb[0].mxu0
    %v2211 = vpop.f32.mrb[0].mxu0
    %v2212 = vpop.f32.mrb[0].mxu0
    %2213 = vdwg.mxu0
    %v2214 = vadd.f32 %v2168, %v2065
    %v2215 = vxor.u32 %v2214, 2147483648
    %v2216 = vmul.f32 %v2215, 1.442695
    %v2217 = vpow.pop %v2216
    %v2218 = vadd.f32 %v2217, 1.0
    %v2219 = vrcp.pop %v2218
    %v2220 = vmul.f32 1.0, %v2219
    %v2221 = vadd.f32 %v2170, %v2104
    %v2222 = vxor.u32 %v2221, 2147483648
    %v2223 = vmul.f32 %v2222, 1.442695
    %v2224 = vpow.pop %v2223
    %v2225 = vadd.f32 %v2224, 1.0
    %v2226 = vrcp.pop %v2225
    %v2227 = vmul.f32 1.0, %v2226
    %v2228 = vadd.f32 %v2106, %v152
    %v2229 = vmul.f32 %v2220, %v2228
    %v2230 = vadd.f32 %v2209, %v2229
    %v2231 = vtanh.pop %v2230
    %v2232 = vsub.f32 1.0, %v2227
    %v2233 = vmul.f32 %v2232, %v2231
    %v2234 = vmul.f32 %v2227, %v1985
    %v2235 = vadd.f32 %v2233, %v2234
    %v2236 = vpack.c.bf16 %v2235, %v2235
    %2237 = vmatprep.subr.bf16.mxu0 %v886
    %2238 = vmatpush1.bf16.msra.mxu0 %v885
    %2239 = vmatprep.subr.bf16.mxu0 %v892
    %2240 = vmatpush1.bf16.msra.mxu0 %v891
    %2241 = vmatprep.subr.bf16.mxu0 %v898
    %2242 = vmatpush1.bf16.msra.mxu0 %v897
    %2243 = vmatprep.subr.bf16.mxu0 %v904
    %2244 = vmatpush1.bf16.msra.mxu0 %v903
    %2245 = vmatprep.subr.bf16.mxu0 %v910
    %2246 = vmatpush1.bf16.msra.mxu0 %v909
    %2247 = vmatprep.subr.bf16.mxu0 %v916
    %2248 = vmatpush1.bf16.msra.mxu0 %v915
    %2249 = vmatprep.subr.bf16.mxu0 %v922
    %2250 = vmatpush1.bf16.msra.mxu0 %v921
    %2251 = vmatprep.subr.bf16.mxu0 %v928
    %2252 = vmatpush1.bf16.msra.mxu0 %v927
    %2253 = vmatprep.subr.bf16.mxu0 %v934
    %2254 = vmatpush1.bf16.msra.mxu0 %v933
    %2255 = vmatprep.subr.bf16.mxu0 %v940
    %2256 = vmatpush1.bf16.msra.mxu0 %v939
    %2257 = vmatprep.subr.bf16.mxu0 %v946
    %2258 = vmatpush1.bf16.msra.mxu0 %v945
    %2259 = vmatprep.subr.bf16.mxu0 %v952
    %2260 = vmatpush1.bf16.msra.mxu0 %v951
    %2261 = vmatprep.subr.bf16.mxu0 %v958
    %2262 = vmatpush1.bf16.msra.mxu0 %v957
    %2263 = vmatprep.subr.bf16.mxu0 %v964
    %2264 = vmatpush1.bf16.msra.mxu0 %v963
    %2265 = vmatprep.subr.bf16.mxu0 %v970
    %2266 = vmatpush1.bf16.msra.mxu0 %v969
    %2267 = vmatprep.subr.bf16.mxu0 %v976
    %2268 = vmatpush1.bf16.msra.mxu0 %v975
    %2269 = vmatprep.mubr.bf16.mxu0 %v2236
    %2270 = vmatmul.mubr.bf16.gmra.mrb[0].mxu0 %v2132
    %v2271 = vpop.f32.mrb[0].mxu0
    %v2272 = vadd.f32 0.0, %v2271
    %v2273 = vpop.f32.mrb[0].mxu0
    %v2274 = vadd.f32 0.0, %v2273
    %v2275 = vpop.f32.mrb[0].mxu0
    %v2276 = vpop.f32.mrb[0].mxu0
    %2277 = vdwg.mxu0
    %2278 = vmatprep.subr.bf16.mxu0 %v888
    %2279 = vmatpush1.bf16.msra.mxu0 %v887
    %2280 = vmatprep.subr.bf16.mxu0 %v894
    %2281 = vmatpush1.bf16.msra.mxu0 %v893
    %2282 = vmatprep.subr.bf16.mxu0 %v900
    %2283 = vmatpush1.bf16.msra.mxu0 %v899
    %2284 = vmatprep.subr.bf16.mxu0 %v906
    %2285 = vmatpush1.bf16.msra.mxu0 %v905
    %2286 = vmatprep.subr.bf16.mxu0 %v912
    %2287 = vmatpush1.bf16.msra.mxu0 %v911
    %2288 = vmatprep.subr.bf16.mxu0 %v918
    %2289 = vmatpush1.bf16.msra.mxu0 %v917
    %2290 = vmatprep.subr.bf16.mxu0 %v924
    %2291 = vmatpush1.bf16.msra.mxu0 %v923
    %2292 = vmatprep.subr.bf16.mxu0 %v930
    %2293 = vmatpush1.bf16.msra.mxu0 %v929
    %2294 = vmatprep.subr.bf16.mxu0 %v936
    %2295 = vmatpush1.bf16.msra.mxu0 %v935
    %2296 = vmatprep.subr.bf16.mxu0 %v942
    %2297 = vmatpush1.bf16.msra.mxu0 %v941
    %2298 = vmatprep.subr.bf16.mxu0 %v948
    %2299 = vmatpush1.bf16.msra.mxu0 %v947
    %2300 = vmatprep.subr.bf16.mxu0 %v954
    %2301 = vmatpush1.bf16.msra.mxu0 %v953
    %2302 = vmatprep.subr.bf16.mxu0 %v960
    %2303 = vmatpush1.bf16.msra.mxu0 %v959
    %2304 = vmatprep.subr.bf16.mxu0 %v966
    %2305 = vmatpush1.bf16.msra.mxu0 %v965
    %2306 = vmatprep.subr.bf16.mxu0 %v972
    %2307 = vmatpush1.bf16.msra.mxu0 %v971
    %2308 = vmatprep.subr.bf16.mxu0 %v978
    %2309 = vmatpush1.bf16.msra.mxu0 %v977
    %2310 = vmatprep.mubr.bf16.mxu0 %v2236
    %2311 = vmatmul.mubr.bf16.gmra.mrb[0].mxu0 %v2132
    %v2312 = vpop.f32.mrb[0].mxu0
    %v2313 = vadd.f32 0.0, %v2312
    %v2314 = vpop.f32.mrb[0].mxu0
    %v2315 = vadd.f32 0.0, %v2314
    %v2316 = vpop.f32.mrb[0].mxu0
    %v2317 = vpop.f32.mrb[0].mxu0
    %2318 = vdwg.mxu0
    %2319 = vmatprep.subr.bf16.mxu0 %v890
    %2320 = vmatpush1.bf16.msra.mxu0 %v889
    %2321 = vmatprep.subr.bf16.mxu0 %v896
    %2322 = vmatpush1.bf16.msra.mxu0 %v895
    %2323 = vmatprep.subr.bf16.mxu0 %v902
    %2324 = vmatpush1.bf16.msra.mxu0 %v901
    %2325 = vmatprep.subr.bf16.mxu0 %v908
    %2326 = vmatpush1.bf16.msra.mxu0 %v907
    %2327 = vmatprep.subr.bf16.mxu0 %v914
    %2328 = vmatpush1.bf16.msra.mxu0 %v913
    %2329 = vmatprep.subr.bf16.mxu0 %v920
    %2330 = vmatpush1.bf16.msra.mxu0 %v919
    %2331 = vmatprep.subr.bf16.mxu0 %v926
    %2332 = vmatpush1.bf16.msra.mxu0 %v925
    %2333 = vmatprep.subr.bf16.mxu0 %v932
    %2334 = vmatpush1.bf16.msra.mxu0 %v931
    %2335 = vmatprep.subr.bf16.mxu0 %v938
    %2336 = vmatpush1.bf16.msra.mxu0 %v937
    %2337 = vmatprep.subr.bf16.mxu0 %v944
    %2338 = vmatpush1.bf16.msra.mxu0 %v943
    %2339 = vmatprep.subr.bf16.mxu0 %v950
    %2340 = vmatpush1.bf16.msra.mxu0 %v949
    %2341 = vmatprep.subr.bf16.mxu0 %v956
    %2342 = vmatpush1.bf16.msra.mxu0 %v955
    %2343 = vmatprep.subr.bf16.mxu0 %v962
    %2344 = vmatpush1.bf16.msra.mxu0 %v961
    %2345 = vmatprep.subr.bf16.mxu0 %v968
    %2346 = vmatpush1.bf16.msra.mxu0 %v967
    %2347 = vmatprep.subr.bf16.mxu0 %v974
    %2348 = vmatpush1.bf16.msra.mxu0 %v973
    %2349 = vmatprep.subr.bf16.mxu0 %v980
    %2350 = vmatpush1.bf16.msra.mxu0 %v979
    %2351 = vmatprep.mubr.bf16.mxu0 %v2236
    %2352 = vmatmul.mubr.bf16.gmra.mrb[0].mxu0 %v2132
    %v2353 = vpop.f32.mrb[0].mxu0
    %v2354 = vadd.f32 0.0, %v2353
    %v2355 = vpop.f32.mrb[0].mxu0
    %v2356 = vadd.f32 0.0, %v2355
    %v2357 = vpop.f32.mrb[0].mxu0
    %v2358 = vpop.f32.mrb[0].mxu0
    %2359 = vdwg.mxu0
    %v2360 = vadd.f32 %v417, %v2272
    %v2361 = vxor.u32 %v2360, 2147483648
    %v2362 = vmul.f32 %v2361, 1.442695
    %v2363 = vpow.pop %v2362
    %v2364 = vadd.f32 %v2363, 1.0
    %v2365 = vrcp.pop %v2364
    %v2366 = vmul.f32 1.0, %v2365
    %v2367 = vadd.f32 %v419, %v2274
    %v2368 = vxor.u32 %v2367, 2147483648
    %v2369 = vmul.f32 %v2368, 1.442695
    %v2370 = vpow.pop %v2369
    %v2371 = vadd.f32 %v2370, 1.0
    %v2372 = vrcp.pop %v2371
    %v2373 = vmul.f32 1.0, %v2372
    %v2374 = vadd.f32 %v2313, %v148
    %v2375 = vmul.f32 %v2366, %v2374
    %v2376 = vadd.f32 %v486, %v2375
    %v2377 = vtanh.pop %v2376
    %v2378 = vsub.f32 1.0, %v2373
    %v2379 = vmul.f32 %v2378, %v2377
    %v2380 = vmul.f32 %v2373, %v2131
    %v2381 = vadd.f32 %v2379, %v2380
    %v2382 = vpack.c.bf16 %v2381, %v2381
    %2383 = vmatprep.subr.bf16.mxu0 %v1336
    %2384 = vmatpush1.bf16.msra.mxu0 %v1335
    %2385 = vmatprep.subr.bf16.mxu0 %v1339
    %2386 = vmatpush1.bf16.msra.mxu0 %v1338
    %2387 = vmatprep.subr.bf16.mxu0 %v1342
    %2388 = vmatpush1.bf16.msra.mxu0 %v1341
    %2389 = vmatprep.subr.bf16.mxu0 %v1345
    %2390 = vmatpush1.bf16.msra.mxu0 %v1344
    %2391 = vmatprep.subr.bf16.mxu0 %v1348
    %2392 = vmatpush1.bf16.msra.mxu0 %v1347
    %2393 = vmatprep.subr.bf16.mxu0 %v1351
    %2394 = vmatpush1.bf16.msra.mxu0 %v1350
    %2395 = vmatprep.subr.bf16.mxu0 %v1354
    %2396 = vmatpush1.bf16.msra.mxu0 %v1353
    %2397 = vmatprep.subr.bf16.mxu0 %v1357
    %2398 = vmatpush1.bf16.msra.mxu0 %v1356
    %2399 = vmatprep.subr.bf16.mxu0 0
    %2400 = vmatpush1.bf16.msra.mxu0 0
    %2401 = vmatprep.subr.bf16.mxu0 0
    %2402 = vmatpush1.bf16.msra.mxu0 0
    %2403 = vmatprep.subr.bf16.mxu0 0
    %2404 = vmatpush1.bf16.msra.mxu0 0
    %2405 = vmatprep.subr.bf16.mxu0 0
    %2406 = vmatpush1.bf16.msra.mxu0 0
    %2407 = vmatprep.subr.bf16.mxu0 0
    %2408 = vmatpush1.bf16.msra.mxu0 0
    %2409 = vmatprep.subr.bf16.mxu0 0
    %2410 = vmatpush1.bf16.msra.mxu0 0
    %2411 = vmatprep.subr.bf16.mxu0 0
    %2412 = vmatpush1.bf16.msra.mxu0 0
    %2413 = vmatprep.subr.bf16.mxu0 0
    %2414 = vmatpush1.bf16.msra.mxu0 0
    %2415 = vmatprep.mubr.bf16.mxu0 0
    %2416 = vmatmul.mubr.bf16.gmra.mrb[0].mxu0 %v2382
    %v2417 = vpop.f32.mrb[0].mxu0
    %v2418 = vadd.f32 %v149, %v2417
    %v2419 = vpop.f32.mrb[0].mxu0
    %v2420 = vadd.f32 %v150, %v2419
    %v2421 = vpop.f32.mrb[0].mxu0
    %v2422 = vpop.f32.mrb[0].mxu0
    %2423 = vdwg.mxu0
    %2424 = vmatprep.subr.bf16.mxu0 0
    %2425 = vmatpush1.bf16.msra.mxu0 %v1337
    %2426 = vmatprep.subr.bf16.mxu0 0
    %2427 = vmatpush1.bf16.msra.mxu0 %v1340
    %2428 = vmatprep.subr.bf16.mxu0 0
    %2429 = vmatpush1.bf16.msra.mxu0 %v1343
    %2430 = vmatprep.subr.bf16.mxu0 0
    %2431 = vmatpush1.bf16.msra.mxu0 %v1346
    %2432 = vmatprep.subr.bf16.mxu0 0
    %2433 = vmatpush1.bf16.msra.mxu0 %v1349
    %2434 = vmatprep.subr.bf16.mxu0 0
    %2435 = vmatpush1.bf16.msra.mxu0 %v1352
    %2436 = vmatprep.subr.bf16.mxu0 0
    %2437 = vmatpush1.bf16.msra.mxu0 %v1355
    %2438 = vmatprep.subr.bf16.mxu0 0
    %2439 = vmatpush1.bf16.msra.mxu0 %v1358
    %2440 = vmatprep.subr.bf16.mxu0 0
    %2441 = vmatpush1.bf16.msra.mxu0 0
    %2442 = vmatprep.subr.bf16.mxu0 0
    %2443 = vmatpush1.bf16.msra.mxu0 0
    %2444 = vmatprep.subr.bf16.mxu0 0
    %2445 = vmatpush1.bf16.msra.mxu0 0
    %2446 = vmatprep.subr.bf16.mxu0 0
    %2447 = vmatpush1.bf16.msra.mxu0 0
    %2448 = vmatprep.subr.bf16.mxu0 0
    %2449 = vmatpush1.bf16.msra.mxu0 0
    %2450 = vmatprep.subr.bf16.mxu0 0
    %2451 = vmatpush1.bf16.msra.mxu0 0
    %2452 = vmatprep.subr.bf16.mxu0 0
    %2453 = vmatpush1.bf16.msra.mxu0 0
    %2454 = vmatprep.subr.bf16.mxu0 0
    %2455 = vmatpush1.bf16.msra.mxu0 0
    %2456 = vmatprep.mubr.bf16.mxu0 0
    %2457 = vmatmul.mubr.bf16.gmra.mrb[0].mxu0 %v2382
    %v2458 = vpop.f32.mrb[0].mxu0
    %v2459 = vadd.f32 %v151, %v2458
    %v2460 = vpop.f32.mrb[0].mxu0
    %v2461 = vpop.f32.mrb[0].mxu0
    %v2462 = vpop.f32.mrb[0].mxu0
    %2463 = vdwg.mxu0
    %v2464 = vadd.f32 %v2418, %v2315
    %v2465 = vxor.u32 %v2464, 2147483648
    %v2466 = vmul.f32 %v2465, 1.442695
    %v2467 = vpow.pop %v2466
    %v2468 = vadd.f32 %v2467, 1.0
    %v2469 = vrcp.pop %v2468
    %v2470 = vmul.f32 1.0, %v2469
    %v2471 = vadd.f32 %v2420, %v2354
    %v2472 = vxor.u32 %v2471, 2147483648
    %v2473 = vmul.f32 %v2472, 1.442695
    %v2474 = vpow.pop %v2473
    %v2475 = vadd.f32 %v2474, 1.0
    %v2476 = vrcp.pop %v2475
    %v2477 = vmul.f32 1.0, %v2476
    %v2478 = vadd.f32 %v2356, %v152
    %v2479 = vmul.f32 %v2470, %v2478
    %v2480 = vadd.f32 %v2459, %v2479
    %v2481 = vtanh.pop %v2480
    %v2482 = vsub.f32 1.0, %v2477
    %v2483 = vmul.f32 %v2482, %v2481
    %v2484 = vmul.f32 %v2477, %v2235
    %v2485 = vadd.f32 %v2483, %v2484
    %v2486 = vpack.c.bf16 %v2485, %v2485
    %2487 = vmatprep.subr.bf16.mxu0 %v886
    %2488 = vmatpush1.bf16.msra.mxu0 %v885
    %2489 = vmatprep.subr.bf16.mxu0 %v892
    %2490 = vmatpush1.bf16.msra.mxu0 %v891
    %2491 = vmatprep.subr.bf16.mxu0 %v898
    %2492 = vmatpush1.bf16.msra.mxu0 %v897
    %2493 = vmatprep.subr.bf16.mxu0 %v904
    %2494 = vmatpush1.bf16.msra.mxu0 %v903
    %2495 = vmatprep.subr.bf16.mxu0 %v910
    %2496 = vmatpush1.bf16.msra.mxu0 %v909
    %2497 = vmatprep.subr.bf16.mxu0 %v916
    %2498 = vmatpush1.bf16.msra.mxu0 %v915
    %2499 = vmatprep.subr.bf16.mxu0 %v922
    %2500 = vmatpush1.bf16.msra.mxu0 %v921
    %2501 = vmatprep.subr.bf16.mxu0 %v928
    %2502 = vmatpush1.bf16.msra.mxu0 %v927
    %2503 = vmatprep.subr.bf16.mxu0 %v934
    %2504 = vmatpush1.bf16.msra.mxu0 %v933
    %2505 = vmatprep.subr.bf16.mxu0 %v940
    %2506 = vmatpush1.bf16.msra.mxu0 %v939
    %2507 = vmatprep.subr.bf16.mxu0 %v946
    %2508 = vmatpush1.bf16.msra.mxu0 %v945
    %2509 = vmatprep.subr.bf16.mxu0 %v952
    %2510 = vmatpush1.bf16.msra.mxu0 %v951
    %2511 = vmatprep.subr.bf16.mxu0 %v958
    %2512 = vmatpush1.bf16.msra.mxu0 %v957
    %2513 = vmatprep.subr.bf16.mxu0 %v964
    %2514 = vmatpush1.bf16.msra.mxu0 %v963
    %2515 = vmatprep.subr.bf16.mxu0 %v970
    %2516 = vmatpush1.bf16.msra.mxu0 %v969
    %2517 = vmatprep.subr.bf16.mxu0 %v976
    %2518 = vmatpush1.bf16.msra.mxu0 %v975
    %2519 = vmatprep.mubr.bf16.mxu0 %v2486
    %2520 = vmatmul.mubr.bf16.gmra.mrb[0].mxu0 %v2382
    %v2521 = vpop.f32.mrb[0].mxu0
    %v2522 = vadd.f32 0.0, %v2521
    %v2523 = vpop.f32.mrb[0].mxu0
    %v2524 = vadd.f32 0.0, %v2523
    %v2525 = vpop.f32.mrb[0].mxu0
    %v2526 = vpop.f32.mrb[0].mxu0
    %2527 = vdwg.mxu0
    %2528 = vmatprep.subr.bf16.mxu0 %v888
    %2529 = vmatpush1.bf16.msra.mxu0 %v887
    %2530 = vmatprep.subr.bf16.mxu0 %v894
    %2531 = vmatpush1.bf16.msra.mxu0 %v893
    %2532 = vmatprep.subr.bf16.mxu0 %v900
    %2533 = vmatpush1.bf16.msra.mxu0 %v899
    %2534 = vmatprep.subr.bf16.mxu0 %v906
    %2535 = vmatpush1.bf16.msra.mxu0 %v905
    %2536 = vmatprep.subr.bf16.mxu0 %v912
    %2537 = vmatpush1.bf16.msra.mxu0 %v911
    %2538 = vmatprep.subr.bf16.mxu0 %v918
    %2539 = vmatpush1.bf16.msra.mxu0 %v917
    %2540 = vmatprep.subr.bf16.mxu0 %v924
    %2541 = vmatpush1.bf16.msra.mxu0 %v923
    %2542 = vmatprep.subr.bf16.mxu0 %v930
    %2543 = vmatpush1.bf16.msra.mxu0 %v929
    %2544 = vmatprep.subr.bf16.mxu0 %v936
    %2545 = vmatpush1.bf16.msra.mxu0 %v935
    %2546 = vmatprep.subr.bf16.mxu0 %v942
    %2547 = vmatpush1.bf16.msra.mxu0 %v941
    %2548 = vmatprep.subr.bf16.mxu0 %v948
    %2549 = vmatpush1.bf16.msra.mxu0 %v947
    %2550 = vmatprep.subr.bf16.mxu0 %v954
    %2551 = vmatpush1.bf16.msra.mxu0 %v953
    %2552 = vmatprep.subr.bf16.mxu0 %v960
    %2553 = vmatpush1.bf16.msra.mxu0 %v959
    %2554 = vmatprep.subr.bf16.mxu0 %v966
    %2555 = vmatpush1.bf16.msra.mxu0 %v965
    %2556 = vmatprep.subr.bf16.mxu0 %v972
    %2557 = vmatpush1.bf16.msra.mxu0 %v971
    %2558 = vmatprep.subr.bf16.mxu0 %v978
    %2559 = vmatpush1.bf16.msra.mxu0 %v977
    %2560 = vmatprep.mubr.bf16.mxu0 %v2486
    %2561 = vmatmul.mubr.bf16.gmra.mrb[0].mxu0 %v2382
    %v2562 = vpop.f32.mrb[0].mxu0
    %v2563 = vadd.f32 0.0, %v2562
    %v2564 = vpop.f32.mrb[0].mxu0
    %v2565 = vadd.f32 0.0, %v2564
    %v2566 = vpop.f32.mrb[0].mxu0
    %v2567 = vpop.f32.mrb[0].mxu0
    %2568 = vdwg.mxu0
    %2569 = vmatprep.subr.bf16.mxu0 %v890
    %2570 = vmatpush1.bf16.msra.mxu0 %v889
    %2571 = vmatprep.subr.bf16.mxu0 %v896
    %2572 = vmatpush1.bf16.msra.mxu0 %v895
    %2573 = vmatprep.subr.bf16.mxu0 %v902
    %2574 = vmatpush1.bf16.msra.mxu0 %v901
    %2575 = vmatprep.subr.bf16.mxu0 %v908
    %2576 = vmatpush1.bf16.msra.mxu0 %v907
    %2577 = vmatprep.subr.bf16.mxu0 %v914
    %2578 = vmatpush1.bf16.msra.mxu0 %v913
    %2579 = vmatprep.subr.bf16.mxu0 %v920
    %2580 = vmatpush1.bf16.msra.mxu0 %v919
    %2581 = vmatprep.subr.bf16.mxu0 %v926
    %2582 = vmatpush1.bf16.msra.mxu0 %v925
    %2583 = vmatprep.subr.bf16.mxu0 %v932
    %2584 = vmatpush1.bf16.msra.mxu0 %v931
    %2585 = vmatprep.subr.bf16.mxu0 %v938
    %2586 = vmatpush1.bf16.msra.mxu0 %v937
    %2587 = vmatprep.subr.bf16.mxu0 %v944
    %2588 = vmatpush1.bf16.msra.mxu0 %v943
    %2589 = vmatprep.subr.bf16.mxu0 %v950
    %2590 = vmatpush1.bf16.msra.mxu0 %v949
    %2591 = vmatprep.subr.bf16.mxu0 %v956
    %2592 = vmatpush1.bf16.msra.mxu0 %v955
    %2593 = vmatprep.subr.bf16.mxu0 %v962
    %2594 = vmatpush1.bf16.msra.mxu0 %v961
    %2595 = vmatprep.subr.bf16.mxu0 %v968
    %2596 = vmatpush1.bf16.msra.mxu0 %v967
    %2597 = vmatprep.subr.bf16.mxu0 %v974
    %2598 = vmatpush1.bf16.msra.mxu0 %v973
    %2599 = vmatprep.subr.bf16.mxu0 %v980
    %2600 = vmatpush1.bf16.msra.mxu0 %v979
    %2601 = vmatprep.mubr.bf16.mxu0 %v2486
    %2602 = vmatmul.mubr.bf16.gmra.mrb[0].mxu0 %v2382
    %v2603 = vpop.f32.mrb[0].mxu0
    %v2604 = vadd.f32 0.0, %v2603
    %v2605 = vpop.f32.mrb[0].mxu0
    %v2606 = vadd.f32 0.0, %v2605
    %v2607 = vpop.f32.mrb[0].mxu0
    %v2608 = vpop.f32.mrb[0].mxu0
    %2609 = vdwg.mxu0
    %v2610 = vadd.f32 %v421, %v2522
    %v2611 = vxor.u32 %v2610, 2147483648
    %v2612 = vmul.f32 %v2611, 1.442695
    %v2613 = vpow.pop %v2612
    %v2614 = vadd.f32 %v2613, 1.0
    %v2615 = vrcp.pop %v2614
    %v2616 = vmul.f32 1.0, %v2615
    %v2617 = vadd.f32 %v423, %v2524
    %v2618 = vxor.u32 %v2617, 2147483648
    %v2619 = vmul.f32 %v2618, 1.442695
    %v2620 = vpow.pop %v2619
    %v2621 = vadd.f32 %v2620, 1.0
    %v2622 = vrcp.pop %v2621
    %v2623 = vmul.f32 1.0, %v2622
    %v2624 = vadd.f32 %v2563, %v148
    %v2625 = vmul.f32 %v2616, %v2624
    %v2626 = vadd.f32 %v489, %v2625
    %v2627 = vtanh.pop %v2626
    %v2628 = vsub.f32 1.0, %v2623
    %v2629 = vmul.f32 %v2628, %v2627
    %v2630 = vmul.f32 %v2623, %v2381
    %v2631 = vadd.f32 %v2629, %v2630
    %v2632 = vpack.c.bf16 %v2631, %v2631
    %2633 = vmatprep.subr.bf16.mxu0 %v1336
    %2634 = vmatpush1.bf16.msra.mxu0 %v1335
    %2635 = vmatprep.subr.bf16.mxu0 %v1339
    %2636 = vmatpush1.bf16.msra.mxu0 %v1338
    %2637 = vmatprep.subr.bf16.mxu0 %v1342
    %2638 = vmatpush1.bf16.msra.mxu0 %v1341
    %2639 = vmatprep.subr.bf16.mxu0 %v1345
    %2640 = vmatpush1.bf16.msra.mxu0 %v1344
    %2641 = vmatprep.subr.bf16.mxu0 %v1348
    %2642 = vmatpush1.bf16.msra.mxu0 %v1347
    %2643 = vmatprep.subr.bf16.mxu0 %v1351
    %2644 = vmatpush1.bf16.msra.mxu0 %v1350
    %2645 = vmatprep.subr.bf16.mxu0 %v1354
    %2646 = vmatpush1.bf16.msra.mxu0 %v1353
    %2647 = vmatprep.subr.bf16.mxu0 %v1357
    %2648 = vmatpush1.bf16.msra.mxu0 %v1356
    %2649 = vmatprep.subr.bf16.mxu0 0
    %2650 = vmatpush1.bf16.msra.mxu0 0
    %2651 = vmatprep.subr.bf16.mxu0 0
    %2652 = vmatpush1.bf16.msra.mxu0 0
    %2653 = vmatprep.subr.bf16.mxu0 0
    %2654 = vmatpush1.bf16.msra.mxu0 0
    %2655 = vmatprep.subr.bf16.mxu0 0
    %2656 = vmatpush1.bf16.msra.mxu0 0
    %2657 = vmatprep.subr.bf16.mxu0 0
    %2658 = vmatpush1.bf16.msra.mxu0 0
    %2659 = vmatprep.subr.bf16.mxu0 0
    %2660 = vmatpush1.bf16.msra.mxu0 0
    %2661 = vmatprep.subr.bf16.mxu0 0
    %2662 = vmatpush1.bf16.msra.mxu0 0
    %2663 = vmatprep.subr.bf16.mxu0 0
    %2664 = vmatpush1.bf16.msra.mxu0 0
    %2665 = vmatprep.mubr.bf16.mxu0 0
    %2666 = vmatmul.mubr.bf16.gmra.mrb[0].mxu0 %v2632
    %v2667 = vpop.f32.mrb[0].mxu0
    %v2668 = vadd.f32 %v149, %v2667
    %v2669 = vpop.f32.mrb[0].mxu0
    %v2670 = vadd.f32 %v150, %v2669
    %v2671 = vpop.f32.mrb[0].mxu0
    %v2672 = vpop.f32.mrb[0].mxu0
    %2673 = vdwg.mxu0
    %2674 = vmatprep.subr.bf16.mxu0 0
    %2675 = vmatpush1.bf16.msra.mxu0 %v1337
    %2676 = vmatprep.subr.bf16.mxu0 0
    %2677 = vmatpush1.bf16.msra.mxu0 %v1340
    %2678 = vmatprep.subr.bf16.mxu0 0
    %2679 = vmatpush1.bf16.msra.mxu0 %v1343
    %2680 = vmatprep.subr.bf16.mxu0 0
    %2681 = vmatpush1.bf16.msra.mxu0 %v1346
    %2682 = vmatprep.subr.bf16.mxu0 0
    %2683 = vmatpush1.bf16.msra.mxu0 %v1349
    %2684 = vmatprep.subr.bf16.mxu0 0
    %2685 = vmatpush1.bf16.msra.mxu0 %v1352
    %2686 = vmatprep.subr.bf16.mxu0 0
    %2687 = vmatpush1.bf16.msra.mxu0 %v1355
    %2688 = vmatprep.subr.bf16.mxu0 0
    %2689 = vmatpush1.bf16.msra.mxu0 %v1358
    %2690 = vmatprep.subr.bf16.mxu0 0
    %2691 = vmatpush1.bf16.msra.mxu0 0
    %2692 = vmatprep.subr.bf16.mxu0 0
    %2693 = vmatpush1.bf16.msra.mxu0 0
    %2694 = vmatprep.subr.bf16.mxu0 0
    %2695 = vmatpush1.bf16.msra.mxu0 0
    %2696 = vmatprep.subr.bf16.mxu0 0
    %2697 = vmatpush1.bf16.msra.mxu0 0
    %2698 = vmatprep.subr.bf16.mxu0 0
    %2699 = vmatpush1.bf16.msra.mxu0 0
    %2700 = vmatprep.subr.bf16.mxu0 0
    %2701 = vmatpush1.bf16.msra.mxu0 0
    %2702 = vmatprep.subr.bf16.mxu0 0
    %2703 = vmatpush1.bf16.msra.mxu0 0
    %2704 = vmatprep.subr.bf16.mxu0 0
    %2705 = vmatpush1.bf16.msra.mxu0 0
    %2706 = vmatprep.mubr.bf16.mxu0 0
    %2707 = vmatmul.mubr.bf16.gmra.mrb[0].mxu0 %v2632
    %v2708 = vpop.f32.mrb[0].mxu0
    %v2709 = vadd.f32 %v151, %v2708
    %v2710 = vpop.f32.mrb[0].mxu0
    %v2711 = vpop.f32.mrb[0].mxu0
    %v2712 = vpop.f32.mrb[0].mxu0
    %2713 = vdwg.mxu0
    %v2714 = vadd.f32 %v2668, %v2565
    %v2715 = vxor.u32 %v2714, 2147483648
    %v2716 = vmul.f32 %v2715, 1.442695
    %v2717 = vpow.pop %v2716
    %v2718 = vadd.f32 %v2717, 1.0
    %v2719 = vrcp.pop %v2718
    %v2720 = vmul.f32 1.0, %v2719
    %v2721 = vadd.f32 %v2670, %v2604
    %v2722 = vxor.u32 %v2721, 2147483648
    %v2723 = vmul.f32 %v2722, 1.442695
    %v2724 = vpow.pop %v2723
    %v2725 = vadd.f32 %v2724, 1.0
    %v2726 = vrcp.pop %v2725
    %v2727 = vmul.f32 1.0, %v2726
    %v2728 = vadd.f32 %v2606, %v152
    %v2729 = vmul.f32 %v2720, %v2728
    %v2730 = vadd.f32 %v2709, %v2729
    %v2731 = vtanh.pop %v2730
    %v2732 = vsub.f32 1.0, %v2727
    %v2733 = vmul.f32 %v2732, %v2731
    %v2734 = vmul.f32 %v2727, %v2485
    %v2735 = vadd.f32 %v2733, %v2734
    %v2736 = vpack.c.bf16 %v2735, %v2735
    %2737 = vmatprep.subr.bf16.mxu0 %v886
    %2738 = vmatpush1.bf16.msra.mxu0 %v885
    %2739 = vmatprep.subr.bf16.mxu0 %v892
    %2740 = vmatpush1.bf16.msra.mxu0 %v891
    %2741 = vmatprep.subr.bf16.mxu0 %v898
    %2742 = vmatpush1.bf16.msra.mxu0 %v897
    %2743 = vmatprep.subr.bf16.mxu0 %v904
    %2744 = vmatpush1.bf16.msra.mxu0 %v903
    %2745 = vmatprep.subr.bf16.mxu0 %v910
    %2746 = vmatpush1.bf16.msra.mxu0 %v909
    %2747 = vmatprep.subr.bf16.mxu0 %v916
    %2748 = vmatpush1.bf16.msra.mxu0 %v915
    %2749 = vmatprep.subr.bf16.mxu0 %v922
    %2750 = vmatpush1.bf16.msra.mxu0 %v921
    %2751 = vmatprep.subr.bf16.mxu0 %v928
    %2752 = vmatpush1.bf16.msra.mxu0 %v927
    %2753 = vmatprep.subr.bf16.mxu0 %v934
    %2754 = vmatpush1.bf16.msra.mxu0 %v933
    %2755 = vmatprep.subr.bf16.mxu0 %v940
    %2756 = vmatpush1.bf16.msra.mxu0 %v939
    %2757 = vmatprep.subr.bf16.mxu0 %v946
    %2758 = vmatpush1.bf16.msra.mxu0 %v945
    %2759 = vmatprep.subr.bf16.mxu0 %v952
    %2760 = vmatpush1.bf16.msra.mxu0 %v951
    %2761 = vmatprep.subr.bf16.mxu0 %v958
    %2762 = vmatpush1.bf16.msra.mxu0 %v957
    %2763 = vmatprep.subr.bf16.mxu0 %v964
    %2764 = vmatpush1.bf16.msra.mxu0 %v963
    %2765 = vmatprep.subr.bf16.mxu0 %v970
    %2766 = vmatpush1.bf16.msra.mxu0 %v969
    %2767 = vmatprep.subr.bf16.mxu0 %v976
    %2768 = vmatpush1.bf16.msra.mxu0 %v975
    %2769 = vmatprep.mubr.bf16.mxu0 %v2736
    %2770 = vmatmul.mubr.bf16.gmra.mrb[0].mxu0 %v2632
    %v2771 = vpop.f32.mrb[0].mxu0
    %v2772 = vadd.f32 0.0, %v2771
    %v2773 = vpop.f32.mrb[0].mxu0
    %v2774 = vadd.f32 0.0, %v2773
    %v2775 = vpop.f32.mrb[0].mxu0
    %v2776 = vpop.f32.mrb[0].mxu0
    %2777 = vdwg.mxu0
    %2778 = vmatprep.subr.bf16.mxu0 %v888
    %2779 = vmatpush1.bf16.msra.mxu0 %v887
    %2780 = vmatprep.subr.bf16.mxu0 %v894
    %2781 = vmatpush1.bf16.msra.mxu0 %v893
    %2782 = vmatprep.subr.bf16.mxu0 %v900
    %2783 = vmatpush1.bf16.msra.mxu0 %v899
    %2784 = vmatprep.subr.bf16.mxu0 %v906
    %2785 = vmatpush1.bf16.msra.mxu0 %v905
    %2786 = vmatprep.subr.bf16.mxu0 %v912
    %2787 = vmatpush1.bf16.msra.mxu0 %v911
    %2788 = vmatprep.subr.bf16.mxu0 %v918
    %2789 = vmatpush1.bf16.msra.mxu0 %v917
    %2790 = vmatprep.subr.bf16.mxu0 %v924
    %2791 = vmatpush1.bf16.msra.mxu0 %v923
    %2792 = vmatprep.subr.bf16.mxu0 %v930
    %2793 = vmatpush1.bf16.msra.mxu0 %v929
    %2794 = vmatprep.subr.bf16.mxu0 %v936
    %2795 = vmatpush1.bf16.msra.mxu0 %v935
    %2796 = vmatprep.subr.bf16.mxu0 %v942
    %2797 = vmatpush1.bf16.msra.mxu0 %v941
    %2798 = vmatprep.subr.bf16.mxu0 %v948
    %2799 = vmatpush1.bf16.msra.mxu0 %v947
    %2800 = vmatprep.subr.bf16.mxu0 %v954
    %2801 = vmatpush1.bf16.msra.mxu0 %v953
    %2802 = vmatprep.subr.bf16.mxu0 %v960
    %2803 = vmatpush1.bf16.msra.mxu0 %v959
    %2804 = vmatprep.subr.bf16.mxu0 %v966
    %2805 = vmatpush1.bf16.msra.mxu0 %v965
    %2806 = vmatprep.subr.bf16.mxu0 %v972
    %2807 = vmatpush1.bf16.msra.mxu0 %v971
    %2808 = vmatprep.subr.bf16.mxu0 %v978
    %2809 = vmatpush1.bf16.msra.mxu0 %v977
    %2810 = vmatprep.mubr.bf16.mxu0 %v2736
    %2811 = vmatmul.mubr.bf16.gmra.mrb[0].mxu0 %v2632
    %v2812 = vpop.f32.mrb[0].mxu0
    %v2813 = vadd.f32 0.0, %v2812
    %v2814 = vpop.f32.mrb[0].mxu0
    %v2815 = vadd.f32 0.0, %v2814
    %v2816 = vpop.f32.mrb[0].mxu0
    %v2817 = vpop.f32.mrb[0].mxu0
    %2818 = vdwg.mxu0
    %2819 = vmatprep.subr.bf16.mxu0 %v890
    %2820 = vmatpush1.bf16.msra.mxu0 %v889
    %2821 = vmatprep.subr.bf16.mxu0 %v896
    %2822 = vmatpush1.bf16.msra.mxu0 %v895
    %2823 = vmatprep.subr.bf16.mxu0 %v902
    %2824 = vmatpush1.bf16.msra.mxu0 %v901
    %2825 = vmatprep.subr.bf16.mxu0 %v908
    %2826 = vmatpush1.bf16.msra.mxu0 %v907
    %2827 = vmatprep.subr.bf16.mxu0 %v914
    %2828 = vmatpush1.bf16.msra.mxu0 %v913
    %2829 = vmatprep.subr.bf16.mxu0 %v920
    %2830 = vmatpush1.bf16.msra.mxu0 %v919
    %2831 = vmatprep.subr.bf16.mxu0 %v926
    %2832 = vmatpush1.bf16.msra.mxu0 %v925
    %2833 = vmatprep.subr.bf16.mxu0 %v932
    %2834 = vmatpush1.bf16.msra.mxu0 %v931
    %2835 = vmatprep.subr.bf16.mxu0 %v938
    %2836 = vmatpush1.bf16.msra.mxu0 %v937
    %2837 = vmatprep.subr.bf16.mxu0 %v944
    %2838 = vmatpush1.bf16.msra.mxu0 %v943
    %2839 = vmatprep.subr.bf16.mxu0 %v950
    %2840 = vmatpush1.bf16.msra.mxu0 %v949
    %2841 = vmatprep.subr.bf16.mxu0 %v956
    %2842 = vmatpush1.bf16.msra.mxu0 %v955
    %2843 = vmatprep.subr.bf16.mxu0 %v962
    %2844 = vmatpush1.bf16.msra.mxu0 %v961
    %2845 = vmatprep.subr.bf16.mxu0 %v968
    %2846 = vmatpush1.bf16.msra.mxu0 %v967
    %2847 = vmatprep.subr.bf16.mxu0 %v974
    %2848 = vmatpush1.bf16.msra.mxu0 %v973
    %2849 = vmatprep.subr.bf16.mxu0 %v980
    %2850 = vmatpush1.bf16.msra.mxu0 %v979
    %2851 = vmatprep.mubr.bf16.mxu0 %v2736
    %2852 = vmatmul.mubr.bf16.gmra.mrb[0].mxu0 %v2632
    %v2853 = vpop.f32.mrb[0].mxu0
    %v2854 = vadd.f32 0.0, %v2853
    %v2855 = vpop.f32.mrb[0].mxu0
    %v2856 = vadd.f32 0.0, %v2855
    %v2857 = vpop.f32.mrb[0].mxu0
    %v2858 = vpop.f32.mrb[0].mxu0
    %2859 = vdwg.mxu0
    %v2860 = vadd.f32 %v427, %v2772
    %v2861 = vxor.u32 %v2860, 2147483648
    %v2862 = vmul.f32 %v2861, 1.442695
    %v2863 = vpow.pop %v2862
    %v2864 = vadd.f32 %v2863, 1.0
    %v2865 = vrcp.pop %v2864
    %v2866 = vmul.f32 1.0, %v2865
    %v2867 = vadd.f32 %v429, %v2774
    %v2868 = vxor.u32 %v2867, 2147483648
    %v2869 = vmul.f32 %v2868, 1.442695
    %v2870 = vpow.pop %v2869
    %v2871 = vadd.f32 %v2870, 1.0
    %v2872 = vrcp.pop %v2871
    %v2873 = vmul.f32 1.0, %v2872
    %v2874 = vadd.f32 %v2813, %v148
    %v2875 = vmul.f32 %v2866, %v2874
    %v2876 = vadd.f32 %v494, %v2875
    %v2877 = vtanh.pop %v2876
    %v2878 = vsub.f32 1.0, %v2873
    %v2879 = vmul.f32 %v2878, %v2877
    %v2880 = vmul.f32 %v2873, %v2631
    %v2881 = vadd.f32 %v2879, %v2880
    %v2882 = vpack.c.bf16 %v2881, %v2881
    %2883 = vmatprep.subr.bf16.mxu0 %v1336
    %2884 = vmatpush1.bf16.msra.mxu0 %v1335
    %2885 = vmatprep.subr.bf16.mxu0 %v1339
    %2886 = vmatpush1.bf16.msra.mxu0 %v1338
    %2887 = vmatprep.subr.bf16.mxu0 %v1342
    %2888 = vmatpush1.bf16.msra.mxu0 %v1341
    %2889 = vmatprep.subr.bf16.mxu0 %v1345
    %2890 = vmatpush1.bf16.msra.mxu0 %v1344
    %2891 = vmatprep.subr.bf16.mxu0 %v1348
    %2892 = vmatpush1.bf16.msra.mxu0 %v1347
    %2893 = vmatprep.subr.bf16.mxu0 %v1351
    %2894 = vmatpush1.bf16.msra.mxu0 %v1350
    %2895 = vmatprep.subr.bf16.mxu0 %v1354
    %2896 = vmatpush1.bf16.msra.mxu0 %v1353
    %2897 = vmatprep.subr.bf16.mxu0 %v1357
    %2898 = vmatpush1.bf16.msra.mxu0 %v1356
    %2899 = vmatprep.subr.bf16.mxu0 0
    %2900 = vmatpush1.bf16.msra.mxu0 0
    %2901 = vmatprep.subr.bf16.mxu0 0
    %2902 = vmatpush1.bf16.msra.mxu0 0
    %2903 = vmatprep.subr.bf16.mxu0 0
    %2904 = vmatpush1.bf16.msra.mxu0 0
    %2905 = vmatprep.subr.bf16.mxu0 0
    %2906 = vmatpush1.bf16.msra.mxu0 0
    %2907 = vmatprep.subr.bf16.mxu0 0
    %2908 = vmatpush1.bf16.msra.mxu0 0
    %2909 = vmatprep.subr.bf16.mxu0 0
    %2910 = vmatpush1.bf16.msra.mxu0 0
    %2911 = vmatprep.subr.bf16.mxu0 0
    %2912 = vmatpush1.bf16.msra.mxu0 0
    %2913 = vmatprep.subr.bf16.mxu0 0
    %2914 = vmatpush1.bf16.msra.mxu0 0
    %2915 = vmatprep.mubr.bf16.mxu0 0
    %2916 = vmatmul.mubr.bf16.gmra.mrb[0].mxu0 %v2882
    %v2917 = vpop.f32.mrb[0].mxu0
    %v2918 = vadd.f32 %v149, %v2917
    %v2919 = vpop.f32.mrb[0].mxu0
    %v2920 = vadd.f32 %v150, %v2919
    %v2921 = vpop.f32.mrb[0].mxu0
    %v2922 = vpop.f32.mrb[0].mxu0
    %2923 = vdwg.mxu0
    %2924 = vmatprep.subr.bf16.mxu0 0
    %2925 = vmatpush1.bf16.msra.mxu0 %v1337
    %2926 = vmatprep.subr.bf16.mxu0 0
    %2927 = vmatpush1.bf16.msra.mxu0 %v1340
    %2928 = vmatprep.subr.bf16.mxu0 0
    %2929 = vmatpush1.bf16.msra.mxu0 %v1343
    %2930 = vmatprep.subr.bf16.mxu0 0
    %2931 = vmatpush1.bf16.msra.mxu0 %v1346
    %2932 = vmatprep.subr.bf16.mxu0 0
    %2933 = vmatpush1.bf16.msra.mxu0 %v1349
    %2934 = vmatprep.subr.bf16.mxu0 0
    %2935 = vmatpush1.bf16.msra.mxu0 %v1352
    %2936 = vmatprep.subr.bf16.mxu0 0
    %2937 = vmatpush1.bf16.msra.mxu0 %v1355
    %2938 = vmatprep.subr.bf16.mxu0 0
    %2939 = vmatpush1.bf16.msra.mxu0 %v1358
    %2940 = vmatprep.subr.bf16.mxu0 0
    %2941 = vmatpush1.bf16.msra.mxu0 0
    %2942 = vmatprep.subr.bf16.mxu0 0
    %2943 = vmatpush1.bf16.msra.mxu0 0
    %2944 = vmatprep.subr.bf16.mxu0 0
    %2945 = vmatpush1.bf16.msra.mxu0 0
    %2946 = vmatprep.subr.bf16.mxu0 0
    %2947 = vmatpush1.bf16.msra.mxu0 0
    %2948 = vmatprep.subr.bf16.mxu0 0
    %2949 = vmatpush1.bf16.msra.mxu0 0
    %2950 = vmatprep.subr.bf16.mxu0 0
    %2951 = vmatpush1.bf16.msra.mxu0 0
    %2952 = vmatprep.subr.bf16.mxu0 0
    %2953 = vmatpush1.bf16.msra.mxu0 0
    %2954 = vmatprep.subr.bf16.mxu0 0
    %2955 = vmatpush1.bf16.msra.mxu0 0
    %2956 = vmatprep.mubr.bf16.mxu0 0
    %2957 = vmatmul.mubr.bf16.gmra.mrb[0].mxu0 %v2882
    %v2958 = vpop.f32.mrb[0].mxu0
    %v2959 = vadd.f32 %v151, %v2958
    %v2960 = vpop.f32.mrb[0].mxu0
    %v2961 = vpop.f32.mrb[0].mxu0
    %v2962 = vpop.f32.mrb[0].mxu0
    %2963 = vdwg.mxu0
    %v2964 = vadd.f32 %v2918, %v2815
    %v2965 = vxor.u32 %v2964, 2147483648
    %v2966 = vmul.f32 %v2965, 1.442695
    %v2967 = vpow.pop %v2966
    %v2968 = vadd.f32 %v2967, 1.0
    %v2969 = vrcp.pop %v2968
    %v2970 = vmul.f32 1.0, %v2969
    %v2971 = vadd.f32 %v2920, %v2854
    %v2972 = vxor.u32 %v2971, 2147483648
    %v2973 = vmul.f32 %v2972, 1.442695
    %v2974 = vpow.pop %v2973
    %v2975 = vadd.f32 %v2974, 1.0
    %v2976 = vrcp.pop %v2975
    %v2977 = vmul.f32 1.0, %v2976
    %v2978 = vadd.f32 %v2856, %v152
    %v2979 = vmul.f32 %v2970, %v2978
    %v2980 = vadd.f32 %v2959, %v2979
    %v2981 = vtanh.pop %v2980
    %v2982 = vsub.f32 1.0, %v2977
    %v2983 = vmul.f32 %v2982, %v2981
    %v2984 = vmul.f32 %v2977, %v2735
    %v2985 = vadd.f32 %v2983, %v2984
    %v2986 = vpack.c.bf16 %v2985, %v2985
    %2987 = vmatprep.subr.bf16.mxu0 %v886
    %2988 = vmatpush1.bf16.msra.mxu0 %v885
    %2989 = vmatprep.subr.bf16.mxu0 %v892
    %2990 = vmatpush1.bf16.msra.mxu0 %v891
    %2991 = vmatprep.subr.bf16.mxu0 %v898
    %2992 = vmatpush1.bf16.msra.mxu0 %v897
    %2993 = vmatprep.subr.bf16.mxu0 %v904
    %2994 = vmatpush1.bf16.msra.mxu0 %v903
    %2995 = vmatprep.subr.bf16.mxu0 %v910
    %2996 = vmatpush1.bf16.msra.mxu0 %v909
    %2997 = vmatprep.subr.bf16.mxu0 %v916
    %2998 = vmatpush1.bf16.msra.mxu0 %v915
    %2999 = vmatprep.subr.bf16.mxu0 %v922
    %3000 = vmatpush1.bf16.msra.mxu0 %v921
    %3001 = vmatprep.subr.bf16.mxu0 %v928
    %3002 = vmatpush1.bf16.msra.mxu0 %v927
    %3003 = vmatprep.subr.bf16.mxu0 %v934
    %3004 = vmatpush1.bf16.msra.mxu0 %v933
    %3005 = vmatprep.subr.bf16.mxu0 %v940
    %3006 = vmatpush1.bf16.msra.mxu0 %v939
    %3007 = vmatprep.subr.bf16.mxu0 %v946
    %3008 = vmatpush1.bf16.msra.mxu0 %v945
    %3009 = vmatprep.subr.bf16.mxu0 %v952
    %3010 = vmatpush1.bf16.msra.mxu0 %v951
    %3011 = vmatprep.subr.bf16.mxu0 %v958
    %3012 = vmatpush1.bf16.msra.mxu0 %v957
    %3013 = vmatprep.subr.bf16.mxu0 %v964
    %3014 = vmatpush1.bf16.msra.mxu0 %v963
    %3015 = vmatprep.subr.bf16.mxu0 %v970
    %3016 = vmatpush1.bf16.msra.mxu0 %v969
    %3017 = vmatprep.subr.bf16.mxu0 %v976
    %3018 = vmatpush1.bf16.msra.mxu0 %v975
    %3019 = vmatprep.mubr.bf16.mxu0 %v2986
    %3020 = vmatmul.mubr.bf16.gmra.mrb[0].mxu0 %v2882
    %v3021 = vpop.f32.mrb[0].mxu0
    %v3022 = vadd.f32 0.0, %v3021
    %v3023 = vpop.f32.mrb[0].mxu0
    %v3024 = vadd.f32 0.0, %v3023
    %v3025 = vpop.f32.mrb[0].mxu0
    %v3026 = vpop.f32.mrb[0].mxu0
    %3027 = vdwg.mxu0
    %3028 = vmatprep.subr.bf16.mxu0 %v888
    %3029 = vmatpush1.bf16.msra.mxu0 %v887
    %3030 = vmatprep.subr.bf16.mxu0 %v894
    %3031 = vmatpush1.bf16.msra.mxu0 %v893
    %3032 = vmatprep.subr.bf16.mxu0 %v900
    %3033 = vmatpush1.bf16.msra.mxu0 %v899
    %3034 = vmatprep.subr.bf16.mxu0 %v906
    %3035 = vmatpush1.bf16.msra.mxu0 %v905
    %3036 = vmatprep.subr.bf16.mxu0 %v912
    %3037 = vmatpush1.bf16.msra.mxu0 %v911
    %3038 = vmatprep.subr.bf16.mxu0 %v918
    %3039 = vmatpush1.bf16.msra.mxu0 %v917
    %3040 = vmatprep.subr.bf16.mxu0 %v924
    %3041 = vmatpush1.bf16.msra.mxu0 %v923
    %3042 = vmatprep.subr.bf16.mxu0 %v930
    %3043 = vmatpush1.bf16.msra.mxu0 %v929
    %3044 = vmatprep.subr.bf16.mxu0 %v936
    %3045 = vmatpush1.bf16.msra.mxu0 %v935
    %3046 = vmatprep.subr.bf16.mxu0 %v942
    %3047 = vmatpush1.bf16.msra.mxu0 %v941
    %3048 = vmatprep.subr.bf16.mxu0 %v948
    %3049 = vmatpush1.bf16.msra.mxu0 %v947
    %3050 = vmatprep.subr.bf16.mxu0 %v954
    %3051 = vmatpush1.bf16.msra.mxu0 %v953
    %3052 = vmatprep.subr.bf16.mxu0 %v960
    %3053 = vmatpush1.bf16.msra.mxu0 %v959
    %3054 = vmatprep.subr.bf16.mxu0 %v966
    %3055 = vmatpush1.bf16.msra.mxu0 %v965
    %3056 = vmatprep.subr.bf16.mxu0 %v972
    %3057 = vmatpush1.bf16.msra.mxu0 %v971
    %3058 = vmatprep.subr.bf16.mxu0 %v978
    %3059 = vmatpush1.bf16.msra.mxu0 %v977
    %3060 = vmatprep.mubr.bf16.mxu0 %v2986
    %3061 = vmatmul.mubr.bf16.gmra.mrb[0].mxu0 %v2882
    %v3062 = vpop.f32.mrb[0].mxu0
    %v3063 = vadd.f32 0.0, %v3062
    %v3064 = vpop.f32.mrb[0].mxu0
    %v3065 = vadd.f32 0.0, %v3064
    %v3066 = vpop.f32.mrb[0].mxu0
    %v3067 = vpop.f32.mrb[0].mxu0
    %3068 = vdwg.mxu0
    %3069 = vmatprep.subr.bf16.mxu0 %v890
    %3070 = vmatpush1.bf16.msra.mxu0 %v889
    %3071 = vmatprep.subr.bf16.mxu0 %v896
    %3072 = vmatpush1.bf16.msra.mxu0 %v895
    %3073 = vmatprep.subr.bf16.mxu0 %v902
    %3074 = vmatpush1.bf16.msra.mxu0 %v901
    %3075 = vmatprep.subr.bf16.mxu0 %v908
    %3076 = vmatpush1.bf16.msra.mxu0 %v907
    %3077 = vmatprep.subr.bf16.mxu0 %v914
    %3078 = vmatpush1.bf16.msra.mxu0 %v913
    %3079 = vmatprep.subr.bf16.mxu0 %v920
    %3080 = vmatpush1.bf16.msra.mxu0 %v919
    %3081 = vmatprep.subr.bf16.mxu0 %v926
    %3082 = vmatpush1.bf16.msra.mxu0 %v925
    %3083 = vmatprep.subr.bf16.mxu0 %v932
    %3084 = vmatpush1.bf16.msra.mxu0 %v931
    %3085 = vmatprep.subr.bf16.mxu0 %v938
    %3086 = vmatpush1.bf16.msra.mxu0 %v937
    %3087 = vmatprep.subr.bf16.mxu0 %v944
    %3088 = vmatpush1.bf16.msra.mxu0 %v943
    %3089 = vmatprep.subr.bf16.mxu0 %v950
    %3090 = vmatpush1.bf16.msra.mxu0 %v949
    %3091 = vmatprep.subr.bf16.mxu0 %v956
    %3092 = vmatpush1.bf16.msra.mxu0 %v955
    %3093 = vmatprep.subr.bf16.mxu0 %v962
    %3094 = vmatpush1.bf16.msra.mxu0 %v961
    %3095 = vmatprep.subr.bf16.mxu0 %v968
    %3096 = vmatpush1.bf16.msra.mxu0 %v967
    %3097 = vmatprep.subr.bf16.mxu0 %v974
    %3098 = vmatpush1.bf16.msra.mxu0 %v973
    %3099 = vmatprep.subr.bf16.mxu0 %v980
    %3100 = vmatpush1.bf16.msra.mxu0 %v979
    %3101 = vmatprep.mubr.bf16.mxu0 %v2986
    %3102 = vmatmul.mubr.bf16.gmra.mrb[0].mxu0 %v2882
    %v3103 = vpop.f32.mrb[0].mxu0
    %v3104 = vadd.f32 0.0, %v3103
    %v3105 = vpop.f32.mrb[0].mxu0
    %v3106 = vadd.f32 0.0, %v3105
    %v3107 = vpop.f32.mrb[0].mxu0
    %v3108 = vpop.f32.mrb[0].mxu0
    %3109 = vdwg.mxu0
    %v3110 = vadd.f32 %v431, %v3022
    %v3111 = vxor.u32 %v3110, 2147483648
    %v3112 = vmul.f32 %v3111, 1.442695
    %v3113 = vpow.pop %v3112
    %v3114 = vadd.f32 %v3113, 1.0
    %v3115 = vrcp.pop %v3114
    %v3116 = vmul.f32 1.0, %v3115
    %v3117 = vadd.f32 %v433, %v3024
    %v3118 = vxor.u32 %v3117, 2147483648
    %v3119 = vmul.f32 %v3118, 1.442695
    %v3120 = vpow.pop %v3119
    %v3121 = vadd.f32 %v3120, 1.0
    %v3122 = vrcp.pop %v3121
    %v3123 = vmul.f32 1.0, %v3122
    %v3124 = vadd.f32 %v3063, %v148
    %v3125 = vmul.f32 %v3116, %v3124
    %v3126 = vadd.f32 %v497, %v3125
    %v3127 = vtanh.pop %v3126
    %v3128 = vsub.f32 1.0, %v3123
    %v3129 = vmul.f32 %v3128, %v3127
    %v3130 = vmul.f32 %v3123, %v2881
    %v3131 = vadd.f32 %v3129, %v3130
    %v3132 = vpack.c.bf16 %v3131, %v3131
    %3133 = vmatprep.subr.bf16.mxu0 %v1336
    %3134 = vmatpush1.bf16.msra.mxu0 %v1335
    %3135 = vmatprep.subr.bf16.mxu0 %v1339
    %3136 = vmatpush1.bf16.msra.mxu0 %v1338
    %3137 = vmatprep.subr.bf16.mxu0 %v1342
    %3138 = vmatpush1.bf16.msra.mxu0 %v1341
    %3139 = vmatprep.subr.bf16.mxu0 %v1345
    %3140 = vmatpush1.bf16.msra.mxu0 %v1344
    %3141 = vmatprep.subr.bf16.mxu0 %v1348
    %3142 = vmatpush1.bf16.msra.mxu0 %v1347
    %3143 = vmatprep.subr.bf16.mxu0 %v1351
    %3144 = vmatpush1.bf16.msra.mxu0 %v1350
    %3145 = vmatprep.subr.bf16.mxu0 %v1354
    %3146 = vmatpush1.bf16.msra.mxu0 %v1353
    %3147 = vmatprep.subr.bf16.mxu0 %v1357
    %3148 = vmatpush1.bf16.msra.mxu0 %v1356
    %3149 = vmatprep.subr.bf16.mxu0 0
    %3150 = vmatpush1.bf16.msra.mxu0 0
    %3151 = vmatprep.subr.bf16.mxu0 0
    %3152 = vmatpush1.bf16.msra.mxu0 0
    %3153 = vmatprep.subr.bf16.mxu0 0
    %3154 = vmatpush1.bf16.msra.mxu0 0
    %3155 = vmatprep.subr.bf16.mxu0 0
    %3156 = vmatpush1.bf16.msra.mxu0 0
    %3157 = vmatprep.subr.bf16.mxu0 0
    %3158 = vmatpush1.bf16.msra.mxu0 0
    %3159 = vmatprep.subr.bf16.mxu0 0
    %3160 = vmatpush1.bf16.msra.mxu0 0
    %3161 = vmatprep.subr.bf16.mxu0 0
    %3162 = vmatpush1.bf16.msra.mxu0 0
    %3163 = vmatprep.subr.bf16.mxu0 0
    %3164 = vmatpush1.bf16.msra.mxu0 0
    %3165 = vmatprep.mubr.bf16.mxu0 0
    %3166 = vmatmul.mubr.bf16.gmra.mrb[0].mxu0 %v3132
    %v3167 = vpop.f32.mrb[0].mxu0
    %v3168 = vadd.f32 %v149, %v3167
    %v3169 = vpop.f32.mrb[0].mxu0
    %v3170 = vadd.f32 %v150, %v3169
    %v3171 = vpop.f32.mrb[0].mxu0
    %v3172 = vpop.f32.mrb[0].mxu0
    %3173 = vdwg.mxu0
    %3174 = vmatprep.subr.bf16.mxu0 0
    %3175 = vmatpush1.bf16.msra.mxu0 %v1337
    %3176 = vmatprep.subr.bf16.mxu0 0
    %3177 = vmatpush1.bf16.msra.mxu0 %v1340
    %3178 = vmatprep.subr.bf16.mxu0 0
    %3179 = vmatpush1.bf16.msra.mxu0 %v1343
    %3180 = vmatprep.subr.bf16.mxu0 0
    %3181 = vmatpush1.bf16.msra.mxu0 %v1346
    %3182 = vmatprep.subr.bf16.mxu0 0
    %3183 = vmatpush1.bf16.msra.mxu0 %v1349
    %3184 = vmatprep.subr.bf16.mxu0 0
    %3185 = vmatpush1.bf16.msra.mxu0 %v1352
    %3186 = vmatprep.subr.bf16.mxu0 0
    %3187 = vmatpush1.bf16.msra.mxu0 %v1355
    %3188 = vmatprep.subr.bf16.mxu0 0
    %3189 = vmatpush1.bf16.msra.mxu0 %v1358
    %3190 = vmatprep.subr.bf16.mxu0 0
    %3191 = vmatpush1.bf16.msra.mxu0 0
    %3192 = vmatprep.subr.bf16.mxu0 0
    %3193 = vmatpush1.bf16.msra.mxu0 0
    %3194 = vmatprep.subr.bf16.mxu0 0
    %3195 = vmatpush1.bf16.msra.mxu0 0
    %3196 = vmatprep.subr.bf16.mxu0 0
    %3197 = vmatpush1.bf16.msra.mxu0 0
    %3198 = vmatprep.subr.bf16.mxu0 0
    %3199 = vmatpush1.bf16.msra.mxu0 0
    %3200 = vmatprep.subr.bf16.mxu0 0
    %3201 = vmatpush1.bf16.msra.mxu0 0
    %3202 = vmatprep.subr.bf16.mxu0 0
    %3203 = vmatpush1.bf16.msra.mxu0 0
    %3204 = vmatprep.subr.bf16.mxu0 0
    %3205 = vmatpush1.bf16.msra.mxu0 0
    %3206 = vmatprep.mubr.bf16.mxu0 0
    %3207 = vmatmul.mubr.bf16.gmra.mrb[0].mxu0 %v3132
    %v3208 = vpop.f32.mrb[0].mxu0
    %v3209 = vadd.f32 %v151, %v3208
    %v3210 = vpop.f32.mrb[0].mxu0
    %v3211 = vpop.f32.mrb[0].mxu0
    %v3212 = vpop.f32.mrb[0].mxu0
    %3213 = vdwg.mxu0
    %v3214 = vadd.f32 %v3168, %v3065
    %v3215 = vxor.u32 %v3214, 2147483648
    %v3216 = vmul.f32 %v3215, 1.442695
    %v3217 = vpow.pop %v3216
    %v3218 = vadd.f32 %v3217, 1.0
    %v3219 = vrcp.pop %v3218
    %v3220 = vmul.f32 1.0, %v3219
    %v3221 = vadd.f32 %v3170, %v3104
    %v3222 = vxor.u32 %v3221, 2147483648
    %v3223 = vmul.f32 %v3222, 1.442695
    %v3224 = vpow.pop %v3223
    %v3225 = vadd.f32 %v3224, 1.0
    %v3226 = vrcp.pop %v3225
    %v3227 = vmul.f32 1.0, %v3226
    %v3228 = vadd.f32 %v3106, %v152
    %v3229 = vmul.f32 %v3220, %v3228
    %v3230 = vadd.f32 %v3209, %v3229
    %v3231 = vtanh.pop %v3230
    %v3232 = vsub.f32 1.0, %v3227
    %v3233 = vmul.f32 %v3232, %v3231
    %v3234 = vmul.f32 %v3227, %v2985
    %v3235 = vadd.f32 %v3233, %v3234
    %v3236 = vpack.c.bf16 %v3235, %v3235
    %v3237 = vld [vmem:[#allocation13] sm:$0xf]
    %v3238 = vld [vmem:[#allocation13 + $0x4] sm:$0xf]
    %v3239 = vld [vmem:[#allocation13 + $0x8] sm:$0xf]
    %v3240 = vld [vmem:[#allocation13 + $0xc] sm:$0xf]
    %v3241 = vld [vmem:[#allocation13 + $0x10] sm:$0xf]
    %v3242 = vld [vmem:[#allocation13 + $0x14] sm:$0xf]
    %v3243 = vld [vmem:[#allocation13 + $0x18] sm:$0xf]
    %v3244 = vld [vmem:[#allocation13 + $0x1c] sm:$0xf]
    %v3245 = vld [vmem:[#allocation13 + $0x20] sm:$0xf]
    %v3246 = vld [vmem:[#allocation13 + $0x24] sm:$0xf]
    %v3247 = vld [vmem:[#allocation13 + $0x28] sm:$0xf]
    %v3248 = vld [vmem:[#allocation13 + $0x2c] sm:$0xf]
    %v3249 = vld [vmem:[#allocation13 + $0x30] sm:$0xf]
    %v3250 = vld [vmem:[#allocation13 + $0x34] sm:$0xf]
    %v3251 = vld [vmem:[#allocation13 + $0x38] sm:$0xf]
    %v3252 = vld [vmem:[#allocation13 + $0x3c] sm:$0xf]
    %v3253 = vld [vmem:[%s9] sm:$0xff]
    %v3270 = vunpack.c.l.b16 %v3237
    %v3271 = vunpack.c.l.b16 %v3238
    %v3272 = vunpack.c.l.b16 %v3239
    %v3273 = vunpack.c.l.b16 %v3240
    %v3274 = vunpack.c.l.b16 %v3241
    %v3275 = vunpack.c.l.b16 %v3242
    %v3276 = vunpack.c.l.b16 %v3243
    %v3277 = vunpack.c.l.b16 %v3244
    %v3278 = vunpack.c.l.b16 %v3245
    %v3279 = vunpack.c.l.b16 %v3246
    %v3280 = vunpack.c.l.b16 %v3247
    %v3281 = vunpack.c.l.b16 %v3248
    %v3282 = vunpack.c.l.b16 %v3249
    %v3283 = vunpack.c.l.b16 %v3250
    %v3284 = vunpack.c.l.b16 %v3251
    %v3285 = vunpack.c.l.b16 %v3252
    %v3286 = vpack.c.b16 %v3271, %v3270
    %v3287 = vpack.c.b16 %v3273, %v3272
    %v3288 = vpack.c.b16 %v3275, %v3274
    %v3289 = vpack.c.b16 %v3277, %v3276
    %v3290 = vpack.c.b16 %v3279, %v3278
    %v3291 = vpack.c.b16 %v3281, %v3280
    %v3292 = vpack.c.b16 %v3283, %v3282
    %v3293 = vpack.c.b16 %v3285, %v3284
    %3302 = vmatprep.subr.bf16.mxu0 0
    %3303 = vmatpush1.bf16.msra.mxu0 %v3286
    %3304 = vmatprep.subr.bf16.mxu0 0
    %3305 = vmatpush1.bf16.msra.mxu0 %v3287
    %3306 = vmatprep.subr.bf16.mxu0 0
    %3307 = vmatpush1.bf16.msra.mxu0 %v3288
    %3308 = vmatprep.subr.bf16.mxu0 0
    %3309 = vmatpush1.bf16.msra.mxu0 %v3289
    %3310 = vmatprep.subr.bf16.mxu0 0
    %3311 = vmatpush1.bf16.msra.mxu0 %v3290
    %3312 = vmatprep.subr.bf16.mxu0 0
    %3313 = vmatpush1.bf16.msra.mxu0 %v3291
    %3314 = vmatprep.subr.bf16.mxu0 0
    %3315 = vmatpush1.bf16.msra.mxu0 %v3292
    %3316 = vmatprep.subr.bf16.mxu0 0
    %3317 = vmatpush1.bf16.msra.mxu0 %v3293
    %3318 = vmatprep.subr.bf16.mxu0 0
    %3319 = vmatpush1.bf16.msra.mxu0 0
    %3320 = vmatprep.subr.bf16.mxu0 0
    %3321 = vmatpush1.bf16.msra.mxu0 0
    %3322 = vmatprep.subr.bf16.mxu0 0
    %3323 = vmatpush1.bf16.msra.mxu0 0
    %3324 = vmatprep.subr.bf16.mxu0 0
    %3325 = vmatpush1.bf16.msra.mxu0 0
    %3326 = vmatprep.subr.bf16.mxu0 0
    %3327 = vmatpush1.bf16.msra.mxu0 0
    %3328 = vmatprep.subr.bf16.mxu0 0
    %3329 = vmatpush1.bf16.msra.mxu0 0
    %3330 = vmatprep.subr.bf16.mxu0 0
    %3331 = vmatpush1.bf16.msra.mxu0 0
    %3332 = vmatprep.subr.bf16.mxu0 0
    %3333 = vmatpush1.bf16.msra.mxu0 0
    %3334 = vmatprep.mubr.bf16.mxu0 0
    %3335 = vmatmul.mubr.bf16.gmra.mrb[0].mxu0 %v3236
    %v3336 = vpop.f32.mrb[0].mxu0
    %v3337 = vadd.f32 %v3253, %v3336
    %v3338 = vpop.f32.mrb[0].mxu0
    %v3339 = vpop.f32.mrb[0].mxu0
    %v3340 = vpop.f32.mrb[0].mxu0
    %3341 = vdwg.mxu0
    %v3342 = vmax.f32 %v3337, 0.0
    %v3343 = vpack.c.bf16 %v3342, %v3342
    %v3344 = vld [vmem:[#allocation14] sm:$0xf]
    %v3345 = vld [vmem:[#allocation14 + $0x4] sm:$0xf]
    %v3346 = vld [vmem:[#allocation14 + $0x8] sm:$0xf]
    %v3347 = vld [vmem:[#allocation14 + $0xc] sm:$0xf]
    %v3348 = vld [vmem:[#allocation14 + $0x10] sm:$0xf]
    %v3349 = vld [vmem:[#allocation14 + $0x14] sm:$0xf]
    %v3350 = vld [vmem:[#allocation14 + $0x18] sm:$0xf]
    %v3351 = vld [vmem:[#allocation14 + $0x1c] sm:$0xf]
    %v3352 = vld [vmem:[#allocation14 + $0x20] sm:$0xf]
    %v3353 = vld [vmem:[#allocation14 + $0x24] sm:$0xf]
    %v3354 = vld [vmem:[#allocation14 + $0x28] sm:$0xf]
    %v3355 = vld [vmem:[#allocation14 + $0x2c] sm:$0xf]
    %v3356 = vld [vmem:[#allocation14 + $0x30] sm:$0xf]
    %v3357 = vld [vmem:[#allocation14 + $0x34] sm:$0xf]
    %v3358 = vld [vmem:[#allocation14 + $0x38] sm:$0xf]
    %v3359 = vld [vmem:[#allocation14 + $0x3c] sm:$0xf]
    %v3360 = vld [vmem:[%s11] sm:$0xff]
    %v3377 = vunpack.c.l.b16 %v3344
    %v3378 = vunpack.c.l.b16 %v3345
    %v3379 = vunpack.c.l.b16 %v3346
    %v3380 = vunpack.c.l.b16 %v3347
    %v3381 = vunpack.c.l.b16 %v3348
    %v3382 = vunpack.c.l.b16 %v3349
    %v3383 = vunpack.c.l.b16 %v3350
    %v3384 = vunpack.c.l.b16 %v3351
    %v3385 = vunpack.c.l.b16 %v3352
    %v3386 = vunpack.c.l.b16 %v3353
    %v3387 = vunpack.c.l.b16 %v3354
    %v3388 = vunpack.c.l.b16 %v3355
    %v3389 = vunpack.c.l.b16 %v3356
    %v3390 = vunpack.c.l.b16 %v3357
    %v3391 = vunpack.c.l.b16 %v3358
    %v3392 = vunpack.c.l.b16 %v3359
    %v3393 = vpack.c.b16 %v3378, %v3377
    %v3394 = vpack.c.b16 %v3380, %v3379
    %v3395 = vpack.c.b16 %v3382, %v3381
    %v3396 = vpack.c.b16 %v3384, %v3383
    %v3397 = vpack.c.b16 %v3386, %v3385
    %v3398 = vpack.c.b16 %v3388, %v3387
    %v3399 = vpack.c.b16 %v3390, %v3389
    %v3400 = vpack.c.b16 %v3392, %v3391
    %3409 = vmatprep.subr.bf16.mxu0 0
    %3410 = vmatpush1.bf16.msra.mxu0 %v3393
    %3411 = vmatprep.subr.bf16.mxu0 0
    %3412 = vmatpush1.bf16.msra.mxu0 %v3394
    %3413 = vmatprep.subr.bf16.mxu0 0
    %3414 = vmatpush1.bf16.msra.mxu0 %v3395
    %3415 = vmatprep.subr.bf16.mxu0 0
    %3416 = vmatpush1.bf16.msra.mxu0 %v3396
    %3417 = vmatprep.subr.bf16.mxu0 0
    %3418 = vmatpush1.bf16.msra.mxu0 %v3397
    %3419 = vmatprep.subr.bf16.mxu0 0
    %3420 = vmatpush1.bf16.msra.mxu0 %v3398
    %3421 = vmatprep.subr.bf16.mxu0 0
    %3422 = vmatpush1.bf16.msra.mxu0 %v3399
    %3423 = vmatprep.subr.bf16.mxu0 0
    %3424 = vmatpush1.bf16.msra.mxu0 %v3400
    %3425 = vmatprep.subr.bf16.mxu0 0
    %3426 = vmatpush1.bf16.msra.mxu0 0
    %3427 = vmatprep.subr.bf16.mxu0 0
    %3428 = vmatpush1.bf16.msra.mxu0 0
    %3429 = vmatprep.subr.bf16.mxu0 0
    %3430 = vmatpush1.bf16.msra.mxu0 0
    %3431 = vmatprep.subr.bf16.mxu0 0
    %3432 = vmatpush1.bf16.msra.mxu0 0
    %3433 = vmatprep.subr.bf16.mxu0 0
    %3434 = vmatpush1.bf16.msra.mxu0 0
    %3435 = vmatprep.subr.bf16.mxu0 0
    %3436 = vmatpush1.bf16.msra.mxu0 0
    %3437 = vmatprep.subr.bf16.mxu0 0
    %3438 = vmatpush1.bf16.msra.mxu0 0
    %3439 = vmatprep.subr.bf16.mxu0 0
    %3440 = vmatpush1.bf16.msra.mxu0 0
    %3441 = vmatprep.mubr.bf16.mxu0 0
    %3442 = vmatmul.mubr.bf16.gmra.mrb[0].mxu0 %v3343
    %v3443 = vpop.f32.mrb[0].mxu0
    %v3444 = vadd.f32 %v3360, %v3443
    %v3445 = vpop.f32.mrb[0].mxu0
    %v3446 = vpop.f32.mrb[0].mxu0
    %v3447 = vpop.f32.mrb[0].mxu0
    %3448 = vdwg.mxu0
    %3449 = vst [vmem:[#allocation16] sm:$0xff] %v3444
    // Predicated region
    $region82: #{tpu_custom_call.1} parent=1 // pred_check
      _
    $region83: #{tpu_custom_call.1} parent=1 // pred_check_branch
      %3451 = sbr.rel (0) target = $region85
    $region84: #{tpu_custom_call.1} parent=1 // pred_region
      %s3453 = ssub.s32 128, 128
      %3454 = vsyncadd [#allocation4], %s3453
      %s3456 = sshll.u32 [#allocation16], 4
      %s3457 = int_to_ptr.vmem [resolvable:$true] %s3456
      %3459 = dma.vmem_to_hbm [thread:$0]  %s3457, 128, %s12, [#allocation4]
    $region85: #{tpu_custom_call.1} parent=1 // pred_fallthru
      _
    // Predicated region
    $region86: #{tpu_custom_call.1} parent=1 // pred_check
      _
    $region87: #{tpu_custom_call.1} parent=1 // pred_check_branch
      %3461 = sbr.rel (0) target = $region89
    $region88: #{tpu_custom_call.1} parent=1 // pred_region
      %3462 = dma.done [#allocation4], 128
    $region89: #{tpu_custom_call.1} parent=1 // pred_fallthru
      _
    %3463 = vsyncpa [#allocation3], 1
    %3464 = vsyncpa [#allocation6], 1
    %3465 = vsyncpa [#allocation9], 1
    %3466 = vsyncpa [#allocation12], 1
    %3467 = vsyncpa [#allocation15], 1
    %3468 = vsyncpa [#allocation4], 1

</llo_original>
